<compile_context>
chip_gen: v6e
topology: v6e:2x2x1
jax: 0.10.0
libtpu: 0.0.40
codegen_flags: <defaults>
</compile_context>

<pallas_src>
import jax
import jax.numpy as jnp
import numpy as np
from jax import lax
from jax.experimental import pallas as pl
from jax.experimental.pallas import tpu as pltpu

_VMEM_LIMIT_BYTES = 64 * 1024 * 1024


def _default_tile_n():
    # ~1024 rows/tile on v7x (64 MiB VMEM), ~2048 rows/tile on v5e/v6e (128 MiB VMEM).
    try:
        vmem = pltpu.get_tpu_info().vmem_capacity_bytes
    except Exception:
        vmem = 64 * 1024 * 1024
    return 2048 if vmem >= (96 << 20) else 1024


# ------------------------- in-kernel helpers (traced jnp) -------------------------

def _relpos_mlp1(xyz, nxyz3, w1, b1):
    """relative_pos_encoding + mlp1 (BN scale pre-folded into w1).  Returns (T*K, C2)."""
    t, k, _ = nxyz3.shape
    rel3 = xyz[:, None, :] - nxyz3                                   # in-kernel broadcast
    dis = jnp.sqrt(jnp.sum(rel3 * rel3, axis=-1, keepdims=True))     # (T, K, 1)
    xyz_t = jnp.broadcast_to(xyz[:, None, :], (t, k, 3))
    # K is a multiple of 8 here, so the (T,K,C) <-> (T*K,C) regroup is layout-preserving.
    feat = jnp.concatenate(
        [dis.reshape(t * k, 1), rel3.reshape(t * k, 3),
         xyz_t.reshape(t * k, 3), nxyz3.reshape(t * k, 3)], axis=-1)  # (T*K, 10)
    y = jnp.dot(feat, w1, preferred_element_type=jnp.float32) + b1
    return jnp.maximum(y, 0.0)                                        # (T*K, C2)


def _softmax_over_k(s3):
    s3 = s3 - jnp.max(s3, axis=1, keepdims=True)
    e = jnp.exp(s3)
    return e * pl.reciprocal(jnp.sum(e, axis=1, keepdims=True), approx=True)


def _att_pool_split(f_a2, f_b2, t, k, wf, wa, ba):
    """Att_pooling on the (never materialized) concat([f_a, f_b], channel).

    f_a2 / f_b2: (T*K, C2).  wf: (4, C2, C2) row/col blocks of the fc weight,
    wa: (2, C2, Cout) row blocks of the mlp weight (BN folded), ba: (Cout,).
    """
    c = f_a2.shape[-1]
    s_a = (jnp.dot(f_a2, wf[0], preferred_element_type=jnp.float32)
           + jnp.dot(f_b2, wf[1], preferred_element_type=jnp.float32))
    s_b = (jnp.dot(f_a2, wf[2], preferred_element_type=jnp.float32)
           + jnp.dot(f_b2, wf[3], preferred_element_type=jnp.float32))
    att_a = _softmax_over_k(s_a.reshape(t, k, c))
    att_b = _softmax_over_k(s_b.reshape(t, k, c))
    agg_a = jnp.sum(f_a2.reshape(t, k, c) * att_a, axis=1)            # (T, C2)
    agg_b = jnp.sum(f_b2.reshape(t, k, c) * att_b, axis=1)            # (T, C2)
    y = (jnp.dot(agg_a, wa[0], preferred_element_type=jnp.float32)
         + jnp.dot(agg_b, wa[1], preferred_element_type=jnp.float32) + ba)
    return jnp.maximum(y, 0.0)


# ----------------------------------- kernels ------------------------------------

def _block1_kernel(xyz_ref, nxyz_ref, fnb_ref, w1_ref, b1_ref, wf_ref, wa_ref, ba_ref,
                   out_ref):
    """Fused: relative_pos_encoding + mlp1 + att_pooling_1."""
    nxyz3 = nxyz_ref[0]                                               # (T, K, 3)
    t, k, _ = nxyz3.shape
    f_xyz = _relpos_mlp1(xyz_ref[0], nxyz3, w1_ref[...], b1_ref[0])   # (T*K, C2)
    fnb = fnb_ref[0].reshape(t * k, -1)                               # (T*K, C2)
    out_ref[0] = _att_pool_split(fnb, f_xyz, t, k,
                                 wf_ref[...], wa_ref[...], ba_ref[0])


def _block2_kernel(xyz_ref, nxyz_ref, fnb_ref, w1_ref, b1_ref, w2_ref, b2_ref,
                   wf_ref, wa_ref, ba_ref, out_ref):
    """Fused: (recomputed) relpos + mlp1, mlp2, att_pooling_2."""
    nxyz3 = nxyz_ref[0]
    t, k, _ = nxyz3.shape
    f_xyz = _relpos_mlp1(xyz_ref[0], nxyz3, w1_ref[...], b1_ref[0])   # (T*K, C2)
    f_xyz = jnp.maximum(
        jnp.dot(f_xyz, w2_ref[...], preferred_element_type=jnp.float32) + b2_ref[0], 0.0)
    fnb = fnb_ref[0].reshape(t * k, -1)                               # gathered f_pc_agg
    out_ref[0] = _att_pool_split(fnb, f_xyz, t, k,
                                 wf_ref[...], wa_ref[...], ba_ref[0])


# ------------------------------ pallas_call wrappers -----------------------------

def _const_spec(shape):
    zeros = (0,) * len(shape)
    return pl.BlockSpec(shape, lambda b, n: zeros)


def _fused_block1(xyz, nxyz, fnb, w1, b1, wf, wa, ba, *, tile_n):
    B, N, _ = xyz.shape
    K = nxyz.shape[2]
    C2 = w1.shape[1]
    cout = wa.shape[2]
    grid = (B, pl.cdiv(N, tile_n))
    return pl.pallas_call(
        _block1_kernel,
        out_shape=jax.ShapeDtypeStruct((B, N, cout), jnp.float32),
        grid=grid,
        in_specs=[
            pl.BlockSpec((1, tile_n, 3), lambda b, n: (b, n, 0)),
            pl.BlockSpec((1, tile_n, K, 3), lambda b, n: (b, n, 0, 0)),
            pl.BlockSpec((1, tile_n, K, C2), lambda b, n: (b, n, 0, 0)),
            _const_spec(w1.shape), _const_spec(b1.shape), _const_spec(wf.shape),
            _const_spec(wa.shape), _const_spec(ba.shape),
        ],
        out_specs=pl.BlockSpec((1, tile_n, cout), lambda b, n: (b, n, 0)),
        compiler_params=pltpu.CompilerParams(
            dimension_semantics=("parallel", "parallel"),
            vmem_limit_bytes=_VMEM_LIMIT_BYTES),
    )(xyz, nxyz, fnb, w1, b1, wf, wa, ba)


def _fused_block2(xyz, nxyz, fnb, w1, b1, w2, b2, wf, wa, ba, *, tile_n):
    B, N, _ = xyz.shape
    K = nxyz.shape[2]
    C2 = w1.shape[1]
    cout = wa.shape[2]
    grid = (B, pl.cdiv(N, tile_n))
    return pl.pallas_call(
        _block2_kernel,
        out_shape=jax.ShapeDtypeStruct((B, N, cout), jnp.float32),
        grid=grid,
        in_specs=[
            pl.BlockSpec((1, tile_n, 3), lambda b, n: (b, n, 0)),
            pl.BlockSpec((1, tile_n, K, 3), lambda b, n: (b, n, 0, 0)),
            pl.BlockSpec((1, tile_n, K, C2), lambda b, n: (b, n, 0, 0)),
            _const_spec(w1.shape), _const_spec(b1.shape),
            _const_spec(w2.shape), _const_spec(b2.shape),
            _const_spec(wf.shape), _const_spec(wa.shape), _const_spec(ba.shape),
        ],
        out_specs=pl.BlockSpec((1, tile_n, cout), lambda b, n: (b, n, 0)),
        compiler_params=pltpu.CompilerParams(
            dimension_semantics=("parallel", "parallel"),
            vmem_limit_bytes=_VMEM_LIMIT_BYTES),
    )(xyz, nxyz, fnb, w1, b1, w2, b2, wf, wa, ba)


# --------------------------------- JAX glue -----------------------------------

def gather_neighbour(pc, idx):
    # pc: (B, N, d), idx: (B, N, K) -> (B, N, K, d)
    # TODO(synk): data-dependent neighbor gather stays in JAX glue (take_along_axis);
    # an in-kernel scalar-prefetch DMA gather over arbitrary N rows is left as future work.
    B, N, d = pc.shape
    K = idx.shape[-1]
    g = jnp.take_along_axis(pc, idx.reshape(B, N * K)[..., None], axis=1)
    return g.reshape(B, N, K, d)


def _prep_params(p):
    """Fold BN into conv weights and split fc / att weights so the channel concats
    [f_neigh, f_xyz] never have to be materialized (in HBM or in-kernel)."""
    C2 = p["w_mlp1"].shape[1]

    def split_fc(w):  # (d_out, d_out) -> (4, C2, C2) blocks [aa, ba, ab, bb]
        return jnp.stack([w[:C2, :C2], w[C2:, :C2], w[:C2, C2:], w[C2:, C2:]])

    q = {}
    q["w1"] = p["w_mlp1"] * p["s_mlp1"][None, :]
    q["b1"] = p["b_mlp1"].reshape(1, -1)
    q["w2"] = p["w_mlp2"] * p["s_mlp2"][None, :]
    q["b2"] = p["b_mlp2"].reshape(1, -1)
    q["wf1"] = split_fc(p["w_fc1"])
    wa1 = p["w_att1"] * p["s_att1"][None, :]
    q["wa1"] = jnp.stack([wa1[:C2], wa1[C2:]])
    q["ba1"] = p["b_att1"].reshape(1, -1)
    q["wf2"] = split_fc(p["w_fc2"])
    wa2 = p["w_att2"] * p["s_att2"][None, :]
    q["wa2"] = jnp.stack([wa2[:C2], wa2[C2:]])
    q["ba2"] = p["b_att2"].reshape(1, -1)
    return q


def building_block_forward(xyz, feature, neigh_idx, p, tile_n=None):
    # xyz: (B, N, 3), feature: (B, d_out//2, N, 1) [NCHW], neigh_idx: (B, N, K)
    B, N, _ = xyz.shape
    if tile_n is None:
        tile_n = min(N, _default_tile_n())
    q = _prep_params(p)

    feat_pts = jnp.transpose(feature[..., 0], (0, 2, 1))              # (B, N, C2)
    neighbor_xyz = gather_neighbour(xyz, neigh_idx)                   # (B, N, K, 3)
    f_neigh = gather_neighbour(feat_pts, neigh_idx)                   # (B, N, K, C2)

    # relpos + mlp1 + att_pooling_1, fully fused (f_xyz stays in VMEM)
    f_pc_agg = _fused_block1(xyz, neighbor_xyz, f_neigh,
                             q["w1"], q["b1"], q["wf1"], q["wa1"], q["ba1"],
                             tile_n=tile_n)                           # (B, N, C2)

    # relpos + mlp1 recomputed in-kernel + mlp2 + att_pooling_2
    f_neigh2 = gather_neighbour(f_pc_agg, neigh_idx)                  # (B, N, K, C2)
    out = _fused_block2(xyz, neighbor_xyz, f_neigh2,
                        q["w1"], q["b1"], q["w2"], q["b2"],
                        q["wf2"], q["wa2"], q["ba2"], tile_n=tile_n)  # (B, N, d_out)

    # back to PyTorch layout (B, d_out, N, 1)
    return jnp.transpose(out, (0, 2, 1))[..., None]


# ------------------------- pure-JAX reference (NCHW) ---------------------------

def _ref_conv_bn_relu(x, w, s, b):        # x: (B, Cin, N, K), w: (Cin, Cout)
    y = jnp.einsum("bcnk,cd->bdnk", x, w)
    return jnp.maximum(y * s[None, :, None, None] + b[None, :, None, None], 0.0)


def _ref_att_pool(x, w_fc, w_mlp, s, b):
    att = jnp.einsum("bcnk,cd->bdnk", x, w_fc)
    att = jax.nn.softmax(att, axis=3)
    agg = jnp.sum(x * att, axis=3, keepdims=True)
    return _ref_conv_bn_relu(agg, w_mlp, s, b)


def reference_forward(xyz, feature, neigh_idx, p):
    B, N, _ = xyz.shape
    K = neigh_idx.shape[-1]
    neighbor_xyz = gather_neighbour(xyz, neigh_idx)
    xyz_tile = jnp.broadcast_to(xyz[:, :, None, :], (B, N, K, 3))
    rel = xyz_tile - neighbor_xyz
    dis = jnp.sqrt(jnp.sum(rel * rel, axis=-1, keepdims=True))
    f_xyz = jnp.concatenate([dis, rel, xyz_tile, neighbor_xyz], axis=-1)   # (B,N,K,10)
    f_xyz = jnp.transpose(f_xyz, (0, 3, 1, 2))                             # (B,10,N,K)
    f_xyz = _ref_conv_bn_relu(f_xyz, p["w_mlp1"], p["s_mlp1"], p["b_mlp1"])
    f_nb = gather_neighbour(jnp.transpose(feature[..., 0], (0, 2, 1)), neigh_idx)
    f_nb = jnp.transpose(f_nb, (0, 3, 1, 2))
    f_cat = jnp.concatenate([f_nb, f_xyz], axis=1)
    f_agg = _ref_att_pool(f_cat, p["w_fc1"], p["w_att1"], p["s_att1"], p["b_att1"])
    f_xyz = _ref_conv_bn_relu(f_xyz, p["w_mlp2"], p["s_mlp2"], p["b_mlp2"])
    f_nb = gather_neighbour(jnp.transpose(f_agg[..., 0], (0, 2, 1)), neigh_idx)
    f_nb = jnp.transpose(f_nb, (0, 3, 1, 2))
    f_cat = jnp.concatenate([f_nb, f_xyz], axis=1)
    return _ref_att_pool(f_cat, p["w_fc2"], p["w_att2"], p["s_att2"], p["b_att2"])


# ------------------------------------ main -------------------------------------

def make_params(key, d_out):
    C2 = d_out // 2
    ks = iter(jax.random.split(key, 32))
    eps = 1e-5

    def conv_bn(cin, cout):
        w = 0.1 * jax.random.normal(next(ks), (cin, cout), jnp.float32)
        gamma = 1.0 + 0.1 * jax.random.normal(next(ks), (cout,), jnp.float32)
        beta = 0.1 * jax.random.normal(next(ks), (cout,), jnp.float32)
        scale = gamma / jnp.sqrt(1.0 + eps)   # eval-mode BN: running_var=1, running_mean=0
        bias = beta
        return w, scale, bias

    p = {}
    p["w_mlp1"], p["s_mlp1"], p["b_mlp1"] = conv_bn(10, C2)
    p["w_fc1"] = 0.1 * jax.random.normal(next(ks), (d_out, d_out), jnp.float32)
    p["w_att1"], p["s_att1"], p["b_att1"] = conv_bn(d_out, C2)
    p["w_mlp2"], p["s_mlp2"], p["b_mlp2"] = conv_bn(C2, C2)
    p["w_fc2"] = 0.1 * jax.random.normal(next(ks), (d_out, d_out), jnp.float32)
    p["w_att2"], p["s_att2"], p["b_att2"] = conv_bn(d_out, d_out)
    return p


if __name__ == "__main__":
    B, N, K, d_out = 2, 16, 8, 32
    C2 = d_out // 2

    key = jax.random.PRNGKey(0)
    k_xyz, k_feat, k_idx, k_par = jax.random.split(key, 4)
    xyz = jax.random.normal(k_xyz, (B, N, 3), jnp.float32)
    feature = jax.random.normal(k_feat, (B, C2, N, 1), jnp.float32)
    neigh_idx = jax.random.randint(k_idx, (B, N, K), 0, N, jnp.int32)
    params = make_params(k_par, d_out)

    out = jax.jit(building_block_forward)(xyz, feature, neigh_idx, params)
    out = jax.block_until_ready(out)
    assert out.shape == (B, d_out, N, 1), out.shape

    ref = jax.block_until_ready(reference_forward(xyz, feature, neigh_idx, params))
    np.testing.assert_allclose(np.asarray(out), np.asarray(ref), rtol=1e-2, atol=1e-2)

    print("KERNEL_OK")
</pallas_src>

<mosaic_0001>
module attributes {stable_mosaic.version = 11 : i64} {
  func.func @_block1_kernel(%arg0: i32, %arg1: i32, %arg2: memref<1x16x3xf32, #tpu.memory_space<vmem>>, %arg3: memref<1x16x8x3xf32, #tpu.memory_space<vmem>>, %arg4: memref<1x16x8x16xf32, #tpu.memory_space<vmem>>, %arg5: memref<10x16xf32, #tpu.memory_space<vmem>>, %arg6: memref<1x16xf32, #tpu.memory_space<vmem>>, %arg7: memref<4x16x16xf32, #tpu.memory_space<vmem>>, %arg8: memref<2x16x16xf32, #tpu.memory_space<vmem>>, %arg9: memref<1x16xf32, #tpu.memory_space<vmem>>, %arg10: memref<1x16x16xf32, #tpu.memory_space<vmem>>) attributes {dimension_semantics = [#tpu.dimension_semantics<parallel>, #tpu.dimension_semantics<parallel>], iteration_bounds = array<i64: 2, 1>, scalar_prefetch = 0 : i64, scratch_operands = 0 : i64, tpu.core_type = #tpu.core_type<tc>, window_params = [{transform_indices = @transform_0, window_bounds = array<i64: 1, 16, 3>}, {transform_indices = @transform_1, window_bounds = array<i64: 1, 16, 8, 3>}, {transform_indices = @transform_2, window_bounds = array<i64: 1, 16, 8, 16>}, {pipeline_mode = #tpu.pipeline_mode<synchronous>, transform_indices = @transform_3, window_bounds = array<i64: 10, 16>}, {pipeline_mode = #tpu.pipeline_mode<synchronous>, transform_indices = @transform_4, window_bounds = array<i64: 1, 16>}, {pipeline_mode = #tpu.pipeline_mode<synchronous>, transform_indices = @transform_5, window_bounds = array<i64: 4, 16, 16>}, {pipeline_mode = #tpu.pipeline_mode<synchronous>, transform_indices = @transform_6, window_bounds = array<i64: 2, 16, 16>}, {pipeline_mode = #tpu.pipeline_mode<synchronous>, transform_indices = @transform_7, window_bounds = array<i64: 1, 16>}, {transform_indices = @transform_8, window_bounds = array<i64: 1, 16, 16>}]} {
    %c0 = arith.constant 0 : index
    %c0_0 = arith.constant 0 : index
    %c0_1 = arith.constant 0 : index
    %c0_2 = arith.constant 0 : index
    %0 = vector.load %arg3[%c0, %c0_0, %c0_1, %c0_2] : memref<1x16x8x3xf32, #tpu.memory_space<vmem>>, vector<1x16x8x3xf32>
    %1 = vector.shape_cast %0 : vector<1x16x8x3xf32> to vector<16x8x3xf32>
    %c0_3 = arith.constant 0 : index
    %c0_4 = arith.constant 0 : index
    %c0_5 = arith.constant 0 : index
    %2 = vector.load %arg2[%c0_3, %c0_4, %c0_5] : memref<1x16x3xf32, #tpu.memory_space<vmem>>, vector<1x16x3xf32>
    %3 = vector.shape_cast %2 : vector<1x16x3xf32> to vector<16x3xf32>
    %c0_6 = arith.constant 0 : index
    %c0_7 = arith.constant 0 : index
    %4 = vector.load %arg5[%c0_6, %c0_7] : memref<10x16xf32, #tpu.memory_space<vmem>>, vector<10x16xf32>
    %c0_8 = arith.constant 0 : index
    %c0_9 = arith.constant 0 : index
    %5 = vector.load %arg6[%c0_8, %c0_9] : memref<1x16xf32, #tpu.memory_space<vmem>>, vector<1x16xf32>
    %6 = vector.shape_cast %5 : vector<1x16xf32> to vector<16xf32>
    %7 = vector.shape_cast %3 : vector<16x3xf32> to vector<16x1x3xf32>
    %8 = vector.broadcast %7 : vector<16x1x3xf32> to vector<16x8x3xf32>
    %9 = arith.subf %8, %1 : vector<16x8x3xf32>
    %10 = arith.mulf %9, %9 : vector<16x8x3xf32>
    %cst = arith.constant dense<0.000000e+00> : vector<16x8xf32>
    %11 = vector.multi_reduction <add>, %10, %cst [2] : vector<16x8x3xf32> to vector<16x8xf32>
    %12 = vector.shape_cast %11 : vector<16x8xf32> to vector<16x8x1xf32>
    %13 = math.sqrt %12 : vector<16x8x1xf32>
    %14 = vector.shape_cast %3 : vector<16x3xf32> to vector<16x1x3xf32>
    %15 = vector.shape_cast %14 : vector<16x1x3xf32> to vector<16x1x3xf32>
    %16 = vector.broadcast %15 : vector<16x1x3xf32> to vector<16x8x3xf32>
    %17 = vector.shape_cast %13 : vector<16x8x1xf32> to vector<128x1xf32>
    %18 = vector.shape_cast %9 : vector<16x8x3xf32> to vector<128x3xf32>
    %19 = vector.shape_cast %16 : vector<16x8x3xf32> to vector<128x3xf32>
    %20 = vector.shape_cast %1 : vector<16x8x3xf32> to vector<128x3xf32>
    %21 = tpu.concatenate %17, %18, %19, %20 in 1 : vector<128x1xf32>, vector<128x3xf32>, vector<128x3xf32>, vector<128x3xf32> -> vector<128x10xf32>
    %cst_10 = arith.constant dense<0.000000e+00> : vector<128x16xf32>
    %22 = tpu.matmul %21, %4, %cst_10 {dimension_numbers = #tpu.dot_dimension_numbers<[1], [0], [0], [1], [0, 0, 1, 1], [], []>} : vector<128x10xf32>, vector<10x16xf32>, vector<128x16xf32> -> vector<128x16xf32>
    %23 = vector.shape_cast %6 : vector<16xf32> to vector<1x16xf32>
    %24 = vector.broadcast %23 : vector<1x16xf32> to vector<128x16xf32>
    %25 = arith.addf %22, %24 : vector<128x16xf32>
    %cst_11 = arith.constant 0.000000e+00 : f32
    %26 = vector.broadcast %cst_11 : f32 to vector<128x16xf32>
    %27 = arith.maximumf %25, %26 : vector<128x16xf32>
    %c0_12 = arith.constant 0 : index
    %c0_13 = arith.constant 0 : index
    %c0_14 = arith.constant 0 : index
    %c0_15 = arith.constant 0 : index
    %28 = vector.load %arg4[%c0_12, %c0_13, %c0_14, %c0_15] : memref<1x16x8x16xf32, #tpu.memory_space<vmem>>, vector<1x16x8x16xf32>
    %29 = vector.shape_cast %28 : vector<1x16x8x16xf32> to vector<16x8x16xf32>
    %30 = vector.shape_cast %29 : vector<16x8x16xf32> to vector<128x16xf32>
    %c0_16 = arith.constant 0 : index
    %c0_17 = arith.constant 0 : index
    %c0_18 = arith.constant 0 : index
    %31 = vector.load %arg7[%c0_16, %c0_17, %c0_18] : memref<4x16x16xf32, #tpu.memory_space<vmem>>, vector<4x16x16xf32>
    %c0_19 = arith.constant 0 : index
    %c0_20 = arith.constant 0 : index
    %c0_21 = arith.constant 0 : index
    %32 = vector.load %arg8[%c0_19, %c0_20, %c0_21] : memref<2x16x16xf32, #tpu.memory_space<vmem>>, vector<2x16x16xf32>
    %c0_22 = arith.constant 0 : index
    %c0_23 = arith.constant 0 : index
    %33 = vector.load %arg9[%c0_22, %c0_23] : memref<1x16xf32, #tpu.memory_space<vmem>>, vector<1x16xf32>
    %34 = vector.shape_cast %33 : vector<1x16xf32> to vector<16xf32>
    %35 = vector.extract_strided_slice %31 {offsets = [0, 0, 0], sizes = [1, 16, 16], strides = [1, 1, 1]} : vector<4x16x16xf32> to vector<1x16x16xf32>
    %36 = vector.shape_cast %35 : vector<1x16x16xf32> to vector<16x16xf32>
    %cst_24 = arith.constant dense<0.000000e+00> : vector<128x16xf32>
    %37 = tpu.matmul %30, %36, %cst_24 {dimension_numbers = #tpu.dot_dimension_numbers<[1], [0], [0], [1], [0, 0, 1, 1], [], []>} : vector<128x16xf32>, vector<16x16xf32>, vector<128x16xf32> -> vector<128x16xf32>
    %38 = vector.extract_strided_slice %31 {offsets = [1, 0, 0], sizes = [1, 16, 16], strides = [1, 1, 1]} : vector<4x16x16xf32> to vector<1x16x16xf32>
    %39 = vector.shape_cast %38 : vector<1x16x16xf32> to vector<16x16xf32>
    %cst_25 = arith.constant dense<0.000000e+00> : vector<128x16xf32>
    %40 = tpu.matmul %27, %39, %cst_25 {dimension_numbers = #tpu.dot_dimension_numbers<[1], [0], [0], [1], [0, 0, 1, 1], [], []>} : vector<128x16xf32>, vector<16x16xf32>, vector<128x16xf32> -> vector<128x16xf32>
    %41 = arith.addf %37, %40 : vector<128x16xf32>
    %42 = vector.extract_strided_slice %31 {offsets = [2, 0, 0], sizes = [1, 16, 16], strides = [1, 1, 1]} : vector<4x16x16xf32> to vector<1x16x16xf32>
    %43 = vector.shape_cast %42 : vector<1x16x16xf32> to vector<16x16xf32>
    %cst_26 = arith.constant dense<0.000000e+00> : vector<128x16xf32>
    %44 = tpu.matmul %30, %43, %cst_26 {dimension_numbers = #tpu.dot_dimension_numbers<[1], [0], [0], [1], [0, 0, 1, 1], [], []>} : vector<128x16xf32>, vector<16x16xf32>, vector<128x16xf32> -> vector<128x16xf32>
    %45 = vector.extract_strided_slice %31 {offsets = [3, 0, 0], sizes = [1, 16, 16], strides = [1, 1, 1]} : vector<4x16x16xf32> to vector<1x16x16xf32>
    %46 = vector.shape_cast %45 : vector<1x16x16xf32> to vector<16x16xf32>
    %cst_27 = arith.constant dense<0.000000e+00> : vector<128x16xf32>
    %47 = tpu.matmul %27, %46, %cst_27 {dimension_numbers = #tpu.dot_dimension_numbers<[1], [0], [0], [1], [0, 0, 1, 1], [], []>} : vector<128x16xf32>, vector<16x16xf32>, vector<128x16xf32> -> vector<128x16xf32>
    %48 = arith.addf %44, %47 : vector<128x16xf32>
    %49 = vector.shape_cast %41 : vector<128x16xf32> to vector<16x8x16xf32>
    %cst_28 = arith.constant dense<0xFF800000> : vector<16x16xf32>
    %50 = vector.multi_reduction <maximumf>, %49, %cst_28 [1] : vector<16x8x16xf32> to vector<16x16xf32>
    %51 = vector.shape_cast %50 : vector<16x16xf32> to vector<16x1x16xf32>
    %52 = vector.broadcast %51 : vector<16x1x16xf32> to vector<16x8x16xf32>
    %53 = arith.subf %49, %52 : vector<16x8x16xf32>
    %54 = math.exp %53 : vector<16x8x16xf32>
    %cst_29 = arith.constant dense<0.000000e+00> : vector<16x16xf32>
    %55 = vector.multi_reduction <add>, %54, %cst_29 [1] : vector<16x8x16xf32> to vector<16x16xf32>
    %56 = vector.shape_cast %55 : vector<16x16xf32> to vector<16x1x16xf32>
    %57 = tpu.reciprocal %56 {approx = true} : vector<16x1x16xf32> -> vector<16x1x16xf32>
    %58 = vector.broadcast %57 : vector<16x1x16xf32> to vector<16x8x16xf32>
    %59 = arith.mulf %54, %58 : vector<16x8x16xf32>
    %60 = vector.shape_cast %48 : vector<128x16xf32> to vector<16x8x16xf32>
    %cst_30 = arith.constant dense<0xFF800000> : vector<16x16xf32>
    %61 = vector.multi_reduction <maximumf>, %60, %cst_30 [1] : vector<16x8x16xf32> to vector<16x16xf32>
    %62 = vector.shape_cast %61 : vector<16x16xf32> to vector<16x1x16xf32>
    %63 = vector.broadcast %62 : vector<16x1x16xf32> to vector<16x8x16xf32>
    %64 = arith.subf %60, %63 : vector<16x8x16xf32>
    %65 = math.exp %64 : vector<16x8x16xf32>
    %cst_31 = arith.constant dense<0.000000e+00> : vector<16x16xf32>
    %66 = vector.multi_reduction <add>, %65, %cst_31 [1] : vector<16x8x16xf32> to vector<16x16xf32>
    %67 = vector.shape_cast %66 : vector<16x16xf32> to vector<16x1x16xf32>
    %68 = tpu.reciprocal %67 {approx = true} : vector<16x1x16xf32> -> vector<16x1x16xf32>
    %69 = vector.broadcast %68 : vector<16x1x16xf32> to vector<16x8x16xf32>
    %70 = arith.mulf %65, %69 : vector<16x8x16xf32>
    %71 = vector.shape_cast %30 : vector<128x16xf32> to vector<16x8x16xf32>
    %72 = arith.mulf %71, %59 : vector<16x8x16xf32>
    %cst_32 = arith.constant dense<0.000000e+00> : vector<16x16xf32>
    %73 = vector.multi_reduction <add>, %72, %cst_32 [1] : vector<16x8x16xf32> to vector<16x16xf32>
    %74 = vector.shape_cast %27 : vector<128x16xf32> to vector<16x8x16xf32>
    %75 = arith.mulf %74, %70 : vector<16x8x16xf32>
    %cst_33 = arith.constant dense<0.000000e+00> : vector<16x16xf32>
    %76 = vector.multi_reduction <add>, %75, %cst_33 [1] : vector<16x8x16xf32> to vector<16x16xf32>
    %77 = vector.extract_strided_slice %32 {offsets = [0, 0, 0], sizes = [1, 16, 16], strides = [1, 1, 1]} : vector<2x16x16xf32> to vector<1x16x16xf32>
    %78 = vector.shape_cast %77 : vector<1x16x16xf32> to vector<16x16xf32>
    %cst_34 = arith.constant dense<0.000000e+00> : vector<16x16xf32>
    %79 = tpu.matmul %73, %78, %cst_34 {dimension_numbers = #tpu.dot_dimension_numbers<[1], [0], [0], [1], [0, 0, 1, 1], [], []>} : vector<16x16xf32>, vector<16x16xf32>, vector<16x16xf32> -> vector<16x16xf32>
    %80 = vector.extract_strided_slice %32 {offsets = [1, 0, 0], sizes = [1, 16, 16], strides = [1, 1, 1]} : vector<2x16x16xf32> to vector<1x16x16xf32>
    %81 = vector.shape_cast %80 : vector<1x16x16xf32> to vector<16x16xf32>
    %cst_35 = arith.constant dense<0.000000e+00> : vector<16x16xf32>
    %82 = tpu.matmul %76, %81, %cst_35 {dimension_numbers = #tpu.dot_dimension_numbers<[1], [0], [0], [1], [0, 0, 1, 1], [], []>} : vector<16x16xf32>, vector<16x16xf32>, vector<16x16xf32> -> vector<16x16xf32>
    %83 = arith.addf %79, %82 : vector<16x16xf32>
    %84 = vector.shape_cast %34 : vector<16xf32> to vector<1x16xf32>
    %85 = vector.broadcast %84 : vector<1x16xf32> to vector<16x16xf32>
    %86 = arith.addf %83, %85 : vector<16x16xf32>
    %cst_36 = arith.constant 0.000000e+00 : f32
    %87 = vector.broadcast %cst_36 : f32 to vector<16x16xf32>
    %88 = arith.maximumf %86, %87 : vector<16x16xf32>
    %c0_37 = arith.constant 0 : index
    %c0_38 = arith.constant 0 : index
    %c0_39 = arith.constant 0 : index
    %89 = vector.load %arg10[%c0_37, %c0_38, %c0_39] : memref<1x16x16xf32, #tpu.memory_space<vmem>>, vector<1x16x16xf32>
    %90 = vector.shape_cast %89 : vector<1x16x16xf32> to vector<16x16xf32>
    %91 = vector.shape_cast %88 : vector<16x16xf32> to vector<1x16x16xf32>
    tpu.vector_store %arg10[%c0_37, %c0_38, %c0_39], %91 {strides = array<i32>} : memref<1x16x16xf32, #tpu.memory_space<vmem>>, vector<1x16x16xf32>,
    return
  }
  func.func @transform_0(%arg0: i32, %arg1: i32) -> (i32, i32, i32) {
    %c0_i32 = arith.constant 0 : i32
    %c0_i32_0 = arith.constant 0 : i32
    return %arg0, %arg1, %c0_i32 : i32, i32, i32
  }
  func.func @transform_1(%arg0: i32, %arg1: i32) -> (i32, i32, i32, i32) {
    %c0_i32 = arith.constant 0 : i32
    %c0_i32_0 = arith.constant 0 : i32
    %c0_i32_1 = arith.constant 0 : i32
    return %arg0, %arg1, %c0_i32, %c0_i32_0 : i32, i32, i32, i32
  }
  func.func @transform_2(%arg0: i32, %arg1: i32) -> (i32, i32, i32, i32) {
    %c0_i32 = arith.constant 0 : i32
    %c0_i32_0 = arith.constant 0 : i32
    %c0_i32_1 = arith.constant 0 : i32
    return %arg0, %arg1, %c0_i32, %c0_i32_0 : i32, i32, i32, i32
  }
  func.func @transform_3(%arg0: i32, %arg1: i32) -> (i32, i32) {
    %c0_i32 = arith.constant 0 : i32
    %c0_i32_0 = arith.constant 0 : i32
    %c0_i32_1 = arith.constant 0 : i32
    return %c0_i32, %c0_i32_0 : i32, i32
  }
  func.func @transform_4(%arg0: i32, %arg1: i32) -> (i32, i32) {
    %c0_i32 = arith.constant 0 : i32
    %c0_i32_0 = arith.constant 0 : i32
    %c0_i32_1 = arith.constant 0 : i32
    return %c0_i32, %c0_i32_0 : i32, i32
  }
  func.func @transform_5(%arg0: i32, %arg1: i32) -> (i32, i32, i32) {
    %c0_i32 = arith.constant 0 : i32
    %c0_i32_0 = arith.constant 0 : i32
    %c0_i32_1 = arith.constant 0 : i32
    %c0_i32_2 = arith.constant 0 : i32
    return %c0_i32, %c0_i32_0, %c0_i32_1 : i32, i32, i32
  }
  func.func @transform_6(%arg0: i32, %arg1: i32) -> (i32, i32, i32) {
    %c0_i32 = arith.constant 0 : i32
    %c0_i32_0 = arith.constant 0 : i32
    %c0_i32_1 = arith.constant 0 : i32
    %c0_i32_2 = arith.constant 0 : i32
    return %c0_i32, %c0_i32_0, %c0_i32_1 : i32, i32, i32
  }
  func.func @transform_7(%arg0: i32, %arg1: i32) -> (i32, i32) {
    %c0_i32 = arith.constant 0 : i32
    %c0_i32_0 = arith.constant 0 : i32
    %c0_i32_1 = arith.constant 0 : i32
    return %c0_i32, %c0_i32_0 : i32, i32
  }
  func.func @transform_8(%arg0: i32, %arg1: i32) -> (i32, i32, i32) {
    %c0_i32 = arith.constant 0 : i32
    %c0_i32_0 = arith.constant 0 : i32
    return %arg0, %arg1, %c0_i32 : i32, i32, i32
  }
}

module attributes {stable_mosaic.version = 11 : i64} {
  func.func @_block2_kernel(%arg0: i32, %arg1: i32, %arg2: memref<1x16x3xf32, #tpu.memory_space<vmem>>, %arg3: memref<1x16x8x3xf32, #tpu.memory_space<vmem>>, %arg4: memref<1x16x8x16xf32, #tpu.memory_space<vmem>>, %arg5: memref<10x16xf32, #tpu.memory_space<vmem>>, %arg6: memref<1x16xf32, #tpu.memory_space<vmem>>, %arg7: memref<16x16xf32, #tpu.memory_space<vmem>>, %arg8: memref<1x16xf32, #tpu.memory_space<vmem>>, %arg9: memref<4x16x16xf32, #tpu.memory_space<vmem>>, %arg10: memref<2x16x32xf32, #tpu.memory_space<vmem>>, %arg11: memref<1x32xf32, #tpu.memory_space<vmem>>, %arg12: memref<1x16x32xf32, #tpu.memory_space<vmem>>) attributes {dimension_semantics = [#tpu.dimension_semantics<parallel>, #tpu.dimension_semantics<parallel>], iteration_bounds = array<i64: 2, 1>, scalar_prefetch = 0 : i64, scratch_operands = 0 : i64, tpu.core_type = #tpu.core_type<tc>, window_params = [{transform_indices = @transform_0, window_bounds = array<i64: 1, 16, 3>}, {transform_indices = @transform_1, window_bounds = array<i64: 1, 16, 8, 3>}, {transform_indices = @transform_2, window_bounds = array<i64: 1, 16, 8, 16>}, {pipeline_mode = #tpu.pipeline_mode<synchronous>, transform_indices = @transform_3, window_bounds = array<i64: 10, 16>}, {pipeline_mode = #tpu.pipeline_mode<synchronous>, transform_indices = @transform_4, window_bounds = array<i64: 1, 16>}, {pipeline_mode = #tpu.pipeline_mode<synchronous>, transform_indices = @transform_5, window_bounds = array<i64: 16, 16>}, {pipeline_mode = #tpu.pipeline_mode<synchronous>, transform_indices = @transform_6, window_bounds = array<i64: 1, 16>}, {pipeline_mode = #tpu.pipeline_mode<synchronous>, transform_indices = @transform_7, window_bounds = array<i64: 4, 16, 16>}, {pipeline_mode = #tpu.pipeline_mode<synchronous>, transform_indices = @transform_8, window_bounds = array<i64: 2, 16, 32>}, {pipeline_mode = #tpu.pipeline_mode<synchronous>, transform_indices = @transform_9, window_bounds = array<i64: 1, 32>}, {transform_indices = @transform_10, window_bounds = array<i64: 1, 16, 32>}]} {
    %c0 = arith.constant 0 : index
    %c0_0 = arith.constant 0 : index
    %c0_1 = arith.constant 0 : index
    %c0_2 = arith.constant 0 : index
    %0 = vector.load %arg3[%c0, %c0_0, %c0_1, %c0_2] : memref<1x16x8x3xf32, #tpu.memory_space<vmem>>, vector<1x16x8x3xf32>
    %1 = vector.shape_cast %0 : vector<1x16x8x3xf32> to vector<16x8x3xf32>
    %c0_3 = arith.constant 0 : index
    %c0_4 = arith.constant 0 : index
    %c0_5 = arith.constant 0 : index
    %2 = vector.load %arg2[%c0_3, %c0_4, %c0_5] : memref<1x16x3xf32, #tpu.memory_space<vmem>>, vector<1x16x3xf32>
    %3 = vector.shape_cast %2 : vector<1x16x3xf32> to vector<16x3xf32>
    %c0_6 = arith.constant 0 : index
    %c0_7 = arith.constant 0 : index
    %4 = vector.load %arg5[%c0_6, %c0_7] : memref<10x16xf32, #tpu.memory_space<vmem>>, vector<10x16xf32>
    %c0_8 = arith.constant 0 : index
    %c0_9 = arith.constant 0 : index
    %5 = vector.load %arg6[%c0_8, %c0_9] : memref<1x16xf32, #tpu.memory_space<vmem>>, vector<1x16xf32>
    %6 = vector.shape_cast %5 : vector<1x16xf32> to vector<16xf32>
    %7 = vector.shape_cast %3 : vector<16x3xf32> to vector<16x1x3xf32>
    %8 = vector.broadcast %7 : vector<16x1x3xf32> to vector<16x8x3xf32>
    %9 = arith.subf %8, %1 : vector<16x8x3xf32>
    %10 = arith.mulf %9, %9 : vector<16x8x3xf32>
    %cst = arith.constant dense<0.000000e+00> : vector<16x8xf32>
    %11 = vector.multi_reduction <add>, %10, %cst [2] : vector<16x8x3xf32> to vector<16x8xf32>
    %12 = vector.shape_cast %11 : vector<16x8xf32> to vector<16x8x1xf32>
    %13 = math.sqrt %12 : vector<16x8x1xf32>
    %14 = vector.shape_cast %3 : vector<16x3xf32> to vector<16x1x3xf32>
    %15 = vector.shape_cast %14 : vector<16x1x3xf32> to vector<16x1x3xf32>
    %16 = vector.broadcast %15 : vector<16x1x3xf32> to vector<16x8x3xf32>
    %17 = vector.shape_cast %13 : vector<16x8x1xf32> to vector<128x1xf32>
    %18 = vector.shape_cast %9 : vector<16x8x3xf32> to vector<128x3xf32>
    %19 = vector.shape_cast %16 : vector<16x8x3xf32> to vector<128x3xf32>
    %20 = vector.shape_cast %1 : vector<16x8x3xf32> to vector<128x3xf32>
    %21 = tpu.concatenate %17, %18, %19, %20 in 1 : vector<128x1xf32>, vector<128x3xf32>, vector<128x3xf32>, vector<128x3xf32> -> vector<128x10xf32>
    %cst_10 = arith.constant dense<0.000000e+00> : vector<128x16xf32>
    %22 = tpu.matmul %21, %4, %cst_10 {dimension_numbers = #tpu.dot_dimension_numbers<[1], [0], [0], [1], [0, 0, 1, 1], [], []>} : vector<128x10xf32>, vector<10x16xf32>, vector<128x16xf32> -> vector<128x16xf32>
    %23 = vector.shape_cast %6 : vector<16xf32> to vector<1x16xf32>
    %24 = vector.broadcast %23 : vector<1x16xf32> to vector<128x16xf32>
    %25 = arith.addf %22, %24 : vector<128x16xf32>
    %cst_11 = arith.constant 0.000000e+00 : f32
    %26 = vector.broadcast %cst_11 : f32 to vector<128x16xf32>
    %27 = arith.maximumf %25, %26 : vector<128x16xf32>
    %c0_12 = arith.constant 0 : index
    %c0_13 = arith.constant 0 : index
    %28 = vector.load %arg7[%c0_12, %c0_13] : memref<16x16xf32, #tpu.memory_space<vmem>>, vector<16x16xf32>
    %cst_14 = arith.constant dense<0.000000e+00> : vector<128x16xf32>
    %29 = tpu.matmul %27, %28, %cst_14 {dimension_numbers = #tpu.dot_dimension_numbers<[1], [0], [0], [1], [0, 0, 1, 1], [], []>} : vector<128x16xf32>, vector<16x16xf32>, vector<128x16xf32> -> vector<128x16xf32>
    %c0_15 = arith.constant 0 : index
    %c0_16 = arith.constant 0 : index
    %30 = vector.load %arg8[%c0_15, %c0_16] : memref<1x16xf32, #tpu.memory_space<vmem>>, vector<1x16xf32>
    %31 = vector.shape_cast %30 : vector<1x16xf32> to vector<16xf32>
    %32 = vector.shape_cast %31 : vector<16xf32> to vector<1x16xf32>
    %33 = vector.broadcast %32 : vector<1x16xf32> to vector<128x16xf32>
    %34 = arith.addf %29, %33 : vector<128x16xf32>
    %cst_17 = arith.constant 0.000000e+00 : f32
    %35 = vector.broadcast %cst_17 : f32 to vector<128x16xf32>
    %36 = arith.maximumf %34, %35 : vector<128x16xf32>
    %c0_18 = arith.constant 0 : index
    %c0_19 = arith.constant 0 : index
    %c0_20 = arith.constant 0 : index
    %c0_21 = arith.constant 0 : index
    %37 = vector.load %arg4[%c0_18, %c0_19, %c0_20, %c0_21] : memref<1x16x8x16xf32, #tpu.memory_space<vmem>>, vector<1x16x8x16xf32>
    %38 = vector.shape_cast %37 : vector<1x16x8x16xf32> to vector<16x8x16xf32>
    %39 = vector.shape_cast %38 : vector<16x8x16xf32> to vector<128x16xf32>
    %c0_22 = arith.constant 0 : index
    %c0_23 = arith.constant 0 : index
    %c0_24 = arith.constant 0 : index
    %40 = vector.load %arg9[%c0_22, %c0_23, %c0_24] : memref<4x16x16xf32, #tpu.memory_space<vmem>>, vector<4x16x16xf32>
    %c0_25 = arith.constant 0 : index
    %c0_26 = arith.constant 0 : index
    %c0_27 = arith.constant 0 : index
    %41 = vector.load %arg10[%c0_25, %c0_26, %c0_27] : memref<2x16x32xf32, #tpu.memory_space<vmem>>, vector<2x16x32xf32>
    %c0_28 = arith.constant 0 : index
    %c0_29 = arith.constant 0 : index
    %42 = vector.load %arg11[%c0_28, %c0_29] : memref<1x32xf32, #tpu.memory_space<vmem>>, vector<1x32xf32>
    %43 = vector.shape_cast %42 : vector<1x32xf32> to vector<32xf32>
    %44 = vector.extract_strided_slice %40 {offsets = [0, 0, 0], sizes = [1, 16, 16], strides = [1, 1, 1]} : vector<4x16x16xf32> to vector<1x16x16xf32>
    %45 = vector.shape_cast %44 : vector<1x16x16xf32> to vector<16x16xf32>
    %cst_30 = arith.constant dense<0.000000e+00> : vector<128x16xf32>
    %46 = tpu.matmul %39, %45, %cst_30 {dimension_numbers = #tpu.dot_dimension_numbers<[1], [0], [0], [1], [0, 0, 1, 1], [], []>} : vector<128x16xf32>, vector<16x16xf32>, vector<128x16xf32> -> vector<128x16xf32>
    %47 = vector.extract_strided_slice %40 {offsets = [1, 0, 0], sizes = [1, 16, 16], strides = [1, 1, 1]} : vector<4x16x16xf32> to vector<1x16x16xf32>
    %48 = vector.shape_cast %47 : vector<1x16x16xf32> to vector<16x16xf32>
    %cst_31 = arith.constant dense<0.000000e+00> : vector<128x16xf32>
    %49 = tpu.matmul %36, %48, %cst_31 {dimension_numbers = #tpu.dot_dimension_numbers<[1], [0], [0], [1], [0, 0, 1, 1], [], []>} : vector<128x16xf32>, vector<16x16xf32>, vector<128x16xf32> -> vector<128x16xf32>
    %50 = arith.addf %46, %49 : vector<128x16xf32>
    %51 = vector.extract_strided_slice %40 {offsets = [2, 0, 0], sizes = [1, 16, 16], strides = [1, 1, 1]} : vector<4x16x16xf32> to vector<1x16x16xf32>
    %52 = vector.shape_cast %51 : vector<1x16x16xf32> to vector<16x16xf32>
    %cst_32 = arith.constant dense<0.000000e+00> : vector<128x16xf32>
    %53 = tpu.matmul %39, %52, %cst_32 {dimension_numbers = #tpu.dot_dimension_numbers<[1], [0], [0], [1], [0, 0, 1, 1], [], []>} : vector<128x16xf32>, vector<16x16xf32>, vector<128x16xf32> -> vector<128x16xf32>
    %54 = vector.extract_strided_slice %40 {offsets = [3, 0, 0], sizes = [1, 16, 16], strides = [1, 1, 1]} : vector<4x16x16xf32> to vector<1x16x16xf32>
    %55 = vector.shape_cast %54 : vector<1x16x16xf32> to vector<16x16xf32>
    %cst_33 = arith.constant dense<0.000000e+00> : vector<128x16xf32>
    %56 = tpu.matmul %36, %55, %cst_33 {dimension_numbers = #tpu.dot_dimension_numbers<[1], [0], [0], [1], [0, 0, 1, 1], [], []>} : vector<128x16xf32>, vector<16x16xf32>, vector<128x16xf32> -> vector<128x16xf32>
    %57 = arith.addf %53, %56 : vector<128x16xf32>
    %58 = vector.shape_cast %50 : vector<128x16xf32> to vector<16x8x16xf32>
    %cst_34 = arith.constant dense<0xFF800000> : vector<16x16xf32>
    %59 = vector.multi_reduction <maximumf>, %58, %cst_34 [1] : vector<16x8x16xf32> to vector<16x16xf32>
    %60 = vector.shape_cast %59 : vector<16x16xf32> to vector<16x1x16xf32>
    %61 = vector.broadcast %60 : vector<16x1x16xf32> to vector<16x8x16xf32>
    %62 = arith.subf %58, %61 : vector<16x8x16xf32>
    %63 = math.exp %62 : vector<16x8x16xf32>
    %cst_35 = arith.constant dense<0.000000e+00> : vector<16x16xf32>
    %64 = vector.multi_reduction <add>, %63, %cst_35 [1] : vector<16x8x16xf32> to vector<16x16xf32>
    %65 = vector.shape_cast %64 : vector<16x16xf32> to vector<16x1x16xf32>
    %66 = tpu.reciprocal %65 {approx = true} : vector<16x1x16xf32> -> vector<16x1x16xf32>
    %67 = vector.broadcast %66 : vector<16x1x16xf32> to vector<16x8x16xf32>
    %68 = arith.mulf %63, %67 : vector<16x8x16xf32>
    %69 = vector.shape_cast %57 : vector<128x16xf32> to vector<16x8x16xf32>
    %cst_36 = arith.constant dense<0xFF800000> : vector<16x16xf32>
    %70 = vector.multi_reduction <maximumf>, %69, %cst_36 [1] : vector<16x8x16xf32> to vector<16x16xf32>
    %71 = vector.shape_cast %70 : vector<16x16xf32> to vector<16x1x16xf32>
    %72 = vector.broadcast %71 : vector<16x1x16xf32> to vector<16x8x16xf32>
    %73 = arith.subf %69, %72 : vector<16x8x16xf32>
    %74 = math.exp %73 : vector<16x8x16xf32>
    %cst_37 = arith.constant dense<0.000000e+00> : vector<16x16xf32>
    %75 = vector.multi_reduction <add>, %74, %cst_37 [1] : vector<16x8x16xf32> to vector<16x16xf32>
    %76 = vector.shape_cast %75 : vector<16x16xf32> to vector<16x1x16xf32>
    %77 = tpu.reciprocal %76 {approx = true} : vector<16x1x16xf32> -> vector<16x1x16xf32>
    %78 = vector.broadcast %77 : vector<16x1x16xf32> to vector<16x8x16xf32>
    %79 = arith.mulf %74, %78 : vector<16x8x16xf32>
    %80 = vector.shape_cast %39 : vector<128x16xf32> to vector<16x8x16xf32>
    %81 = arith.mulf %80, %68 : vector<16x8x16xf32>
    %cst_38 = arith.constant dense<0.000000e+00> : vector<16x16xf32>
    %82 = vector.multi_reduction <add>, %81, %cst_38 [1] : vector<16x8x16xf32> to vector<16x16xf32>
    %83 = vector.shape_cast %36 : vector<128x16xf32> to vector<16x8x16xf32>
    %84 = arith.mulf %83, %79 : vector<16x8x16xf32>
    %cst_39 = arith.constant dense<0.000000e+00> : vector<16x16xf32>
    %85 = vector.multi_reduction <add>, %84, %cst_39 [1] : vector<16x8x16xf32> to vector<16x16xf32>
    %86 = vector.extract_strided_slice %41 {offsets = [0, 0, 0], sizes = [1, 16, 32], strides = [1, 1, 1]} : vector<2x16x32xf32> to vector<1x16x32xf32>
    %87 = vector.shape_cast %86 : vector<1x16x32xf32> to vector<16x32xf32>
    %cst_40 = arith.constant dense<0.000000e+00> : vector<16x32xf32>
    %88 = tpu.matmul %82, %87, %cst_40 {dimension_numbers = #tpu.dot_dimension_numbers<[1], [0], [0], [1], [0, 0, 1, 1], [], []>} : vector<16x16xf32>, vector<16x32xf32>, vector<16x32xf32> -> vector<16x32xf32>
    %89 = vector.extract_strided_slice %41 {offsets = [1, 0, 0], sizes = [1, 16, 32], strides = [1, 1, 1]} : vector<2x16x32xf32> to vector<1x16x32xf32>
    %90 = vector.shape_cast %89 : vector<1x16x32xf32> to vector<16x32xf32>
    %cst_41 = arith.constant dense<0.000000e+00> : vector<16x32xf32>
    %91 = tpu.matmul %85, %90, %cst_41 {dimension_numbers = #tpu.dot_dimension_numbers<[1], [0], [0], [1], [0, 0, 1, 1], [], []>} : vector<16x16xf32>, vector<16x32xf32>, vector<16x32xf32> -> vector<16x32xf32>
    %92 = arith.addf %88, %91 : vector<16x32xf32>
    %93 = vector.shape_cast %43 : vector<32xf32> to vector<1x32xf32>
    %94 = vector.broadcast %93 : vector<1x32xf32> to vector<16x32xf32>
    %95 = arith.addf %92, %94 : vector<16x32xf32>
    %cst_42 = arith.constant 0.000000e+00 : f32
    %96 = vector.broadcast %cst_42 : f32 to vector<16x32xf32>
    %97 = arith.maximumf %95, %96 : vector<16x32xf32>
    %c0_43 = arith.constant 0 : index
    %c0_44 = arith.constant 0 : index
    %c0_45 = arith.constant 0 : index
    %98 = vector.load %arg12[%c0_43, %c0_44, %c0_45] : memref<1x16x32xf32, #tpu.memory_space<vmem>>, vector<1x16x32xf32>
    %99 = vector.shape_cast %98 : vector<1x16x32xf32> to vector<16x32xf32>
    %100 = vector.shape_cast %97 : vector<16x32xf32> to vector<1x16x32xf32>
    tpu.vector_store %arg12[%c0_43, %c0_44, %c0_45], %100 {strides = array<i32>} : memref<1x16x32xf32, #tpu.memory_space<vmem>>, vector<1x16x32xf32>,
    return
  }
  func.func @transform_0(%arg0: i32, %arg1: i32) -> (i32, i32, i32) {
    %c0_i32 = arith.constant 0 : i32
    %c0_i32_0 = arith.constant 0 : i32
    return %arg0, %arg1, %c0_i32 : i32, i32, i32
  }
  func.func @transform_1(%arg0: i32, %arg1: i32) -> (i32, i32, i32, i32) {
    %c0_i32 = arith.constant 0 : i32
    %c0_i32_0 = arith.constant 0 : i32
    %c0_i32_1 = arith.constant 0 : i32
    return %arg0, %arg1, %c0_i32, %c0_i32_0 : i32, i32, i32, i32
  }
  func.func @transform_2(%arg0: i32, %arg1: i32) -> (i32, i32, i32, i32) {
    %c0_i32 = arith.constant 0 : i32
    %c0_i32_0 = arith.constant 0 : i32
    %c0_i32_1 = arith.constant 0 : i32
    return %arg0, %arg1, %c0_i32, %c0_i32_0 : i32, i32, i32, i32
  }
  func.func @transform_3(%arg0: i32, %arg1: i32) -> (i32, i32) {
    %c0_i32 = arith.constant 0 : i32
    %c0_i32_0 = arith.constant 0 : i32
    %c0_i32_1 = arith.constant 0 : i32
    return %c0_i32, %c0_i32_0 : i32, i32
  }
  func.func @transform_4(%arg0: i32, %arg1: i32) -> (i32, i32) {
    %c0_i32 = arith.constant 0 : i32
    %c0_i32_0 = arith.constant 0 : i32
    %c0_i32_1 = arith.constant 0 : i32
    return %c0_i32, %c0_i32_0 : i32, i32
  }
  func.func @transform_5(%arg0: i32, %arg1: i32) -> (i32, i32) {
    %c0_i32 = arith.constant 0 : i32
    %c0_i32_0 = arith.constant 0 : i32
    %c0_i32_1 = arith.constant 0 : i32
    return %c0_i32, %c0_i32_0 : i32, i32
  }
  func.func @transform_6(%arg0: i32, %arg1: i32) -> (i32, i32) {
    %c0_i32 = arith.constant 0 : i32
    %c0_i32_0 = arith.constant 0 : i32
    %c0_i32_1 = arith.constant 0 : i32
    return %c0_i32, %c0_i32_0 : i32, i32
  }
  func.func @transform_7(%arg0: i32, %arg1: i32) -> (i32, i32, i32) {
    %c0_i32 = arith.constant 0 : i32
    %c0_i32_0 = arith.constant 0 : i32
    %c0_i32_1 = arith.constant 0 : i32
    %c0_i32_2 = arith.constant 0 : i32
    return %c0_i32, %c0_i32_0, %c0_i32_1 : i32, i32, i32
  }
  func.func @transform_8(%arg0: i32, %arg1: i32) -> (i32, i32, i32) {
    %c0_i32 = arith.constant 0 : i32
    %c0_i32_0 = arith.constant 0 : i32
    %c0_i32_1 = arith.constant 0 : i32
    %c0_i32_2 = arith.constant 0 : i32
    return %c0_i32, %c0_i32_0, %c0_i32_1 : i32, i32, i32
  }
  func.func @transform_9(%arg0: i32, %arg1: i32) -> (i32, i32) {
    %c0_i32 = arith.constant 0 : i32
    %c0_i32_0 = arith.constant 0 : i32
    %c0_i32_1 = arith.constant 0 : i32
    return %c0_i32, %c0_i32_0 : i32, i32
  }
  func.func @transform_10(%arg0: i32, %arg1: i32) -> (i32, i32, i32) {
    %c0_i32 = arith.constant 0 : i32
    %c0_i32_0 = arith.constant 0 : i32
    return %arg0, %arg1, %c0_i32 : i32, i32, i32
  }
}

</mosaic_0001>

<llo_original>
// kernel: building_block_forward.2
$region0: #{building_block_forward.2}
  #allocation0 [shape = 'u32[]', space=smem, size = 0x4, offset = 0x4, fixed_abs, tag = 'smem constant byte address 0x4 - core index']
  #allocation1 [shape = 'u32[144,128]{1,0:T(1,128)}', space=vmem, size = 0x12000, scoped, tag = 'internal scratch']
  %s0 = inlined_call_operand.vmem [shape: f32[2,16,3], index: 0, kind: input, shape index: {}]
  %s1 = inlined_call_operand.vmem [shape: f32[2,16,8,3], index: 1, kind: input, shape index: {}]
  %s2 = inlined_call_operand.vmem [shape: f32[2,16,8,16], index: 2, kind: input, shape index: {}]
  %s3 = inlined_call_operand.vmem [shape: f32[10,16], index: 3, kind: input, shape index: {}]
  %s4 = inlined_call_operand.vmem [shape: f32[1,16], index: 4, kind: input, shape index: {}]
  %s5 = inlined_call_operand.vmem [shape: f32[4,16,16], index: 5, kind: input, shape index: {}]
  %s6 = inlined_call_operand.vmem [shape: f32[2,16,16], index: 6, kind: input, shape index: {}]
  %s7 = inlined_call_operand.vmem [shape: f32[1,16], index: 7, kind: input, shape index: {}]
  %s8 = inlined_call_operand.vmem [shape: f32[2,16,16], index: 8, kind: output, shape index: {}]
  %s9 = sld [smem:[#allocation0]]
  $region65: #{building_block_forward.2} parent=0
    _
  %s11 = ssub.s32 1, %s9
  %s12 = scalar_select 0, %s11, %s9
  loop: start=0, step=1, limit=4
  $region2: #{building_block_forward.2} parent=0 // loop_pre_header
    _
  $region3: #{building_block_forward.2} parent=0 // loop_header
    %s14 = sphi 0, %s18
    %p15 = scmp.ge.s32.totalorder %s14, 4
    %s21 = sphi 0, %s33
    %s22 = sphi 0, %s29
    %s23 = sphi 0, %s21
    %s24 = sphi 0, %s22
    %s25 = sphi 0, %s23
    %s26 = sphi 0, %s24
    %s38 = sphi 0, %s40
    %s41 = sphi 0, %s38
    %s42 = sphi 0, %s41
    %s58 = sphi 0, %s42
    %s66 = sphi 0, %s68
    %s69 = sphi 0, %s66
    %s70 = sphi 0, %s69
    %s86 = sphi 0, %s70
    %s94 = sphi 0, %s96
    %s97 = sphi 0, %s94
    %s98 = sphi 0, %s97
    %s114 = sphi 0, %s98
    %s118 = sphi 0, %s118
    %s120 = sphi 0, %s118
    %s121 = sphi 0, %s120
    %s135 = sphi 0, %s121
    %s139 = sphi 0, %s139
    %s141 = sphi 0, %s139
    %s142 = sphi 0, %s141
    %s156 = sphi 0, %s142
    %s160 = sphi 0, %s160
    %s162 = sphi 0, %s160
    %s163 = sphi 0, %s162
    %s177 = sphi 0, %s163
    %s181 = sphi 0, %s181
    %s183 = sphi 0, %s181
    %s184 = sphi 0, %s183
    %s198 = sphi 0, %s184
    %s202 = sphi 0, %s202
    %s204 = sphi 0, %s202
    %s205 = sphi 0, %s204
    %s219 = sphi 0, %s205
    %s227 = sphi 0, %s229
    %s230 = sphi 0, %s227
    %s231 = sphi 0, %s230
    %s247 = sphi 0, %s231
  $region4: #{building_block_forward.2} parent=0 // loop_header_branch
    %17 = sbr.rel (%p15) target = $region8
  $region5: #{building_block_forward.2} parent=0 // loop_body
    %s19 = ssub.s32 %s14, 1
    %s20 = ssub.s32 %s14, 2
    %s27 = sadd.s32 1, %s22
    %p28 = scmp.ge.s32.totalorder %s27, 1
    %s29 = scalar_select %p28, 0, %s27
    %s30 = sadd.s32 1, %s21
    %s31 = scalar_select %p28, %s30, %s21
    %p32 = scmp.ge.s32.totalorder %s31, 2
    %s33 = scalar_select %p32, 0, %s31
    %s34 = ssub.s32 %s21, %s33
    %s35 = ssub.s32 %s22, %s29
    %s36 = sor.u32 %s34, %s35
    %p37 = scmp.eq.s32.totalorder %s36, 0
    %s39 = sadd.s32 %s38, 1
    %s40 = scalar_select %p37, %s38, %s39
    %p43 = pneg %p37
    %p44 = scmp.eq.s32.totalorder %s14, 1
    %p45 = por %p43, %p44
    %p46 = scmp.ne.s32.totalorder %s38, %s41
    %p47 = scmp.eq.s32.totalorder %s14, 0
    %p48 = por %p46, %p47
    %p49 = scmp.ne.s32.totalorder %s38, %s41
    %p50 = scmp.eq.s32.totalorder %s19, 1
    %p51 = por %p49, %p50
    %p52 = scmp.ne.s32.totalorder %s41, %s42
    %p53 = scmp.eq.s32.totalorder %s19, 0
    %p54 = por %p52, %p53
    %p55 = scmp.ne.s32.totalorder %s41, %s42
    %p56 = scmp.eq.s32.totalorder %s20, 1
    %p57 = por %p55, %p56
    %p59 = scmp.ne.s32.totalorder %s42, %s58
    %p60 = scmp.eq.s32.totalorder %s20, 0
    %p61 = por %p59, %p60
    %s62 = ssub.s32 %s21, %s33
    %s63 = ssub.s32 %s22, %s29
    %s64 = sor.u32 %s62, %s63
    %p65 = scmp.eq.s32.totalorder %s64, 0
    %s67 = sadd.s32 %s66, 1
    %s68 = scalar_select %p65, %s66, %s67
    %p71 = pneg %p65
    %p72 = scmp.eq.s32.totalorder %s14, 1
    %p73 = por %p71, %p72
    %p74 = scmp.ne.s32.totalorder %s66, %s69
    %p75 = scmp.eq.s32.totalorder %s14, 0
    %p76 = por %p74, %p75
    %p77 = scmp.ne.s32.totalorder %s66, %s69
    %p78 = scmp.eq.s32.totalorder %s19, 1
    %p79 = por %p77, %p78
    %p80 = scmp.ne.s32.totalorder %s69, %s70
    %p81 = scmp.eq.s32.totalorder %s19, 0
    %p82 = por %p80, %p81
    %p83 = scmp.ne.s32.totalorder %s69, %s70
    %p84 = scmp.eq.s32.totalorder %s20, 1
    %p85 = por %p83, %p84
    %p87 = scmp.ne.s32.totalorder %s70, %s86
    %p88 = scmp.eq.s32.totalorder %s20, 0
    %p89 = por %p87, %p88
    %s90 = ssub.s32 %s21, %s33
    %s91 = ssub.s32 %s22, %s29
    %s92 = sor.u32 %s90, %s91
    %p93 = scmp.eq.s32.totalorder %s92, 0
    %s95 = sadd.s32 %s94, 1
    %s96 = scalar_select %p93, %s94, %s95
    %p99 = pneg %p93
    %p100 = scmp.eq.s32.totalorder %s14, 1
    %p101 = por %p99, %p100
    %p102 = scmp.ne.s32.totalorder %s94, %s97
    %p103 = scmp.eq.s32.totalorder %s14, 0
    %p104 = por %p102, %p103
    %p105 = scmp.ne.s32.totalorder %s94, %s97
    %p106 = scmp.eq.s32.totalorder %s19, 1
    %p107 = por %p105, %p106
    %p108 = scmp.ne.s32.totalorder %s97, %s98
    %p109 = scmp.eq.s32.totalorder %s19, 0
    %p110 = por %p108, %p109
    %p111 = scmp.ne.s32.totalorder %s97, %s98
    %p112 = scmp.eq.s32.totalorder %s20, 1
    %p113 = por %p111, %p112
    %p115 = scmp.ne.s32.totalorder %s98, %s114
    %p116 = scmp.eq.s32.totalorder %s20, 0
    %p117 = por %p115, %p116
    %s119 = sadd.s32 %s118, 1
    %p122 = scmp.eq.s32.totalorder %s14, 1
    %p123 = scmp.ne.s32.totalorder %s118, %s120
    %p124 = scmp.eq.s32.totalorder %s14, 0
    %p125 = por %p123, %p124
    %p126 = scmp.ne.s32.totalorder %s118, %s120
    %p127 = scmp.eq.s32.totalorder %s19, 1
    %p128 = por %p126, %p127
    %p129 = scmp.ne.s32.totalorder %s120, %s121
    %p130 = scmp.eq.s32.totalorder %s19, 0
    %p131 = por %p129, %p130
    %p132 = scmp.ne.s32.totalorder %s120, %s121
    %p133 = scmp.eq.s32.totalorder %s20, 1
    %p134 = por %p132, %p133
    %p136 = scmp.ne.s32.totalorder %s121, %s135
    %p137 = scmp.eq.s32.totalorder %s20, 0
    %p138 = por %p136, %p137
    %s140 = sadd.s32 %s139, 1
    %p143 = scmp.eq.s32.totalorder %s14, 1
    %p144 = scmp.ne.s32.totalorder %s139, %s141
    %p145 = scmp.eq.s32.totalorder %s14, 0
    %p146 = por %p144, %p145
    %p147 = scmp.ne.s32.totalorder %s139, %s141
    %p148 = scmp.eq.s32.totalorder %s19, 1
    %p149 = por %p147, %p148
    %p150 = scmp.ne.s32.totalorder %s141, %s142
    %p151 = scmp.eq.s32.totalorder %s19, 0
    %p152 = por %p150, %p151
    %p153 = scmp.ne.s32.totalorder %s141, %s142
    %p154 = scmp.eq.s32.totalorder %s20, 1
    %p155 = por %p153, %p154
    %p157 = scmp.ne.s32.totalorder %s142, %s156
    %p158 = scmp.eq.s32.totalorder %s20, 0
    %p159 = por %p157, %p158
    %s161 = sadd.s32 %s160, 1
    %p164 = scmp.eq.s32.totalorder %s14, 1
    %p165 = scmp.ne.s32.totalorder %s160, %s162
    %p166 = scmp.eq.s32.totalorder %s14, 0
    %p167 = por %p165, %p166
    %p168 = scmp.ne.s32.totalorder %s160, %s162
    %p169 = scmp.eq.s32.totalorder %s19, 1
    %p170 = por %p168, %p169
    %p171 = scmp.ne.s32.totalorder %s162, %s163
    %p172 = scmp.eq.s32.totalorder %s19, 0
    %p173 = por %p171, %p172
    %p174 = scmp.ne.s32.totalorder %s162, %s163
    %p175 = scmp.eq.s32.totalorder %s20, 1
    %p176 = por %p174, %p175
    %p178 = scmp.ne.s32.totalorder %s163, %s177
    %p179 = scmp.eq.s32.totalorder %s20, 0
    %p180 = por %p178, %p179
    %s182 = sadd.s32 %s181, 1
    %p185 = scmp.eq.s32.totalorder %s14, 1
    %p186 = scmp.ne.s32.totalorder %s181, %s183
    %p187 = scmp.eq.s32.totalorder %s14, 0
    %p188 = por %p186, %p187
    %p189 = scmp.ne.s32.totalorder %s181, %s183
    %p190 = scmp.eq.s32.totalorder %s19, 1
    %p191 = por %p189, %p190
    %p192 = scmp.ne.s32.totalorder %s183, %s184
    %p193 = scmp.eq.s32.totalorder %s19, 0
    %p194 = por %p192, %p193
    %p195 = scmp.ne.s32.totalorder %s183, %s184
    %p196 = scmp.eq.s32.totalorder %s20, 1
    %p197 = por %p195, %p196
    %p199 = scmp.ne.s32.totalorder %s184, %s198
    %p200 = scmp.eq.s32.totalorder %s20, 0
    %p201 = por %p199, %p200
    %s203 = sadd.s32 %s202, 1
    %p206 = scmp.eq.s32.totalorder %s14, 1
    %p207 = scmp.ne.s32.totalorder %s202, %s204
    %p208 = scmp.eq.s32.totalorder %s14, 0
    %p209 = por %p207, %p208
    %p210 = scmp.ne.s32.totalorder %s202, %s204
    %p211 = scmp.eq.s32.totalorder %s19, 1
    %p212 = por %p210, %p211
    %p213 = scmp.ne.s32.totalorder %s204, %s205
    %p214 = scmp.eq.s32.totalorder %s19, 0
    %p215 = por %p213, %p214
    %p216 = scmp.ne.s32.totalorder %s204, %s205
    %p217 = scmp.eq.s32.totalorder %s20, 1
    %p218 = por %p216, %p217
    %p220 = scmp.ne.s32.totalorder %s205, %s219
    %p221 = scmp.eq.s32.totalorder %s20, 0
    %p222 = por %p220, %p221
    %s223 = ssub.s32 %s21, %s33
    %s224 = ssub.s32 %s22, %s29
    %s225 = sor.u32 %s223, %s224
    %p226 = scmp.eq.s32.totalorder %s225, 0
    %s228 = sadd.s32 %s227, 1
    %s229 = scalar_select %p226, %s227, %s228
    %p232 = pneg %p226
    %p233 = scmp.eq.s32.totalorder %s14, 1
    %p234 = por %p232, %p233
    %p235 = scmp.ne.s32.totalorder %s227, %s230
    %p236 = scmp.eq.s32.totalorder %s14, 0
    %p237 = por %p235, %p236
    %p238 = scmp.ne.s32.totalorder %s227, %s230
    %p239 = scmp.eq.s32.totalorder %s19, 1
    %p240 = por %p238, %p239
    %p241 = scmp.ne.s32.totalorder %s230, %s231
    %p242 = scmp.eq.s32.totalorder %s19, 0
    %p243 = por %p241, %p242
    %p244 = scmp.ne.s32.totalorder %s230, %s231
    %p245 = scmp.eq.s32.totalorder %s20, 1
    %p246 = por %p244, %p245
    %p248 = scmp.ne.s32.totalorder %s231, %s247
    %p249 = scmp.eq.s32.totalorder %s20, 0
    %p250 = por %p248, %p249
    %p251 = scmp.le.s32.totalorder 1, %s14
    %p252 = scmp.lt.s32.totalorder %s14, 3
    %p253 = pnand %p251, %p252
    %p254 = pneg %p253
    // Predicated region
    $region9: #{building_block_forward.2} parent=5 // pred_check
      _
    $region10: #{building_block_forward.2} parent=5 // pred_check_branch
      %256 = sbr.rel (%p253) target = $region12
    $region11: #{building_block_forward.2} parent=5 // pred_region
      %s257 = ssub.s32 %s14, 1
      // Predicated region
      $region13: #{building_block_forward.2} parent=11 // pred_check
        %p258 = pneg %p131
      $region14: #{building_block_forward.2} parent=11 // pred_check_branch
        %260 = sbr.rel (%p258) target = $region16
      $region15: #{building_block_forward.2} parent=11 // pred_region
        _
      $region16: #{building_block_forward.2} parent=11 // pred_fallthru
        _
      // Predicated region
      $region17: #{building_block_forward.2} parent=11 // pred_check
        %p261 = pneg %p152
      $region18: #{building_block_forward.2} parent=11 // pred_check_branch
        %263 = sbr.rel (%p261) target = $region20
      $region19: #{building_block_forward.2} parent=11 // pred_region
        _
      $region20: #{building_block_forward.2} parent=11 // pred_fallthru
        _
      // Predicated region
      $region21: #{building_block_forward.2} parent=11 // pred_check
        %p264 = pneg %p173
      $region22: #{building_block_forward.2} parent=11 // pred_check_branch
        %266 = sbr.rel (%p264) target = $region24
      $region23: #{building_block_forward.2} parent=11 // pred_region
        _
      $region24: #{building_block_forward.2} parent=11 // pred_fallthru
        _
      // Predicated region
      $region25: #{building_block_forward.2} parent=11 // pred_check
        %p267 = pneg %p194
      $region26: #{building_block_forward.2} parent=11 // pred_check_branch
        %269 = sbr.rel (%p267) target = $region28
      $region27: #{building_block_forward.2} parent=11 // pred_region
        _
      $region28: #{building_block_forward.2} parent=11 // pred_fallthru
        _
      // Predicated region
      $region29: #{building_block_forward.2} parent=11 // pred_check
        %p270 = pneg %p215
      $region30: #{building_block_forward.2} parent=11 // pred_check_branch
        %272 = sbr.rel (%p270) target = $region32
      $region31: #{building_block_forward.2} parent=11 // pred_region
        _
      $region32: #{building_block_forward.2} parent=11 // pred_fallthru
        _
    $region12: #{building_block_forward.2} parent=5 // pred_fallthru
      _
    %p273 = scmp.lt.s32.totalorder %s14, 2
    // Predicated region
    $region33: #{building_block_forward.2} parent=5 // pred_check
      %p274 = pneg %p273
    $region34: #{building_block_forward.2} parent=5 // pred_check_branch
      %276 = sbr.rel (%p274) target = $region36
    $region35: #{building_block_forward.2} parent=5 // pred_region
      // Predicated region
      $region37: #{building_block_forward.2} parent=35 // pred_check
        %p277 = pneg %p48
      $region38: #{building_block_forward.2} parent=35 // pred_check_branch
        %279 = sbr.rel (%p277) target = $region40
      $region39: #{building_block_forward.2} parent=35 // pred_region
        %s280 = smul.u32 2, %s22
        %p281 = scmp.lt.s32.totalorder %s21, 1
        %s282 = scalar_select %p281, %s21, 1
        %p283 = scmp.lt.s32.totalorder %s280, 1
        %s284 = scalar_select %p283, %s280, 1
        %s285 = smul.addr %s282, 2
        %s286 = sadd.s32 %s284, %s285
        %s287 = smul.addr %s286, 8
        %s288 = scalar_lea.vmem %s0, %s287
        %s289 = smul.u32 2, %s22
      $region40: #{building_block_forward.2} parent=35 // pred_fallthru
        _
      // Predicated region
      $region41: #{building_block_forward.2} parent=35 // pred_check
        %p290 = pneg %p76
      $region42: #{building_block_forward.2} parent=35 // pred_check_branch
        %292 = sbr.rel (%p290) target = $region44
      $region43: #{building_block_forward.2} parent=35 // pred_region
        %s293 = smul.u32 16, %s22
        %p294 = scmp.lt.s32.totalorder %s21, 1
        %s295 = scalar_select %p294, %s21, 1
        %p296 = scmp.lt.s32.totalorder %s293, 15
        %s297 = scalar_select %p296, %s293, 15
        %s298 = smul.addr %s295, 16
        %s299 = sadd.s32 %s297, %s298
        %s300 = smul.addr %s299, 8
        %s301 = scalar_lea.vmem %s1, %s300
        %s302 = smul.u32 16, %s22
      $region44: #{building_block_forward.2} parent=35 // pred_fallthru
        _
      // Predicated region
      $region45: #{building_block_forward.2} parent=35 // pred_check
        %p303 = pneg %p104
      $region46: #{building_block_forward.2} parent=35 // pred_check_branch
        %305 = sbr.rel (%p303) target = $region48
      $region47: #{building_block_forward.2} parent=35 // pred_region
        %s306 = smul.u32 16, %s22
        %p307 = scmp.lt.s32.totalorder %s21, 1
        %s308 = scalar_select %p307, %s21, 1
        %p309 = scmp.lt.s32.totalorder %s306, 15
        %s310 = scalar_select %p309, %s306, 15
        %s311 = smul.addr %s308, 16
        %s312 = sadd.s32 %s310, %s311
        %s313 = smul.addr %s312, 8
        %s314 = scalar_lea.vmem %s2, %s313
        %s315 = smul.u32 16, %s22
      $region48: #{building_block_forward.2} parent=35 // pred_fallthru
        _
    $region36: #{building_block_forward.2} parent=5 // pred_fallthru
      _
    %p316 = scmp.le.s32.totalorder 1, %s14
    %p317 = scmp.lt.s32.totalorder %s14, 3
    %p318 = pnand %p316, %p317
    %p319 = pneg %p318
    // Predicated region
    $region49: #{building_block_forward.2} parent=5 // pred_check
      _
    $region50: #{building_block_forward.2} parent=5 // pred_check_branch
      %321 = sbr.rel (%p318) target = $region52
    $region51: #{building_block_forward.2} parent=5 // pred_region
      %s322 = ssub.s32 %s14, 1
      %s323 = smul.u32 2, %s24
      %p324 = scmp.lt.s32.totalorder %s23, 1
      %s325 = scalar_select %p324, %s23, 1
      %p326 = scmp.lt.s32.totalorder %s323, 1
      %s327 = scalar_select %p326, %s323, 1
      %s328 = smul.addr %s325, 2
      %s329 = sadd.s32 %s327, %s328
      %s330 = smul.addr %s329, 8
      %s331 = scalar_lea.vmem %s0, %s330
      %p332 = pneg %p54
      %p333 = pneg %p51
      %s334 = smul.u32 16, %s24
      %p335 = scmp.lt.s32.totalorder %s23, 1
      %s336 = scalar_select %p335, %s23, 1
      %p337 = scmp.lt.s32.totalorder %s334, 15
      %s338 = scalar_select %p337, %s334, 15
      %s339 = smul.addr %s336, 16
      %s340 = sadd.s32 %s338, %s339
      %s341 = smul.addr %s340, 8
      %s342 = scalar_lea.vmem %s1, %s341
      %p343 = pneg %p82
      %p344 = pneg %p79
      %s345 = smul.u32 16, %s24
      %p346 = scmp.lt.s32.totalorder %s23, 1
      %s347 = scalar_select %p346, %s23, 1
      %p348 = scmp.lt.s32.totalorder %s345, 15
      %s349 = scalar_select %p348, %s345, 15
      %s350 = smul.addr %s347, 16
      %s351 = sadd.s32 %s349, %s350
      %s352 = smul.addr %s351, 8
      %s353 = scalar_lea.vmem %s2, %s352
      %p354 = pneg %p110
      %p355 = pneg %p107
      %p356 = pneg %p131
      %p357 = pneg %p128
      %p358 = pneg %p152
      %p359 = pneg %p149
      %p360 = pneg %p173
      %p361 = pneg %p170
      %p362 = pneg %p194
      %p363 = pneg %p191
      %p364 = pneg %p215
      %p365 = pneg %p212
      %p366 = pneg %p243
      %p367 = pneg %p240
      %s368 = smul.u32 2, %s24
      %p369 = scmp.lt.s32.totalorder %s23, 1
      %s370 = scalar_select %p369, %s23, 1
      %p371 = scmp.lt.s32.totalorder %s368, 1
      %s372 = scalar_select %p371, %s368, 1
      %s373 = smul.addr %s370, 2
      %s374 = sadd.s32 %s372, %s373
      %s375 = smul.addr %s374, 8
      %s376 = scalar_lea.vmem %s8, %s375
      %s377 = smul.u32 2, %s24
      %p378 = scmp.lt.s32.totalorder %s23, 1
      %s379 = scalar_select %p378, %s23, 1
      %p380 = scmp.lt.s32.totalorder %s377, 1
      %s381 = scalar_select %p380, %s377, 1
      %s382 = smul.addr %s379, 2
      %s383 = sadd.s32 %s381, %s382
      %s384 = smul.addr %s383, 8
      %s385 = scalar_lea.vmem %s0, %s384
      %s386 = smul.u32 2, %s24
      %s387 = smul.u32 16, %s24
      %p388 = scmp.lt.s32.totalorder %s23, 1
      %s389 = scalar_select %p388, %s23, 1
      %p390 = scmp.lt.s32.totalorder %s387, 15
      %s391 = scalar_select %p390, %s387, 15
      %s392 = smul.addr %s389, 16
      %s393 = sadd.s32 %s391, %s392
      %s394 = smul.addr %s393, 8
      %s395 = scalar_lea.vmem %s1, %s394
      %s396 = smul.u32 16, %s24
      %s397 = smul.u32 16, %s24
      %p398 = scmp.lt.s32.totalorder %s23, 1
      %s399 = scalar_select %p398, %s23, 1
      %p400 = scmp.lt.s32.totalorder %s397, 15
      %s401 = scalar_select %p400, %s397, 15
      %s402 = smul.addr %s399, 16
      %s403 = sadd.s32 %s401, %s402
      %s404 = smul.addr %s403, 8
      %s405 = scalar_lea.vmem %s2, %s404
      %s406 = smul.u32 16, %s24
      %s407 = smul.u32 2, %s24
      %p408 = scmp.lt.s32.totalorder %s23, 1
      %s409 = scalar_select %p408, %s23, 1
      %p410 = scmp.lt.s32.totalorder %s407, 1
      %s411 = scalar_select %p410, %s407, 1
      %s412 = smul.addr %s409, 2
      %s413 = sadd.s32 %s411, %s412
      %s414 = smul.addr %s413, 8
      %s415 = scalar_lea.vmem %s8, %s414
      %s416 = smul.u32 2, %s24
      %v417 = vld [vmem:[%s395] sm:$0xff]
      %v418 = vld [vmem:[%s395 + $0x8] sm:$0xff]
      %v419 = vld [vmem:[%s395 + $0x10] sm:$0xff]
      %v420 = vld [vmem:[%s395 + $0x18] sm:$0xff]
      %v421 = vld [vmem:[%s395 + $0x20] sm:$0xff]
      %v422 = vld [vmem:[%s395 + $0x28] sm:$0xff]
      %v423 = vld [vmem:[%s395 + $0x30] sm:$0xff]
      %v424 = vld [vmem:[%s395 + $0x38] sm:$0xff]
      %v425 = vld [vmem:[%s395 + $0x40] sm:$0xff]
      %v426 = vld [vmem:[%s395 + $0x48] sm:$0xff]
      %v427 = vld [vmem:[%s395 + $0x50] sm:$0xff]
      %v428 = vld [vmem:[%s395 + $0x58] sm:$0xff]
      %v429 = vld [vmem:[%s395 + $0x60] sm:$0xff]
      %v430 = vld [vmem:[%s395 + $0x68] sm:$0xff]
      %v431 = vld [vmem:[%s395 + $0x70] sm:$0xff]
      %v432 = vld [vmem:[%s395 + $0x78] sm:$0xff]
      %v433 = vld [vmem:[%s385] sm:$0xff]
      %v434 = vld [vmem:[%s385 + $0x8] sm:$0xff]
      %v435 = vld [vmem:[%s3] sm:$0xff]
      %v436 = vld [vmem:[%s3 + $0x8] sm:$0x3]
      %v437 = vld [vmem:[%s4] sm:$0x1]
      %v440 = vcombine.high %v433, %v433
      %v442 = vunpack.c.l.s4 1966171168
      %v443 = vunpack.c.0.s8 %v442
      %v444 = vlaneseq
      %v445 = vshrl.u32 %v444, 7
      %v446 = vsub.s32 %v443, %v445
      %v447 = vrot.slane %v433, %v446
      %v449 = vunpack.c.l.s4 1966171168
      %v450 = vunpack.c.0.s8 %v449
      %v451 = vlaneseq
      %v452 = vshrl.u32 %v451, 7
      %v453 = vsub.s32 %v450, %v452
      %v454 = vrot.slane %v440, %v453
      %v455 = vcombine.high %v447, %v447
      %v456 = vcombine.high %v454, %v454
      %v458 = vunpack.c.l.s4 1966171168
      %v459 = vunpack.c.0.s8 %v458
      %v460 = vlaneseq
      %v461 = vshrl.u32 %v460, 7
      %v462 = vsub.s32 %v459, %v461
      %v463 = vrot.slane %v447, %v462
      %v465 = vunpack.c.l.s4 1966171168
      %v466 = vunpack.c.0.s8 %v465
      %v467 = vlaneseq
      %v468 = vshrl.u32 %v467, 7
      %v469 = vsub.s32 %v466, %v468
      %v470 = vrot.slane %v454, %v469
      %v472 = vunpack.c.l.s4 1966171168
      %v473 = vunpack.c.0.s8 %v472
      %v474 = vlaneseq
      %v475 = vshrl.u32 %v474, 7
      %v476 = vsub.s32 %v473, %v475
      %v477 = vrot.slane %v455, %v476
      %v479 = vunpack.c.l.s4 1966171168
      %v480 = vunpack.c.0.s8 %v479
      %v481 = vlaneseq
      %v482 = vshrl.u32 %v481, 7
      %v483 = vsub.s32 %v480, %v482
      %v484 = vrot.slane %v456, %v483
      %v485 = vcombine.high %v463, %v463
      %v486 = vcombine.high %v470, %v470
      %v487 = vcombine.high %v477, %v477
      %v488 = vcombine.high %v484, %v484
      %v489 = vcombine.high %v434, %v434
      %v491 = vunpack.c.l.s4 1966171168
      %v492 = vunpack.c.0.s8 %v491
      %v493 = vlaneseq
      %v494 = vshrl.u32 %v493, 7
      %v495 = vsub.s32 %v492, %v494
      %v496 = vrot.slane %v434, %v495
      %v498 = vunpack.c.l.s4 1966171168
      %v499 = vunpack.c.0.s8 %v498
      %v500 = vlaneseq
      %v501 = vshrl.u32 %v500, 7
      %v502 = vsub.s32 %v499, %v501
      %v503 = vrot.slane %v489, %v502
      %v504 = vcombine.high %v496, %v496
      %v505 = vcombine.high %v503, %v503
      %v507 = vunpack.c.l.s4 1966171168
      %v508 = vunpack.c.0.s8 %v507
      %v509 = vlaneseq
      %v510 = vshrl.u32 %v509, 7
      %v511 = vsub.s32 %v508, %v510
      %v512 = vrot.slane %v496, %v511
      %v514 = vunpack.c.l.s4 1966171168
      %v515 = vunpack.c.0.s8 %v514
      %v516 = vlaneseq
      %v517 = vshrl.u32 %v516, 7
      %v518 = vsub.s32 %v515, %v517
      %v519 = vrot.slane %v503, %v518
      %v521 = vunpack.c.l.s4 1966171168
      %v522 = vunpack.c.0.s8 %v521
      %v523 = vlaneseq
      %v524 = vshrl.u32 %v523, 7
      %v525 = vsub.s32 %v522, %v524
      %v526 = vrot.slane %v504, %v525
      %v528 = vunpack.c.l.s4 1966171168
      %v529 = vunpack.c.0.s8 %v528
      %v530 = vlaneseq
      %v531 = vshrl.u32 %v530, 7
      %v532 = vsub.s32 %v529, %v531
      %v533 = vrot.slane %v505, %v532
      %v534 = vcombine.high %v512, %v512
      %v535 = vcombine.high %v519, %v519
      %v536 = vcombine.high %v526, %v526
      %v537 = vcombine.high %v533, %v533
      %v538 = vlaneseq
      %v539 = vshrl.u32 %v538, 7
      %v540 = vsub.s32 0, %v539
      %v541 = vrot.slane %v463, %v540
      %v542 = vlaneseq
      %v543 = vshrl.u32 %v542, 7
      %v544 = vsub.s32 0, %v543
      %v545 = vrot.slane %v477, %v544
      %v546 = vlaneseq
      %v547 = vshrl.u32 %v546, 7
      %v548 = vsub.s32 0, %v547
      %v549 = vrot.slane %v485, %v548
      %v550 = vlaneseq
      %v551 = vshrl.u32 %v550, 7
      %v552 = vsub.s32 0, %v551
      %v553 = vrot.slane %v487, %v552
      %v554 = vlaneseq
      %v555 = vshrl.u32 %v554, 7
      %v556 = vsub.s32 0, %v555
      %v557 = vrot.slane %v470, %v556
      %v558 = vlaneseq
      %v559 = vshrl.u32 %v558, 7
      %v560 = vsub.s32 0, %v559
      %v561 = vrot.slane %v484, %v560
      %v562 = vlaneseq
      %v563 = vshrl.u32 %v562, 7
      %v564 = vsub.s32 0, %v563
      %v565 = vrot.slane %v486, %v564
      %v566 = vlaneseq
      %v567 = vshrl.u32 %v566, 7
      %v568 = vsub.s32 0, %v567
      %v569 = vrot.slane %v488, %v568
      %v570 = vlaneseq
      %v571 = vshrl.u32 %v570, 7
      %v572 = vsub.s32 0, %v571
      %v573 = vrot.slane %v512, %v572
      %v574 = vlaneseq
      %v575 = vshrl.u32 %v574, 7
      %v576 = vsub.s32 0, %v575
      %v577 = vrot.slane %v526, %v576
      %v578 = vlaneseq
      %v579 = vshrl.u32 %v578, 7
      %v580 = vsub.s32 0, %v579
      %v581 = vrot.slane %v534, %v580
      %v582 = vlaneseq
      %v583 = vshrl.u32 %v582, 7
      %v584 = vsub.s32 0, %v583
      %v585 = vrot.slane %v536, %v584
      %v586 = vlaneseq
      %v587 = vshrl.u32 %v586, 7
      %v588 = vsub.s32 0, %v587
      %v589 = vrot.slane %v519, %v588
      %v590 = vlaneseq
      %v591 = vshrl.u32 %v590, 7
      %v592 = vsub.s32 0, %v591
      %v593 = vrot.slane %v533, %v592
      %v594 = vlaneseq
      %v595 = vshrl.u32 %v594, 7
      %v596 = vsub.s32 0, %v595
      %v597 = vrot.slane %v535, %v596
      %v598 = vlaneseq
      %v599 = vshrl.u32 %v598, 7
      %v600 = vsub.s32 0, %v599
      %v601 = vrot.slane %v537, %v600
      %v618 = vsub.f32 %v541, %v417
      %v619 = vsub.f32 %v545, %v418
      %v620 = vsub.f32 %v549, %v419
      %v621 = vsub.f32 %v553, %v420
      %v622 = vsub.f32 %v557, %v421
      %v623 = vsub.f32 %v561, %v422
      %v624 = vsub.f32 %v565, %v423
      %v625 = vsub.f32 %v569, %v424
      %v626 = vsub.f32 %v573, %v425
      %v627 = vsub.f32 %v577, %v426
      %v628 = vsub.f32 %v581, %v427
      %v629 = vsub.f32 %v585, %v428
      %v630 = vsub.f32 %v589, %v429
      %v631 = vsub.f32 %v593, %v430
      %v632 = vsub.f32 %v597, %v431
      %v633 = vsub.f32 %v601, %v432
      %v634 = vmul.f32 %v618, %v618
      %v635 = vmul.f32 %v619, %v619
      %v636 = vmul.f32 %v620, %v620
      %v637 = vmul.f32 %v621, %v621
      %v638 = vmul.f32 %v622, %v622
      %v639 = vmul.f32 %v623, %v623
      %v640 = vmul.f32 %v624, %v624
      %v641 = vmul.f32 %v625, %v625
      %v642 = vmul.f32 %v626, %v626
      %v643 = vmul.f32 %v627, %v627
      %v644 = vmul.f32 %v628, %v628
      %v645 = vmul.f32 %v629, %v629
      %v646 = vmul.f32 %v630, %v630
      %v647 = vmul.f32 %v631, %v631
      %v648 = vmul.f32 %v632, %v632
      %v649 = vmul.f32 %v633, %v633
      %vm650 = vcmask 23552
      %v651 = vsel %vm650, %v634, 0.0
      %652 = vadd.xlane.f32.xlu0 %v651
      %v653 = vpop.xlane.xlu0 %652
      %v654 = vsel %vm650, %v635, 0.0
      %655 = vadd.xlane.f32.xlu0 %v654
      %v656 = vpop.xlane.xlu0 %655
      %v657 = vsel %vm650, %v636, 0.0
      %658 = vadd.xlane.f32.xlu0 %v657
      %v659 = vpop.xlane.xlu0 %658
      %v660 = vsel %vm650, %v637, 0.0
      %661 = vadd.xlane.f32.xlu0 %v660
      %v662 = vpop.xlane.xlu0 %661
      %v663 = vsel %vm650, %v638, 0.0
      %664 = vadd.xlane.f32.xlu0 %v663
      %v665 = vpop.xlane.xlu0 %664
      %v666 = vsel %vm650, %v639, 0.0
      %667 = vadd.xlane.f32.xlu0 %v666
      %v668 = vpop.xlane.xlu0 %667
      %v669 = vsel %vm650, %v640, 0.0
      %670 = vadd.xlane.f32.xlu0 %v669
      %v671 = vpop.xlane.xlu0 %670
      %v672 = vsel %vm650, %v641, 0.0
      %673 = vadd.xlane.f32.xlu0 %v672
      %v674 = vpop.xlane.xlu0 %673
      %v675 = vsel %vm650, %v642, 0.0
      %676 = vadd.xlane.f32.xlu0 %v675
      %v677 = vpop.xlane.xlu0 %676
      %v678 = vsel %vm650, %v643, 0.0
      %679 = vadd.xlane.f32.xlu0 %v678
      %v680 = vpop.xlane.xlu0 %679
      %v681 = vsel %vm650, %v644, 0.0
      %682 = vadd.xlane.f32.xlu0 %v681
      %v683 = vpop.xlane.xlu0 %682
      %v684 = vsel %vm650, %v645, 0.0
      %685 = vadd.xlane.f32.xlu0 %v684
      %v686 = vpop.xlane.xlu0 %685
      %v687 = vsel %vm650, %v646, 0.0
      %688 = vadd.xlane.f32.xlu0 %v687
      %v689 = vpop.xlane.xlu0 %688
      %v690 = vsel %vm650, %v647, 0.0
      %691 = vadd.xlane.f32.xlu0 %v690
      %v692 = vpop.xlane.xlu0 %691
      %v693 = vsel %vm650, %v648, 0.0
      %694 = vadd.xlane.f32.xlu0 %v693
      %v695 = vpop.xlane.xlu0 %694
      %v696 = vsel %vm650, %v649, 0.0
      %697 = vadd.xlane.f32.xlu0 %v696
      %v698 = vpop.xlane.xlu0 %697
      %v699 = vrsqrt.pop %v653
      %v700 = vmul.f32 %v653, %v699
      %vm701 = vcmp.eq.f32.partialorder %v653, inf
      %v702 = vsel %vm701, %v653, %v700
      %vm703 = vcmp.eq.f32.partialorder %v653, 0.0
      %v704 = vand.u32 %v653, 2147483648
      %v705 = vsel %vm703, %v704, %v702
      %v706 = vrsqrt.pop %v656
      %v707 = vmul.f32 %v656, %v706
      %vm708 = vcmp.eq.f32.partialorder %v656, inf
      %v709 = vsel %vm708, %v656, %v707
      %vm710 = vcmp.eq.f32.partialorder %v656, 0.0
      %v711 = vand.u32 %v656, 2147483648
      %v712 = vsel %vm710, %v711, %v709
      %v713 = vrsqrt.pop %v659
      %v714 = vmul.f32 %v659, %v713
      %vm715 = vcmp.eq.f32.partialorder %v659, inf
      %v716 = vsel %vm715, %v659, %v714
      %vm717 = vcmp.eq.f32.partialorder %v659, 0.0
      %v718 = vand.u32 %v659, 2147483648
      %v719 = vsel %vm717, %v718, %v716
      %v720 = vrsqrt.pop %v662
      %v721 = vmul.f32 %v662, %v720
      %vm722 = vcmp.eq.f32.partialorder %v662, inf
      %v723 = vsel %vm722, %v662, %v721
      %vm724 = vcmp.eq.f32.partialorder %v662, 0.0
      %v725 = vand.u32 %v662, 2147483648
      %v726 = vsel %vm724, %v725, %v723
      %v727 = vrsqrt.pop %v665
      %v728 = vmul.f32 %v665, %v727
      %vm729 = vcmp.eq.f32.partialorder %v665, inf
      %v730 = vsel %vm729, %v665, %v728
      %vm731 = vcmp.eq.f32.partialorder %v665, 0.0
      %v732 = vand.u32 %v665, 2147483648
      %v733 = vsel %vm731, %v732, %v730
      %v734 = vrsqrt.pop %v668
      %v735 = vmul.f32 %v668, %v734
      %vm736 = vcmp.eq.f32.partialorder %v668, inf
      %v737 = vsel %vm736, %v668, %v735
      %vm738 = vcmp.eq.f32.partialorder %v668, 0.0
      %v739 = vand.u32 %v668, 2147483648
      %v740 = vsel %vm738, %v739, %v737
      %v741 = vrsqrt.pop %v671
      %v742 = vmul.f32 %v671, %v741
      %vm743 = vcmp.eq.f32.partialorder %v671, inf
      %v744 = vsel %vm743, %v671, %v742
      %vm745 = vcmp.eq.f32.partialorder %v671, 0.0
      %v746 = vand.u32 %v671, 2147483648
      %v747 = vsel %vm745, %v746, %v744
      %v748 = vrsqrt.pop %v674
      %v749 = vmul.f32 %v674, %v748
      %vm750 = vcmp.eq.f32.partialorder %v674, inf
      %v751 = vsel %vm750, %v674, %v749
      %vm752 = vcmp.eq.f32.partialorder %v674, 0.0
      %v753 = vand.u32 %v674, 2147483648
      %v754 = vsel %vm752, %v753, %v751
      %v755 = vrsqrt.pop %v677
      %v756 = vmul.f32 %v677, %v755
      %vm757 = vcmp.eq.f32.partialorder %v677, inf
      %v758 = vsel %vm757, %v677, %v756
      %vm759 = vcmp.eq.f32.partialorder %v677, 0.0
      %v760 = vand.u32 %v677, 2147483648
      %v761 = vsel %vm759, %v760, %v758
      %v762 = vrsqrt.pop %v680
      %v763 = vmul.f32 %v680, %v762
      %vm764 = vcmp.eq.f32.partialorder %v680, inf
      %v765 = vsel %vm764, %v680, %v763
      %vm766 = vcmp.eq.f32.partialorder %v680, 0.0
      %v767 = vand.u32 %v680, 2147483648
      %v768 = vsel %vm766, %v767, %v765
      %v769 = vrsqrt.pop %v683
      %v770 = vmul.f32 %v683, %v769
      %vm771 = vcmp.eq.f32.partialorder %v683, inf
      %v772 = vsel %vm771, %v683, %v770
      %vm773 = vcmp.eq.f32.partialorder %v683, 0.0
      %v774 = vand.u32 %v683, 2147483648
      %v775 = vsel %vm773, %v774, %v772
      %v776 = vrsqrt.pop %v686
      %v777 = vmul.f32 %v686, %v776
      %vm778 = vcmp.eq.f32.partialorder %v686, inf
      %v779 = vsel %vm778, %v686, %v777
      %vm780 = vcmp.eq.f32.partialorder %v686, 0.0
      %v781 = vand.u32 %v686, 2147483648
      %v782 = vsel %vm780, %v781, %v779
      %v783 = vrsqrt.pop %v689
      %v784 = vmul.f32 %v689, %v783
      %vm785 = vcmp.eq.f32.partialorder %v689, inf
      %v786 = vsel %vm785, %v689, %v784
      %vm787 = vcmp.eq.f32.partialorder %v689, 0.0
      %v788 = vand.u32 %v689, 2147483648
      %v789 = vsel %vm787, %v788, %v786
      %v790 = vrsqrt.pop %v692
      %v791 = vmul.f32 %v692, %v790
      %vm792 = vcmp.eq.f32.partialorder %v692, inf
      %v793 = vsel %vm792, %v692, %v791
      %vm794 = vcmp.eq.f32.partialorder %v692, 0.0
      %v795 = vand.u32 %v692, 2147483648
      %v796 = vsel %vm794, %v795, %v793
      %v797 = vrsqrt.pop %v695
      %v798 = vmul.f32 %v695, %v797
      %vm799 = vcmp.eq.f32.partialorder %v695, inf
      %v800 = vsel %vm799, %v695, %v798
      %vm801 = vcmp.eq.f32.partialorder %v695, 0.0
      %v802 = vand.u32 %v695, 2147483648
      %v803 = vsel %vm801, %v802, %v800
      %v804 = vrsqrt.pop %v698
      %v805 = vmul.f32 %v698, %v804
      %vm806 = vcmp.eq.f32.partialorder %v698, inf
      %v807 = vsel %vm806, %v698, %v805
      %vm808 = vcmp.eq.f32.partialorder %v698, 0.0
      %v809 = vand.u32 %v698, 2147483648
      %v810 = vsel %vm808, %v809, %v807
      %827 = vrot.lane.b32.xlu0 %v618, 1
      %v828 = vpop.permute.xlu0 %827
      %829 = vrot.lane.b32.xlu0 %v619, 1
      %v830 = vpop.permute.xlu0 %829
      %831 = vrot.lane.b32.xlu0 %v620, 1
      %v832 = vpop.permute.xlu0 %831
      %833 = vrot.lane.b32.xlu0 %v621, 1
      %v834 = vpop.permute.xlu0 %833
      %835 = vrot.lane.b32.xlu0 %v622, 1
      %v836 = vpop.permute.xlu0 %835
      %837 = vrot.lane.b32.xlu0 %v623, 1
      %v838 = vpop.permute.xlu0 %837
      %839 = vrot.lane.b32.xlu0 %v624, 1
      %v840 = vpop.permute.xlu0 %839
      %841 = vrot.lane.b32.xlu0 %v625, 1
      %v842 = vpop.permute.xlu0 %841
      %843 = vrot.lane.b32.xlu0 %v626, 1
      %v844 = vpop.permute.xlu0 %843
      %845 = vrot.lane.b32.xlu0 %v627, 1
      %v846 = vpop.permute.xlu0 %845
      %847 = vrot.lane.b32.xlu0 %v628, 1
      %v848 = vpop.permute.xlu0 %847
      %849 = vrot.lane.b32.xlu0 %v629, 1
      %v850 = vpop.permute.xlu0 %849
      %851 = vrot.lane.b32.xlu0 %v630, 1
      %v852 = vpop.permute.xlu0 %851
      %853 = vrot.lane.b32.xlu0 %v631, 1
      %v854 = vpop.permute.xlu0 %853
      %855 = vrot.lane.b32.xlu0 %v632, 1
      %v856 = vpop.permute.xlu0 %855
      %857 = vrot.lane.b32.xlu0 %v633, 1
      %v858 = vpop.permute.xlu0 %857
      %875 = vrot.lane.b32.xlu0 %v541, 4
      %v876 = vpop.permute.xlu0 %875
      %877 = vrot.lane.b32.xlu0 %v545, 4
      %v878 = vpop.permute.xlu0 %877
      %879 = vrot.lane.b32.xlu0 %v549, 4
      %v880 = vpop.permute.xlu0 %879
      %881 = vrot.lane.b32.xlu0 %v553, 4
      %v882 = vpop.permute.xlu0 %881
      %883 = vrot.lane.b32.xlu0 %v557, 4
      %v884 = vpop.permute.xlu0 %883
      %885 = vrot.lane.b32.xlu0 %v561, 4
      %v886 = vpop.permute.xlu0 %885
      %887 = vrot.lane.b32.xlu0 %v565, 4
      %v888 = vpop.permute.xlu0 %887
      %889 = vrot.lane.b32.xlu0 %v569, 4
      %v890 = vpop.permute.xlu0 %889
      %891 = vrot.lane.b32.xlu0 %v573, 4
      %v892 = vpop.permute.xlu0 %891
      %893 = vrot.lane.b32.xlu0 %v577, 4
      %v894 = vpop.permute.xlu0 %893
      %895 = vrot.lane.b32.xlu0 %v581, 4
      %v896 = vpop.permute.xlu0 %895
      %897 = vrot.lane.b32.xlu0 %v585, 4
      %v898 = vpop.permute.xlu0 %897
      %899 = vrot.lane.b32.xlu0 %v589, 4
      %v900 = vpop.permute.xlu0 %899
      %901 = vrot.lane.b32.xlu0 %v593, 4
      %v902 = vpop.permute.xlu0 %901
      %903 = vrot.lane.b32.xlu0 %v597, 4
      %v904 = vpop.permute.xlu0 %903
      %905 = vrot.lane.b32.xlu0 %v601, 4
      %v906 = vpop.permute.xlu0 %905
      %939 = vrot.lane.b32.xlu0 %v417, 7
      %v940 = vpop.permute.xlu0 %939
      %941 = vrot.lane.b32.xlu0 %v418, 7
      %v942 = vpop.permute.xlu0 %941
      %943 = vrot.lane.b32.xlu0 %v419, 7
      %v944 = vpop.permute.xlu0 %943
      %945 = vrot.lane.b32.xlu0 %v420, 7
      %v946 = vpop.permute.xlu0 %945
      %947 = vrot.lane.b32.xlu0 %v421, 7
      %v948 = vpop.permute.xlu0 %947
      %949 = vrot.lane.b32.xlu0 %v422, 7
      %v950 = vpop.permute.xlu0 %949
      %951 = vrot.lane.b32.xlu0 %v423, 7
      %v952 = vpop.permute.xlu0 %951
      %953 = vrot.lane.b32.xlu0 %v424, 7
      %v954 = vpop.permute.xlu0 %953
      %955 = vrot.lane.b32.xlu0 %v425, 7
      %v956 = vpop.permute.xlu0 %955
      %957 = vrot.lane.b32.xlu0 %v426, 7
      %v958 = vpop.permute.xlu0 %957
      %959 = vrot.lane.b32.xlu0 %v427, 7
      %v960 = vpop.permute.xlu0 %959
      %961 = vrot.lane.b32.xlu0 %v428, 7
      %v962 = vpop.permute.xlu0 %961
      %963 = vrot.lane.b32.xlu0 %v429, 7
      %v964 = vpop.permute.xlu0 %963
      %965 = vrot.lane.b32.xlu0 %v430, 7
      %v966 = vpop.permute.xlu0 %965
      %967 = vrot.lane.b32.xlu0 %v431, 7
      %v968 = vpop.permute.xlu0 %967
      %969 = vrot.lane.b32.xlu0 %v432, 7
      %v970 = vpop.permute.xlu0 %969
      %vm987 = vcmask 7168
      %v988 = vsel %vm987, %v705, %v828
      %v989 = vsel %vm987, %v712, %v830
      %v990 = vsel %vm987, %v719, %v832
      %v991 = vsel %vm987, %v726, %v834
      %v992 = vsel %vm987, %v733, %v836
      %v993 = vsel %vm987, %v740, %v838
      %v994 = vsel %vm987, %v747, %v840
      %v995 = vsel %vm987, %v754, %v842
      %v996 = vsel %vm987, %v761, %v844
      %v997 = vsel %vm987, %v768, %v846
      %v998 = vsel %vm987, %v775, %v848
      %v999 = vsel %vm987, %v782, %v850
      %v1000 = vsel %vm987, %v789, %v852
      %v1001 = vsel %vm987, %v796, %v854
      %v1002 = vsel %vm987, %v803, %v856
      %v1003 = vsel %vm987, %v810, %v858
      %vm1004 = vcmask 31744
      %v1005 = vsel %vm1004, %v988, %v876
      %v1006 = vsel %vm1004, %v989, %v878
      %v1007 = vsel %vm1004, %v990, %v880
      %v1008 = vsel %vm1004, %v991, %v882
      %v1009 = vsel %vm1004, %v992, %v884
      %v1010 = vsel %vm1004, %v993, %v886
      %v1011 = vsel %vm1004, %v994, %v888
      %v1012 = vsel %vm1004, %v995, %v890
      %v1013 = vsel %vm1004, %v996, %v892
      %v1014 = vsel %vm1004, %v997, %v894
      %v1015 = vsel %vm1004, %v998, %v896
      %v1016 = vsel %vm1004, %v999, %v898
      %v1017 = vsel %vm1004, %v1000, %v900
      %v1018 = vsel %vm1004, %v1001, %v902
      %v1019 = vsel %vm1004, %v1002, %v904
      %v1020 = vsel %vm1004, %v1003, %v906
      %vm1021 = vcmask 56320
      %v1022 = vsel %vm1021, %v1005, %v940
      %v1023 = vsel %vm1021, %v1006, %v942
      %v1024 = vsel %vm1021, %v1007, %v944
      %v1025 = vsel %vm1021, %v1008, %v946
      %v1026 = vsel %vm1021, %v1009, %v948
      %v1027 = vsel %vm1021, %v1010, %v950
      %v1028 = vsel %vm1021, %v1011, %v952
      %v1029 = vsel %vm1021, %v1012, %v954
      %v1030 = vsel %vm1021, %v1013, %v956
      %v1031 = vsel %vm1021, %v1014, %v958
      %v1032 = vsel %vm1021, %v1015, %v960
      %v1033 = vsel %vm1021, %v1016, %v962
      %v1034 = vsel %vm1021, %v1017, %v964
      %v1035 = vsel %vm1021, %v1018, %v966
      %v1036 = vsel %vm1021, %v1019, %v968
      %v1037 = vsel %vm1021, %v1020, %v970
      %v1039 = vlaneseq
      %v1040 = vshrl.u32 %v1039, 7
      %v1041 = vsub.s32 0, %v1040
      %v1042 = vrot.slane %v437, %v1041
      %vm1044 = vcmask 80896
      %v1046 = vsel %vm1044, %v1022, 0
      %v1049 = vsel %vm1044, %v1023, 0
      %v1052 = vsel %vm1044, %v1024, 0
      %v1055 = vsel %vm1044, %v1025, 0
      %v1058 = vsel %vm1044, %v1026, 0
      %v1061 = vsel %vm1044, %v1027, 0
      %v1064 = vsel %vm1044, %v1028, 0
      %v1067 = vsel %vm1044, %v1029, 0
      %v1070 = vsel %vm1044, %v1030, 0
      %v1073 = vsel %vm1044, %v1031, 0
      %v1076 = vsel %vm1044, %v1032, 0
      %v1079 = vsel %vm1044, %v1033, 0
      %v1082 = vsel %vm1044, %v1034, 0
      %v1085 = vsel %vm1044, %v1035, 0
      %v1088 = vsel %vm1044, %v1036, 0
      %v1091 = vsel %vm1044, %v1037, 0
      %vm1093 = vcmask 1041408
      %v1095 = vsel %vm1093, %v436, 0
      %1097 = vmatprep.subr.mxu0 0.0
      %1098 = vmatpush1.msra.mxu0 0.0
      %1099 = vmatprep.subr.mxu0 0.0
      %1100 = vmatpush1.msra.mxu0 0.0
      %1101 = vmatprep.subr.mxu0 0.0
      %1102 = vmatpush1.msra.mxu0 0.0
      %1103 = vmatprep.subr.mxu0 0.0
      %1104 = vmatpush1.msra.mxu0 0.0
      %1105 = vmatprep.subr.mxu0 0.0
      %1106 = vmatpush1.msra.mxu0 0.0
      %1107 = vmatprep.subr.mxu0 0.0
      %1108 = vmatpush1.msra.mxu0 0.0
      %1109 = vmatprep.subr.mxu0 0.0
      %1110 = vmatpush1.msra.mxu0 0.0
      %1111 = vmatprep.subr.mxu0 0.0
      %1112 = vmatpush1.msra.mxu0 0.0
      %1113 = vmatprep.subr.mxu0 0.0
      %1114 = vmatpush1.msra.mxu0 0.0
      %1115 = vmatprep.subr.mxu0 0.0
      %1116 = vmatpush1.msra.mxu0 0.0
      %1117 = vmatprep.subr.mxu0 0.0
      %1118 = vmatpush1.msra.mxu0 0.0
      %1119 = vmatprep.subr.mxu0 0.0
      %1120 = vmatpush1.msra.mxu0 0.0
      %1121 = vmatprep.subr.mxu0 0.0
      %1122 = vmatpush1.msra.mxu0 0.0
      %1123 = vmatprep.subr.mxu0 0.0
      %1124 = vmatpush1.msra.mxu0 0.0
      %1125 = vmatprep.subr.mxu0 0.0
      %1126 = vmatpush1.msra.mxu0 %v1095
      %1127 = vmatprep.subr.mxu0 0.0
      %1128 = vmatpush1.msra.mxu0 %v435
      %1129 = vmatprep.subr.mxu0 0.0
      %1130 = vmatpush2.msra.mxu0 0.0
      %1131 = vmatprep.subr.mxu0 0.0
      %1132 = vmatpush2.msra.mxu0 0.0
      %1133 = vmatprep.subr.mxu0 0.0
      %1134 = vmatpush2.msra.mxu0 0.0
      %1135 = vmatprep.subr.mxu0 0.0
      %1136 = vmatpush2.msra.mxu0 0.0
      %1137 = vmatprep.subr.mxu0 0.0
      %1138 = vmatpush2.msra.mxu0 0.0
      %1139 = vmatprep.subr.mxu0 0.0
      %1140 = vmatpush2.msra.mxu0 0.0
      %1141 = vmatprep.subr.mxu0 0.0
      %1142 = vmatpush2.msra.mxu0 0.0
      %1143 = vmatprep.subr.mxu0 0.0
      %1144 = vmatpush2.msra.mxu0 0.0
      %1145 = vmatprep.subr.mxu0 0.0
      %1146 = vmatpush2.msra.mxu0 0.0
      %1147 = vmatprep.subr.mxu0 0.0
      %1148 = vmatpush2.msra.mxu0 0.0
      %1149 = vmatprep.subr.mxu0 0.0
      %1150 = vmatpush2.msra.mxu0 0.0
      %1151 = vmatprep.subr.mxu0 0.0
      %1152 = vmatpush2.msra.mxu0 0.0
      %1153 = vmatprep.subr.mxu0 0.0
      %1154 = vmatpush2.msra.mxu0 0.0
      %1155 = vmatprep.subr.mxu0 0.0
      %1156 = vmatpush2.msra.mxu0 0.0
      %1157 = vmatprep.subr.mxu0 0.0
      %1158 = vmatpush2.msra.mxu0 0.0
      %1159 = vmatprep.subr.mxu0 0.0
      %1160 = vmatpush2.msra.mxu0 0.0
      %1161 = vmatprep.mubr.f32.mxu0 0.0
      %1162 = vmatmul.mubr.f32.gmra.mxu0 %v1046
      %v1163 = vpop.f32.mrf.mxu0
      %v1164 = vadd.f32 %v1042, %v1163
      %v1165 = vpop.f32.mrf.mxu0
      %1166 = vmatprep.mubr.f32.mxu0 0.0
      %1167 = vmatmul.mubr.f32.gmra.mxu0 %v1049
      %v1168 = vpop.f32.mrf.mxu0
      %v1169 = vadd.f32 %v1042, %v1168
      %v1170 = vpop.f32.mrf.mxu0
      %1171 = vmatprep.mubr.f32.mxu0 0.0
      %1172 = vmatmul.mubr.f32.gmra.mxu0 %v1052
      %v1173 = vpop.f32.mrf.mxu0
      %v1174 = vadd.f32 %v1042, %v1173
      %v1175 = vpop.f32.mrf.mxu0
      %1176 = vmatprep.mubr.f32.mxu0 0.0
      %1177 = vmatmul.mubr.f32.gmra.mxu0 %v1055
      %v1178 = vpop.f32.mrf.mxu0
      %v1179 = vadd.f32 %v1042, %v1178
      %v1180 = vpop.f32.mrf.mxu0
      %1181 = vmatprep.mubr.f32.mxu0 0.0
      %1182 = vmatmul.mubr.f32.gmra.mxu0 %v1058
      %v1183 = vpop.f32.mrf.mxu0
      %v1184 = vadd.f32 %v1042, %v1183
      %v1185 = vpop.f32.mrf.mxu0
      %1186 = vmatprep.mubr.f32.mxu0 0.0
      %1187 = vmatmul.mubr.f32.gmra.mxu0 %v1061
      %v1188 = vpop.f32.mrf.mxu0
      %v1189 = vadd.f32 %v1042, %v1188
      %v1190 = vpop.f32.mrf.mxu0
      %1191 = vmatprep.mubr.f32.mxu0 0.0
      %1192 = vmatmul.mubr.f32.gmra.mxu0 %v1064
      %v1193 = vpop.f32.mrf.mxu0
      %v1194 = vadd.f32 %v1042, %v1193
      %v1195 = vpop.f32.mrf.mxu0
      %1196 = vmatprep.mubr.f32.mxu0 0.0
      %1197 = vmatmul.mubr.f32.gmra.mxu0 %v1067
      %v1198 = vpop.f32.mrf.mxu0
      %v1199 = vadd.f32 %v1042, %v1198
      %v1200 = vpop.f32.mrf.mxu0
      %1201 = vmatprep.mubr.f32.mxu0 0.0
      %1202 = vmatmul.mubr.f32.gmra.mxu0 %v1070
      %v1203 = vpop.f32.mrf.mxu0
      %v1204 = vadd.f32 %v1042, %v1203
      %v1205 = vpop.f32.mrf.mxu0
      %1206 = vmatprep.mubr.f32.mxu0 0.0
      %1207 = vmatmul.mubr.f32.gmra.mxu0 %v1073
      %v1208 = vpop.f32.mrf.mxu0
      %v1209 = vadd.f32 %v1042, %v1208
      %v1210 = vpop.f32.mrf.mxu0
      %1211 = vmatprep.mubr.f32.mxu0 0.0
      %1212 = vmatmul.mubr.f32.gmra.mxu0 %v1076
      %v1213 = vpop.f32.mrf.mxu0
      %v1214 = vadd.f32 %v1042, %v1213
      %v1215 = vpop.f32.mrf.mxu0
      %1216 = vmatprep.mubr.f32.mxu0 0.0
      %1217 = vmatmul.mubr.f32.gmra.mxu0 %v1079
      %v1218 = vpop.f32.mrf.mxu0
      %v1219 = vadd.f32 %v1042, %v1218
      %v1220 = vpop.f32.mrf.mxu0
      %1221 = vmatprep.mubr.f32.mxu0 0.0
      %1222 = vmatmul.mubr.f32.gmra.mxu0 %v1082
      %v1223 = vpop.f32.mrf.mxu0
      %v1224 = vadd.f32 %v1042, %v1223
      %v1225 = vpop.f32.mrf.mxu0
      %1226 = vmatprep.mubr.f32.mxu0 0.0
      %1227 = vmatmul.mubr.f32.gmra.mxu0 %v1085
      %v1228 = vpop.f32.mrf.mxu0
      %v1229 = vadd.f32 %v1042, %v1228
      %v1230 = vpop.f32.mrf.mxu0
      %1231 = vmatprep.mubr.f32.mxu0 0.0
      %1232 = vmatmul.mubr.f32.gmra.mxu0 %v1088
      %v1233 = vpop.f32.mrf.mxu0
      %v1234 = vadd.f32 %v1042, %v1233
      %v1235 = vpop.f32.mrf.mxu0
      %1236 = vmatprep.mubr.f32.mxu0 0.0
      %1237 = vmatmul.mubr.f32.gmra.mxu0 %v1091
      %v1238 = vpop.f32.mrf.mxu0
      %v1239 = vadd.f32 %v1042, %v1238
      %v1240 = vpop.f32.mrf.mxu0
      %1241 = vdwg.mxu0
      %v1242 = vmax.f32 %v1164, 0.0
      %v1243 = vmax.f32 %v1169, 0.0
      %v1244 = vmax.f32 %v1174, 0.0
      %v1245 = vmax.f32 %v1179, 0.0
      %v1246 = vmax.f32 %v1184, 0.0
      %v1247 = vmax.f32 %v1189, 0.0
      %v1248 = vmax.f32 %v1194, 0.0
      %v1249 = vmax.f32 %v1199, 0.0
      %v1250 = vmax.f32 %v1204, 0.0
      %v1251 = vmax.f32 %v1209, 0.0
      %v1252 = vmax.f32 %v1214, 0.0
      %v1253 = vmax.f32 %v1219, 0.0
      %v1254 = vmax.f32 %v1224, 0.0
      %v1255 = vmax.f32 %v1229, 0.0
      %v1256 = vmax.f32 %v1234, 0.0
      %v1257 = vmax.f32 %v1239, 0.0
      %v1258 = vld [vmem:[%s405] sm:$0xff]
      %v1259 = vld [vmem:[%s405 + $0x8] sm:$0xff]
      %v1260 = vld [vmem:[%s405 + $0x10] sm:$0xff]
      %v1261 = vld [vmem:[%s405 + $0x18] sm:$0xff]
      %v1262 = vld [vmem:[%s405 + $0x20] sm:$0xff]
      %v1263 = vld [vmem:[%s405 + $0x28] sm:$0xff]
      %v1264 = vld [vmem:[%s405 + $0x30] sm:$0xff]
      %v1265 = vld [vmem:[%s405 + $0x38] sm:$0xff]
      %v1266 = vld [vmem:[%s405 + $0x40] sm:$0xff]
      %v1267 = vld [vmem:[%s405 + $0x48] sm:$0xff]
      %v1268 = vld [vmem:[%s405 + $0x50] sm:$0xff]
      %v1269 = vld [vmem:[%s405 + $0x58] sm:$0xff]
      %v1270 = vld [vmem:[%s405 + $0x60] sm:$0xff]
      %v1271 = vld [vmem:[%s405 + $0x68] sm:$0xff]
      %v1272 = vld [vmem:[%s405 + $0x70] sm:$0xff]
      %v1273 = vld [vmem:[%s405 + $0x78] sm:$0xff]
      %v1274 = vld [vmem:[%s5] sm:$0xff]
      %v1275 = vld [vmem:[%s5 + $0x8] sm:$0xff]
      %v1276 = vld [vmem:[%s5 + $0x10] sm:$0xff]
      %v1277 = vld [vmem:[%s5 + $0x18] sm:$0xff]
      %v1278 = vld [vmem:[%s5 + $0x20] sm:$0xff]
      %v1279 = vld [vmem:[%s5 + $0x28] sm:$0xff]
      %v1280 = vld [vmem:[%s5 + $0x30] sm:$0xff]
      %v1281 = vld [vmem:[%s5 + $0x38] sm:$0xff]
      %v1282 = vld [vmem:[%s6] sm:$0xff]
      %v1283 = vld [vmem:[%s6 + $0x8] sm:$0xff]
      %v1284 = vld [vmem:[%s6 + $0x10] sm:$0xff]
      %v1285 = vld [vmem:[%s6 + $0x18] sm:$0xff]
      %v1286 = vld [vmem:[%s7] sm:$0x1]
      %vm1287 = vcmask 130048
      %v1289 = vsel %vm1287, %v1242, 0
      %v1292 = vsel %vm1287, %v1243, 0
      %v1295 = vsel %vm1287, %v1244, 0
      %v1298 = vsel %vm1287, %v1245, 0
      %v1301 = vsel %vm1287, %v1246, 0
      %v1304 = vsel %vm1287, %v1247, 0
      %v1307 = vsel %vm1287, %v1248, 0
      %v1310 = vsel %vm1287, %v1249, 0
      %v1313 = vsel %vm1287, %v1250, 0
      %v1316 = vsel %vm1287, %v1251, 0
      %v1319 = vsel %vm1287, %v1252, 0
      %v1322 = vsel %vm1287, %v1253, 0
      %v1325 = vsel %vm1287, %v1254, 0
      %v1328 = vsel %vm1287, %v1255, 0
      %v1331 = vsel %vm1287, %v1256, 0
      %v1334 = vsel %vm1287, %v1257, 0
      %1336 = vmatprep.subr.mxu0 0.0
      %1337 = vmatpush1.msra.mxu0 0.0
      %1338 = vmatprep.subr.mxu0 0.0
      %1339 = vmatpush1.msra.mxu0 0.0
      %1340 = vmatprep.subr.mxu0 0.0
      %1341 = vmatpush1.msra.mxu0 0.0
      %1342 = vmatprep.subr.mxu0 0.0
      %1343 = vmatpush1.msra.mxu0 0.0
      %1344 = vmatprep.subr.mxu0 0.0
      %1345 = vmatpush1.msra.mxu0 0.0
      %1346 = vmatprep.subr.mxu0 0.0
      %1347 = vmatpush1.msra.mxu0 0.0
      %1348 = vmatprep.subr.mxu0 0.0
      %1349 = vmatpush1.msra.mxu0 0.0
      %1350 = vmatprep.subr.mxu0 0.0
      %1351 = vmatpush1.msra.mxu0 0.0
      %1352 = vmatprep.subr.mxu0 0.0
      %1353 = vmatpush1.msra.mxu0 0.0
      %1354 = vmatprep.subr.mxu0 0.0
      %1355 = vmatpush1.msra.mxu0 0.0
      %1356 = vmatprep.subr.mxu0 0.0
      %1357 = vmatpush1.msra.mxu0 0.0
      %1358 = vmatprep.subr.mxu0 0.0
      %1359 = vmatpush1.msra.mxu0 0.0
      %1360 = vmatprep.subr.mxu0 0.0
      %1361 = vmatpush1.msra.mxu0 0.0
      %1362 = vmatprep.subr.mxu0 0.0
      %1363 = vmatpush1.msra.mxu0 0.0
      %1364 = vmatprep.subr.mxu0 0.0
      %1365 = vmatpush1.msra.mxu0 %v1277
      %1366 = vmatprep.subr.mxu0 0.0
      %1367 = vmatpush1.msra.mxu0 %v1276
      %1368 = vmatprep.subr.mxu0 0.0
      %1369 = vmatpush2.msra.mxu0 0.0
      %1370 = vmatprep.subr.mxu0 0.0
      %1371 = vmatpush2.msra.mxu0 0.0
      %1372 = vmatprep.subr.mxu0 0.0
      %1373 = vmatpush2.msra.mxu0 0.0
      %1374 = vmatprep.subr.mxu0 0.0
      %1375 = vmatpush2.msra.mxu0 0.0
      %1376 = vmatprep.subr.mxu0 0.0
      %1377 = vmatpush2.msra.mxu0 0.0
      %1378 = vmatprep.subr.mxu0 0.0
      %1379 = vmatpush2.msra.mxu0 0.0
      %1380 = vmatprep.subr.mxu0 0.0
      %1381 = vmatpush2.msra.mxu0 0.0
      %1382 = vmatprep.subr.mxu0 0.0
      %1383 = vmatpush2.msra.mxu0 0.0
      %1384 = vmatprep.subr.mxu0 0.0
      %1385 = vmatpush2.msra.mxu0 0.0
      %1386 = vmatprep.subr.mxu0 0.0
      %1387 = vmatpush2.msra.mxu0 0.0
      %1388 = vmatprep.subr.mxu0 0.0
      %1389 = vmatpush2.msra.mxu0 0.0
      %1390 = vmatprep.subr.mxu0 0.0
      %1391 = vmatpush2.msra.mxu0 0.0
      %1392 = vmatprep.subr.mxu0 0.0
      %1393 = vmatpush2.msra.mxu0 0.0
      %1394 = vmatprep.subr.mxu0 0.0
      %1395 = vmatpush2.msra.mxu0 0.0
      %1396 = vmatprep.subr.mxu0 0.0
      %1397 = vmatpush2.msra.mxu0 0.0
      %1398 = vmatprep.subr.mxu0 0.0
      %1399 = vmatpush2.msra.mxu0 0.0
      %1400 = vmatprep.mubr.f32.mxu0 0.0
      %1401 = vmatmul.mubr.f32.gmra.mxu0 %v1289
      %v1402 = vpop.f32.mrf.mxu0
      %v1403 = vadd.f32 0.0, %v1402
      %v1404 = vpop.f32.mrf.mxu0
      %1405 = vmatprep.mubr.f32.mxu0 0.0
      %1406 = vmatmul.mubr.f32.gmra.mxu0 %v1292
      %v1407 = vpop.f32.mrf.mxu0
      %v1408 = vadd.f32 0.0, %v1407
      %v1409 = vpop.f32.mrf.mxu0
      %1410 = vmatprep.mubr.f32.mxu0 0.0
      %1411 = vmatmul.mubr.f32.gmra.mxu0 %v1295
      %v1412 = vpop.f32.mrf.mxu0
      %v1413 = vadd.f32 0.0, %v1412
      %v1414 = vpop.f32.mrf.mxu0
      %1415 = vmatprep.mubr.f32.mxu0 0.0
      %1416 = vmatmul.mubr.f32.gmra.mxu0 %v1298
      %v1417 = vpop.f32.mrf.mxu0
      %v1418 = vadd.f32 0.0, %v1417
      %v1419 = vpop.f32.mrf.mxu0
      %1420 = vmatprep.mubr.f32.mxu0 0.0
      %1421 = vmatmul.mubr.f32.gmra.mxu0 %v1301
      %v1422 = vpop.f32.mrf.mxu0
      %v1423 = vadd.f32 0.0, %v1422
      %v1424 = vpop.f32.mrf.mxu0
      %1425 = vmatprep.mubr.f32.mxu0 0.0
      %1426 = vmatmul.mubr.f32.gmra.mxu0 %v1304
      %v1427 = vpop.f32.mrf.mxu0
      %v1428 = vadd.f32 0.0, %v1427
      %v1429 = vpop.f32.mrf.mxu0
      %1430 = vmatprep.mubr.f32.mxu0 0.0
      %1431 = vmatmul.mubr.f32.gmra.mxu0 %v1307
      %v1432 = vpop.f32.mrf.mxu0
      %v1433 = vadd.f32 0.0, %v1432
      %v1434 = vpop.f32.mrf.mxu0
      %1435 = vmatprep.mubr.f32.mxu0 0.0
      %1436 = vmatmul.mubr.f32.gmra.mxu0 %v1310
      %v1437 = vpop.f32.mrf.mxu0
      %v1438 = vadd.f32 0.0, %v1437
      %v1439 = vpop.f32.mrf.mxu0
      %1440 = vmatprep.mubr.f32.mxu0 0.0
      %1441 = vmatmul.mubr.f32.gmra.mxu0 %v1313
      %v1442 = vpop.f32.mrf.mxu0
      %v1443 = vadd.f32 0.0, %v1442
      %v1444 = vpop.f32.mrf.mxu0
      %1445 = vmatprep.mubr.f32.mxu0 0.0
      %1446 = vmatmul.mubr.f32.gmra.mxu0 %v1316
      %v1447 = vpop.f32.mrf.mxu0
      %v1448 = vadd.f32 0.0, %v1447
      %v1449 = vpop.f32.mrf.mxu0
      %1450 = vmatprep.mubr.f32.mxu0 0.0
      %1451 = vmatmul.mubr.f32.gmra.mxu0 %v1319
      %v1452 = vpop.f32.mrf.mxu0
      %v1453 = vadd.f32 0.0, %v1452
      %v1454 = vpop.f32.mrf.mxu0
      %1455 = vmatprep.mubr.f32.mxu0 0.0
      %1456 = vmatmul.mubr.f32.gmra.mxu0 %v1322
      %v1457 = vpop.f32.mrf.mxu0
      %v1458 = vadd.f32 0.0, %v1457
      %v1459 = vpop.f32.mrf.mxu0
      %1460 = vmatprep.mubr.f32.mxu0 0.0
      %1461 = vmatmul.mubr.f32.gmra.mxu0 %v1325
      %v1462 = vpop.f32.mrf.mxu0
      %v1463 = vadd.f32 0.0, %v1462
      %v1464 = vpop.f32.mrf.mxu0
      %1465 = vmatprep.mubr.f32.mxu0 0.0
      %1466 = vmatmul.mubr.f32.gmra.mxu0 %v1328
      %v1467 = vpop.f32.mrf.mxu0
      %v1468 = vadd.f32 0.0, %v1467
      %v1469 = vpop.f32.mrf.mxu0
      %1470 = vmatprep.mubr.f32.mxu0 0.0
      %1471 = vmatmul.mubr.f32.gmra.mxu0 %v1331
      %v1472 = vpop.f32.mrf.mxu0
      %v1473 = vadd.f32 0.0, %v1472
      %v1474 = vpop.f32.mrf.mxu0
      %1475 = vmatprep.mubr.f32.mxu0 0.0
      %1476 = vmatmul.mubr.f32.gmra.mxu0 %v1334
      %v1477 = vpop.f32.mrf.mxu0
      %v1478 = vadd.f32 0.0, %v1477
      %v1479 = vpop.f32.mrf.mxu0
      %1480 = vdwg.mxu0
      %v1482 = vsel %vm1287, %v1258, 0
      %v1485 = vsel %vm1287, %v1259, 0
      %v1488 = vsel %vm1287, %v1260, 0
      %v1491 = vsel %vm1287, %v1261, 0
      %v1494 = vsel %vm1287, %v1262, 0
      %v1497 = vsel %vm1287, %v1263, 0
      %v1500 = vsel %vm1287, %v1264, 0
      %v1503 = vsel %vm1287, %v1265, 0
      %v1506 = vsel %vm1287, %v1266, 0
      %v1509 = vsel %vm1287, %v1267, 0
      %v1512 = vsel %vm1287, %v1268, 0
      %v1515 = vsel %vm1287, %v1269, 0
      %v1518 = vsel %vm1287, %v1270, 0
      %v1521 = vsel %vm1287, %v1271, 0
      %v1524 = vsel %vm1287, %v1272, 0
      %v1527 = vsel %vm1287, %v1273, 0
      %1529 = vmatprep.subr.mxu0 0.0
      %1530 = vmatpush1.msra.mxu0 0.0
      %1531 = vmatprep.subr.mxu0 0.0
      %1532 = vmatpush1.msra.mxu0 0.0
      %1533 = vmatprep.subr.mxu0 0.0
      %1534 = vmatpush1.msra.mxu0 0.0
      %1535 = vmatprep.subr.mxu0 0.0
      %1536 = vmatpush1.msra.mxu0 0.0
      %1537 = vmatprep.subr.mxu0 0.0
      %1538 = vmatpush1.msra.mxu0 0.0
      %1539 = vmatprep.subr.mxu0 0.0
      %1540 = vmatpush1.msra.mxu0 0.0
      %1541 = vmatprep.subr.mxu0 0.0
      %1542 = vmatpush1.msra.mxu0 0.0
      %1543 = vmatprep.subr.mxu0 0.0
      %1544 = vmatpush1.msra.mxu0 0.0
      %1545 = vmatprep.subr.mxu0 0.0
      %1546 = vmatpush1.msra.mxu0 0.0
      %1547 = vmatprep.subr.mxu0 0.0
      %1548 = vmatpush1.msra.mxu0 0.0
      %1549 = vmatprep.subr.mxu0 0.0
      %1550 = vmatpush1.msra.mxu0 0.0
      %1551 = vmatprep.subr.mxu0 0.0
      %1552 = vmatpush1.msra.mxu0 0.0
      %1553 = vmatprep.subr.mxu0 0.0
      %1554 = vmatpush1.msra.mxu0 0.0
      %1555 = vmatprep.subr.mxu0 0.0
      %1556 = vmatpush1.msra.mxu0 0.0
      %1557 = vmatprep.subr.mxu0 0.0
      %1558 = vmatpush1.msra.mxu0 %v1275
      %1559 = vmatprep.subr.mxu0 0.0
      %1560 = vmatpush1.msra.mxu0 %v1274
      %1561 = vmatprep.subr.mxu0 0.0
      %1562 = vmatpush2.msra.mxu0 0.0
      %1563 = vmatprep.subr.mxu0 0.0
      %1564 = vmatpush2.msra.mxu0 0.0
      %1565 = vmatprep.subr.mxu0 0.0
      %1566 = vmatpush2.msra.mxu0 0.0
      %1567 = vmatprep.subr.mxu0 0.0
      %1568 = vmatpush2.msra.mxu0 0.0
      %1569 = vmatprep.subr.mxu0 0.0
      %1570 = vmatpush2.msra.mxu0 0.0
      %1571 = vmatprep.subr.mxu0 0.0
      %1572 = vmatpush2.msra.mxu0 0.0
      %1573 = vmatprep.subr.mxu0 0.0
      %1574 = vmatpush2.msra.mxu0 0.0
      %1575 = vmatprep.subr.mxu0 0.0
      %1576 = vmatpush2.msra.mxu0 0.0
      %1577 = vmatprep.subr.mxu0 0.0
      %1578 = vmatpush2.msra.mxu0 0.0
      %1579 = vmatprep.subr.mxu0 0.0
      %1580 = vmatpush2.msra.mxu0 0.0
      %1581 = vmatprep.subr.mxu0 0.0
      %1582 = vmatpush2.msra.mxu0 0.0
      %1583 = vmatprep.subr.mxu0 0.0
      %1584 = vmatpush2.msra.mxu0 0.0
      %1585 = vmatprep.subr.mxu0 0.0
      %1586 = vmatpush2.msra.mxu0 0.0
      %1587 = vmatprep.subr.mxu0 0.0
      %1588 = vmatpush2.msra.mxu0 0.0
      %1589 = vmatprep.subr.mxu0 0.0
      %1590 = vmatpush2.msra.mxu0 0.0
      %1591 = vmatprep.subr.mxu0 0.0
      %1592 = vmatpush2.msra.mxu0 0.0
      %1593 = vmatprep.mubr.f32.mxu0 0.0
      %1594 = vmatmul.mubr.f32.gmra.mxu0 %v1482
      %v1595 = vpop.f32.mrf.mxu0
      %v1596 = vadd.f32 %v1403, %v1595
      %v1597 = vpop.f32.mrf.mxu0
      %1598 = vmatprep.mubr.f32.mxu0 0.0
      %1599 = vmatmul.mubr.f32.gmra.mxu0 %v1485
      %v1600 = vpop.f32.mrf.mxu0
      %v1601 = vadd.f32 %v1408, %v1600
      %v1602 = vpop.f32.mrf.mxu0
      %1603 = vmatprep.mubr.f32.mxu0 0.0
      %1604 = vmatmul.mubr.f32.gmra.mxu0 %v1488
      %v1605 = vpop.f32.mrf.mxu0
      %v1606 = vadd.f32 %v1413, %v1605
      %v1607 = vpop.f32.mrf.mxu0
      %1608 = vmatprep.mubr.f32.mxu0 0.0
      %1609 = vmatmul.mubr.f32.gmra.mxu0 %v1491
      %v1610 = vpop.f32.mrf.mxu0
      %v1611 = vadd.f32 %v1418, %v1610
      %v1612 = vpop.f32.mrf.mxu0
      %1613 = vmatprep.mubr.f32.mxu0 0.0
      %1614 = vmatmul.mubr.f32.gmra.mxu0 %v1494
      %v1615 = vpop.f32.mrf.mxu0
      %v1616 = vadd.f32 %v1423, %v1615
      %v1617 = vpop.f32.mrf.mxu0
      %1618 = vmatprep.mubr.f32.mxu0 0.0
      %1619 = vmatmul.mubr.f32.gmra.mxu0 %v1497
      %v1620 = vpop.f32.mrf.mxu0
      %v1621 = vadd.f32 %v1428, %v1620
      %v1622 = vpop.f32.mrf.mxu0
      %1623 = vmatprep.mubr.f32.mxu0 0.0
      %1624 = vmatmul.mubr.f32.gmra.mxu0 %v1500
      %v1625 = vpop.f32.mrf.mxu0
      %v1626 = vadd.f32 %v1433, %v1625
      %v1627 = vpop.f32.mrf.mxu0
      %1628 = vmatprep.mubr.f32.mxu0 0.0
      %1629 = vmatmul.mubr.f32.gmra.mxu0 %v1503
      %v1630 = vpop.f32.mrf.mxu0
      %v1631 = vadd.f32 %v1438, %v1630
      %v1632 = vpop.f32.mrf.mxu0
      %1633 = vmatprep.mubr.f32.mxu0 0.0
      %1634 = vmatmul.mubr.f32.gmra.mxu0 %v1506
      %v1635 = vpop.f32.mrf.mxu0
      %v1636 = vadd.f32 %v1443, %v1635
      %v1637 = vpop.f32.mrf.mxu0
      %1638 = vmatprep.mubr.f32.mxu0 0.0
      %1639 = vmatmul.mubr.f32.gmra.mxu0 %v1509
      %v1640 = vpop.f32.mrf.mxu0
      %v1641 = vadd.f32 %v1448, %v1640
      %v1642 = vpop.f32.mrf.mxu0
      %1643 = vmatprep.mubr.f32.mxu0 0.0
      %1644 = vmatmul.mubr.f32.gmra.mxu0 %v1512
      %v1645 = vpop.f32.mrf.mxu0
      %v1646 = vadd.f32 %v1453, %v1645
      %v1647 = vpop.f32.mrf.mxu0
      %1648 = vmatprep.mubr.f32.mxu0 0.0
      %1649 = vmatmul.mubr.f32.gmra.mxu0 %v1515
      %v1650 = vpop.f32.mrf.mxu0
      %v1651 = vadd.f32 %v1458, %v1650
      %v1652 = vpop.f32.mrf.mxu0
      %1653 = vmatprep.mubr.f32.mxu0 0.0
      %1654 = vmatmul.mubr.f32.gmra.mxu0 %v1518
      %v1655 = vpop.f32.mrf.mxu0
      %v1656 = vadd.f32 %v1463, %v1655
      %v1657 = vpop.f32.mrf.mxu0
      %1658 = vmatprep.mubr.f32.mxu0 0.0
      %1659 = vmatmul.mubr.f32.gmra.mxu0 %v1521
      %v1660 = vpop.f32.mrf.mxu0
      %v1661 = vadd.f32 %v1468, %v1660
      %v1662 = vpop.f32.mrf.mxu0
      %1663 = vmatprep.mubr.f32.mxu0 0.0
      %1664 = vmatmul.mubr.f32.gmra.mxu0 %v1524
      %v1665 = vpop.f32.mrf.mxu0
      %v1666 = vadd.f32 %v1473, %v1665
      %v1667 = vpop.f32.mrf.mxu0
      %1668 = vmatprep.mubr.f32.mxu0 0.0
      %1669 = vmatmul.mubr.f32.gmra.mxu0 %v1527
      %v1670 = vpop.f32.mrf.mxu0
      %v1671 = vadd.f32 %v1478, %v1670
      %v1672 = vpop.f32.mrf.mxu0
      %1673 = vdwg.mxu0
      %1674 = vmatprep.subr.mxu0 0.0
      %1675 = vmatpush1.msra.mxu0 0.0
      %1676 = vmatprep.subr.mxu0 0.0
      %1677 = vmatpush1.msra.mxu0 0.0
      %1678 = vmatprep.subr.mxu0 0.0
      %1679 = vmatpush1.msra.mxu0 0.0
      %1680 = vmatprep.subr.mxu0 0.0
      %1681 = vmatpush1.msra.mxu0 0.0
      %1682 = vmatprep.subr.mxu0 0.0
      %1683 = vmatpush1.msra.mxu0 0.0
      %1684 = vmatprep.subr.mxu0 0.0
      %1685 = vmatpush1.msra.mxu0 0.0
      %1686 = vmatprep.subr.mxu0 0.0
      %1687 = vmatpush1.msra.mxu0 0.0
      %1688 = vmatprep.subr.mxu0 0.0
      %1689 = vmatpush1.msra.mxu0 0.0
      %1690 = vmatprep.subr.mxu0 0.0
      %1691 = vmatpush1.msra.mxu0 0.0
      %1692 = vmatprep.subr.mxu0 0.0
      %1693 = vmatpush1.msra.mxu0 0.0
      %1694 = vmatprep.subr.mxu0 0.0
      %1695 = vmatpush1.msra.mxu0 0.0
      %1696 = vmatprep.subr.mxu0 0.0
      %1697 = vmatpush1.msra.mxu0 0.0
      %1698 = vmatprep.subr.mxu0 0.0
      %1699 = vmatpush1.msra.mxu0 0.0
      %1700 = vmatprep.subr.mxu0 0.0
      %1701 = vmatpush1.msra.mxu0 0.0
      %1702 = vmatprep.subr.mxu0 0.0
      %1703 = vmatpush1.msra.mxu0 %v1281
      %1704 = vmatprep.subr.mxu0 0.0
      %1705 = vmatpush1.msra.mxu0 %v1280
      %1706 = vmatprep.subr.mxu0 0.0
      %1707 = vmatpush2.msra.mxu0 0.0
      %1708 = vmatprep.subr.mxu0 0.0
      %1709 = vmatpush2.msra.mxu0 0.0
      %1710 = vmatprep.subr.mxu0 0.0
      %1711 = vmatpush2.msra.mxu0 0.0
      %1712 = vmatprep.subr.mxu0 0.0
      %1713 = vmatpush2.msra.mxu0 0.0
      %1714 = vmatprep.subr.mxu0 0.0
      %1715 = vmatpush2.msra.mxu0 0.0
      %1716 = vmatprep.subr.mxu0 0.0
      %1717 = vmatpush2.msra.mxu0 0.0
      %1718 = vmatprep.subr.mxu0 0.0
      %1719 = vmatpush2.msra.mxu0 0.0
      %1720 = vmatprep.subr.mxu0 0.0
      %1721 = vmatpush2.msra.mxu0 0.0
      %1722 = vmatprep.subr.mxu0 0.0
      %1723 = vmatpush2.msra.mxu0 0.0
      %1724 = vmatprep.subr.mxu0 0.0
      %1725 = vmatpush2.msra.mxu0 0.0
      %1726 = vmatprep.subr.mxu0 0.0
      %1727 = vmatpush2.msra.mxu0 0.0
      %1728 = vmatprep.subr.mxu0 0.0
      %1729 = vmatpush2.msra.mxu0 0.0
      %1730 = vmatprep.subr.mxu0 0.0
      %1731 = vmatpush2.msra.mxu0 0.0
      %1732 = vmatprep.subr.mxu0 0.0
      %1733 = vmatpush2.msra.mxu0 0.0
      %1734 = vmatprep.subr.mxu0 0.0
      %1735 = vmatpush2.msra.mxu0 0.0
      %1736 = vmatprep.subr.mxu0 0.0
      %1737 = vmatpush2.msra.mxu0 0.0
      %1738 = vmatprep.mubr.f32.mxu0 0.0
      %1739 = vmatmul.mubr.f32.gmra.mxu0 %v1289
      %v1740 = vpop.f32.mrf.mxu0
      %v1741 = vadd.f32 0.0, %v1740
      %v1742 = vpop.f32.mrf.mxu0
      %1743 = vmatprep.mubr.f32.mxu0 0.0
      %1744 = vmatmul.mubr.f32.gmra.mxu0 %v1292
      %v1745 = vpop.f32.mrf.mxu0
      %v1746 = vadd.f32 0.0, %v1745
      %v1747 = vpop.f32.mrf.mxu0
      %1748 = vmatprep.mubr.f32.mxu0 0.0
      %1749 = vmatmul.mubr.f32.gmra.mxu0 %v1295
      %v1750 = vpop.f32.mrf.mxu0
      %v1751 = vadd.f32 0.0, %v1750
      %v1752 = vpop.f32.mrf.mxu0
      %1753 = vmatprep.mubr.f32.mxu0 0.0
      %1754 = vmatmul.mubr.f32.gmra.mxu0 %v1298
      %v1755 = vpop.f32.mrf.mxu0
      %v1756 = vadd.f32 0.0, %v1755
      %v1757 = vpop.f32.mrf.mxu0
      %1758 = vmatprep.mubr.f32.mxu0 0.0
      %1759 = vmatmul.mubr.f32.gmra.mxu0 %v1301
      %v1760 = vpop.f32.mrf.mxu0
      %v1761 = vadd.f32 0.0, %v1760
      %v1762 = vpop.f32.mrf.mxu0
      %1763 = vmatprep.mubr.f32.mxu0 0.0
      %1764 = vmatmul.mubr.f32.gmra.mxu0 %v1304
      %v1765 = vpop.f32.mrf.mxu0
      %v1766 = vadd.f32 0.0, %v1765
      %v1767 = vpop.f32.mrf.mxu0
      %1768 = vmatprep.mubr.f32.mxu0 0.0
      %1769 = vmatmul.mubr.f32.gmra.mxu0 %v1307
      %v1770 = vpop.f32.mrf.mxu0
      %v1771 = vadd.f32 0.0, %v1770
      %v1772 = vpop.f32.mrf.mxu0
      %1773 = vmatprep.mubr.f32.mxu0 0.0
      %1774 = vmatmul.mubr.f32.gmra.mxu0 %v1310
      %v1775 = vpop.f32.mrf.mxu0
      %v1776 = vadd.f32 0.0, %v1775
      %v1777 = vpop.f32.mrf.mxu0
      %1778 = vmatprep.mubr.f32.mxu0 0.0
      %1779 = vmatmul.mubr.f32.gmra.mxu0 %v1313
      %v1780 = vpop.f32.mrf.mxu0
      %v1781 = vadd.f32 0.0, %v1780
      %v1782 = vpop.f32.mrf.mxu0
      %1783 = vmatprep.mubr.f32.mxu0 0.0
      %1784 = vmatmul.mubr.f32.gmra.mxu0 %v1316
      %v1785 = vpop.f32.mrf.mxu0
      %v1786 = vadd.f32 0.0, %v1785
      %v1787 = vpop.f32.mrf.mxu0
      %1788 = vmatprep.mubr.f32.mxu0 0.0
      %1789 = vmatmul.mubr.f32.gmra.mxu0 %v1319
      %v1790 = vpop.f32.mrf.mxu0
      %v1791 = vadd.f32 0.0, %v1790
      %v1792 = vpop.f32.mrf.mxu0
      %1793 = vmatprep.mubr.f32.mxu0 0.0
      %1794 = vmatmul.mubr.f32.gmra.mxu0 %v1322
      %v1795 = vpop.f32.mrf.mxu0
      %v1796 = vadd.f32 0.0, %v1795
      %v1797 = vpop.f32.mrf.mxu0
      %1798 = vmatprep.mubr.f32.mxu0 0.0
      %1799 = vmatmul.mubr.f32.gmra.mxu0 %v1325
      %v1800 = vpop.f32.mrf.mxu0
      %v1801 = vadd.f32 0.0, %v1800
      %v1802 = vpop.f32.mrf.mxu0
      %1803 = vmatprep.mubr.f32.mxu0 0.0
      %1804 = vmatmul.mubr.f32.gmra.mxu0 %v1328
      %v1805 = vpop.f32.mrf.mxu0
      %v1806 = vadd.f32 0.0, %v1805
      %v1807 = vpop.f32.mrf.mxu0
      %1808 = vmatprep.mubr.f32.mxu0 0.0
      %1809 = vmatmul.mubr.f32.gmra.mxu0 %v1331
      %v1810 = vpop.f32.mrf.mxu0
      %v1811 = vadd.f32 0.0, %v1810
      %v1812 = vpop.f32.mrf.mxu0
      %1813 = vmatprep.mubr.f32.mxu0 0.0
      %1814 = vmatmul.mubr.f32.gmra.mxu0 %v1334
      %v1815 = vpop.f32.mrf.mxu0
      %v1816 = vadd.f32 0.0, %v1815
      %v1817 = vpop.f32.mrf.mxu0
      %1818 = vdwg.mxu0
      %1819 = vmatprep.subr.mxu0 0.0
      %1820 = vmatpush1.msra.mxu0 0.0
      %1821 = vmatprep.subr.mxu0 0.0
      %1822 = vmatpush1.msra.mxu0 0.0
      %1823 = vmatprep.subr.mxu0 0.0
      %1824 = vmatpush1.msra.mxu0 0.0
      %1825 = vmatprep.subr.mxu0 0.0
      %1826 = vmatpush1.msra.mxu0 0.0
      %1827 = vmatprep.subr.mxu0 0.0
      %1828 = vmatpush1.msra.mxu0 0.0
      %1829 = vmatprep.subr.mxu0 0.0
      %1830 = vmatpush1.msra.mxu0 0.0
      %1831 = vmatprep.subr.mxu0 0.0
      %1832 = vmatpush1.msra.mxu0 0.0
      %1833 = vmatprep.subr.mxu0 0.0
      %1834 = vmatpush1.msra.mxu0 0.0
      %1835 = vmatprep.subr.mxu0 0.0
      %1836 = vmatpush1.msra.mxu0 0.0
      %1837 = vmatprep.subr.mxu0 0.0
      %1838 = vmatpush1.msra.mxu0 0.0
      %1839 = vmatprep.subr.mxu0 0.0
      %1840 = vmatpush1.msra.mxu0 0.0
      %1841 = vmatprep.subr.mxu0 0.0
      %1842 = vmatpush1.msra.mxu0 0.0
      %1843 = vmatprep.subr.mxu0 0.0
      %1844 = vmatpush1.msra.mxu0 0.0
      %1845 = vmatprep.subr.mxu0 0.0
      %1846 = vmatpush1.msra.mxu0 0.0
      %1847 = vmatprep.subr.mxu0 0.0
      %1848 = vmatpush1.msra.mxu0 %v1279
      %1849 = vmatprep.subr.mxu0 0.0
      %1850 = vmatpush1.msra.mxu0 %v1278
      %1851 = vmatprep.subr.mxu0 0.0
      %1852 = vmatpush2.msra.mxu0 0.0
      %1853 = vmatprep.subr.mxu0 0.0
      %1854 = vmatpush2.msra.mxu0 0.0
      %1855 = vmatprep.subr.mxu0 0.0
      %1856 = vmatpush2.msra.mxu0 0.0
      %1857 = vmatprep.subr.mxu0 0.0
      %1858 = vmatpush2.msra.mxu0 0.0
      %1859 = vmatprep.subr.mxu0 0.0
      %1860 = vmatpush2.msra.mxu0 0.0
      %1861 = vmatprep.subr.mxu0 0.0
      %1862 = vmatpush2.msra.mxu0 0.0
      %1863 = vmatprep.subr.mxu0 0.0
      %1864 = vmatpush2.msra.mxu0 0.0
      %1865 = vmatprep.subr.mxu0 0.0
      %1866 = vmatpush2.msra.mxu0 0.0
      %1867 = vmatprep.subr.mxu0 0.0
      %1868 = vmatpush2.msra.mxu0 0.0
      %1869 = vmatprep.subr.mxu0 0.0
      %1870 = vmatpush2.msra.mxu0 0.0
      %1871 = vmatprep.subr.mxu0 0.0
      %1872 = vmatpush2.msra.mxu0 0.0
      %1873 = vmatprep.subr.mxu0 0.0
      %1874 = vmatpush2.msra.mxu0 0.0
      %1875 = vmatprep.subr.mxu0 0.0
      %1876 = vmatpush2.msra.mxu0 0.0
      %1877 = vmatprep.subr.mxu0 0.0
      %1878 = vmatpush2.msra.mxu0 0.0
      %1879 = vmatprep.subr.mxu0 0.0
      %1880 = vmatpush2.msra.mxu0 0.0
      %1881 = vmatprep.subr.mxu0 0.0
      %1882 = vmatpush2.msra.mxu0 0.0
      %1883 = vmatprep.mubr.f32.mxu0 0.0
      %1884 = vmatmul.mubr.f32.gmra.mxu0 %v1482
      %v1885 = vpop.f32.mrf.mxu0
      %v1886 = vadd.f32 %v1741, %v1885
      %v1887 = vpop.f32.mrf.mxu0
      %1888 = vmatprep.mubr.f32.mxu0 0.0
      %1889 = vmatmul.mubr.f32.gmra.mxu0 %v1485
      %v1890 = vpop.f32.mrf.mxu0
      %v1891 = vadd.f32 %v1746, %v1890
      %v1892 = vpop.f32.mrf.mxu0
      %1893 = vmatprep.mubr.f32.mxu0 0.0
      %1894 = vmatmul.mubr.f32.gmra.mxu0 %v1488
      %v1895 = vpop.f32.mrf.mxu0
      %v1896 = vadd.f32 %v1751, %v1895
      %v1897 = vpop.f32.mrf.mxu0
      %1898 = vmatprep.mubr.f32.mxu0 0.0
      %1899 = vmatmul.mubr.f32.gmra.mxu0 %v1491
      %v1900 = vpop.f32.mrf.mxu0
      %v1901 = vadd.f32 %v1756, %v1900
      %v1902 = vpop.f32.mrf.mxu0
      %1903 = vmatprep.mubr.f32.mxu0 0.0
      %1904 = vmatmul.mubr.f32.gmra.mxu0 %v1494
      %v1905 = vpop.f32.mrf.mxu0
      %v1906 = vadd.f32 %v1761, %v1905
      %v1907 = vpop.f32.mrf.mxu0
      %1908 = vmatprep.mubr.f32.mxu0 0.0
      %1909 = vmatmul.mubr.f32.gmra.mxu0 %v1497
      %v1910 = vpop.f32.mrf.mxu0
      %v1911 = vadd.f32 %v1766, %v1910
      %v1912 = vpop.f32.mrf.mxu0
      %1913 = vmatprep.mubr.f32.mxu0 0.0
      %1914 = vmatmul.mubr.f32.gmra.mxu0 %v1500
      %v1915 = vpop.f32.mrf.mxu0
      %v1916 = vadd.f32 %v1771, %v1915
      %v1917 = vpop.f32.mrf.mxu0
      %1918 = vmatprep.mubr.f32.mxu0 0.0
      %1919 = vmatmul.mubr.f32.gmra.mxu0 %v1503
      %v1920 = vpop.f32.mrf.mxu0
      %v1921 = vadd.f32 %v1776, %v1920
      %v1922 = vpop.f32.mrf.mxu0
      %1923 = vmatprep.mubr.f32.mxu0 0.0
      %1924 = vmatmul.mubr.f32.gmra.mxu0 %v1506
      %v1925 = vpop.f32.mrf.mxu0
      %v1926 = vadd.f32 %v1781, %v1925
      %v1927 = vpop.f32.mrf.mxu0
      %1928 = vmatprep.mubr.f32.mxu0 0.0
      %1929 = vmatmul.mubr.f32.gmra.mxu0 %v1509
      %v1930 = vpop.f32.mrf.mxu0
      %v1931 = vadd.f32 %v1786, %v1930
      %v1932 = vpop.f32.mrf.mxu0
      %1933 = vmatprep.mubr.f32.mxu0 0.0
      %1934 = vmatmul.mubr.f32.gmra.mxu0 %v1512
      %v1935 = vpop.f32.mrf.mxu0
      %v1936 = vadd.f32 %v1791, %v1935
      %v1937 = vpop.f32.mrf.mxu0
      %1938 = vmatprep.mubr.f32.mxu0 0.0
      %1939 = vmatmul.mubr.f32.gmra.mxu0 %v1515
      %v1940 = vpop.f32.mrf.mxu0
      %v1941 = vadd.f32 %v1796, %v1940
      %v1942 = vpop.f32.mrf.mxu0
      %1943 = vmatprep.mubr.f32.mxu0 0.0
      %1944 = vmatmul.mubr.f32.gmra.mxu0 %v1518
      %v1945 = vpop.f32.mrf.mxu0
      %v1946 = vadd.f32 %v1801, %v1945
      %v1947 = vpop.f32.mrf.mxu0
      %1948 = vmatprep.mubr.f32.mxu0 0.0
      %1949 = vmatmul.mubr.f32.gmra.mxu0 %v1521
      %v1950 = vpop.f32.mrf.mxu0
      %v1951 = vadd.f32 %v1806, %v1950
      %v1952 = vpop.f32.mrf.mxu0
      %1953 = vmatprep.mubr.f32.mxu0 0.0
      %1954 = vmatmul.mubr.f32.gmra.mxu0 %v1524
      %v1955 = vpop.f32.mrf.mxu0
      %v1956 = vadd.f32 %v1811, %v1955
      %v1957 = vpop.f32.mrf.mxu0
      %1958 = vmatprep.mubr.f32.mxu0 0.0
      %1959 = vmatmul.mubr.f32.gmra.mxu0 %v1527
      %v1960 = vpop.f32.mrf.mxu0
      %v1961 = vadd.f32 %v1816, %v1960
      %v1962 = vpop.f32.mrf.mxu0
      %1963 = vdwg.mxu0
      %v1964 = vsel %vm1287, %v1596, -inf
      %v1965 = vrot.slane %v1964, 4
      %v1966 = vmax.f32 %v1964, %v1965
      %v1967 = vrot.slane %v1966, 2
      %v1968 = vmax.f32 %v1966, %v1967
      %v1969 = vrot.slane %v1968, 1
      %v1970 = vmax.f32 %v1968, %v1969
      %v1971 = vsel %vm1287, %v1601, -inf
      %v1972 = vrot.slane %v1971, 4
      %v1973 = vmax.f32 %v1971, %v1972
      %v1974 = vrot.slane %v1973, 2
      %v1975 = vmax.f32 %v1973, %v1974
      %v1976 = vrot.slane %v1975, 1
      %v1977 = vmax.f32 %v1975, %v1976
      %v1978 = vsel %vm1287, %v1606, -inf
      %v1979 = vrot.slane %v1978, 4
      %v1980 = vmax.f32 %v1978, %v1979
      %v1981 = vrot.slane %v1980, 2
      %v1982 = vmax.f32 %v1980, %v1981
      %v1983 = vrot.slane %v1982, 1
      %v1984 = vmax.f32 %v1982, %v1983
      %v1985 = vsel %vm1287, %v1611, -inf
      %v1986 = vrot.slane %v1985, 4
      %v1987 = vmax.f32 %v1985, %v1986
      %v1988 = vrot.slane %v1987, 2
      %v1989 = vmax.f32 %v1987, %v1988
      %v1990 = vrot.slane %v1989, 1
      %v1991 = vmax.f32 %v1989, %v1990
      %v1992 = vsel %vm1287, %v1616, -inf
      %v1993 = vrot.slane %v1992, 4
      %v1994 = vmax.f32 %v1992, %v1993
      %v1995 = vrot.slane %v1994, 2
      %v1996 = vmax.f32 %v1994, %v1995
      %v1997 = vrot.slane %v1996, 1
      %v1998 = vmax.f32 %v1996, %v1997
      %v1999 = vsel %vm1287, %v1621, -inf
      %v2000 = vrot.slane %v1999, 4
      %v2001 = vmax.f32 %v1999, %v2000
      %v2002 = vrot.slane %v2001, 2
      %v2003 = vmax.f32 %v2001, %v2002
      %v2004 = vrot.slane %v2003, 1
      %v2005 = vmax.f32 %v2003, %v2004
      %v2006 = vsel %vm1287, %v1626, -inf
      %v2007 = vrot.slane %v2006, 4
      %v2008 = vmax.f32 %v2006, %v2007
      %v2009 = vrot.slane %v2008, 2
      %v2010 = vmax.f32 %v2008, %v2009
      %v2011 = vrot.slane %v2010, 1
      %v2012 = vmax.f32 %v2010, %v2011
      %v2013 = vsel %vm1287, %v1631, -inf
      %v2014 = vrot.slane %v2013, 4
      %v2015 = vmax.f32 %v2013, %v2014
      %v2016 = vrot.slane %v2015, 2
      %v2017 = vmax.f32 %v2015, %v2016
      %v2018 = vrot.slane %v2017, 1
      %v2019 = vmax.f32 %v2017, %v2018
      %v2020 = vsel %vm1287, %v1636, -inf
      %v2021 = vrot.slane %v2020, 4
      %v2022 = vmax.f32 %v2020, %v2021
      %v2023 = vrot.slane %v2022, 2
      %v2024 = vmax.f32 %v2022, %v2023
      %v2025 = vrot.slane %v2024, 1
      %v2026 = vmax.f32 %v2024, %v2025
      %v2027 = vsel %vm1287, %v1641, -inf
      %v2028 = vrot.slane %v2027, 4
      %v2029 = vmax.f32 %v2027, %v2028
      %v2030 = vrot.slane %v2029, 2
      %v2031 = vmax.f32 %v2029, %v2030
      %v2032 = vrot.slane %v2031, 1
      %v2033 = vmax.f32 %v2031, %v2032
      %v2034 = vsel %vm1287, %v1646, -inf
      %v2035 = vrot.slane %v2034, 4
      %v2036 = vmax.f32 %v2034, %v2035
      %v2037 = vrot.slane %v2036, 2
      %v2038 = vmax.f32 %v2036, %v2037
      %v2039 = vrot.slane %v2038, 1
      %v2040 = vmax.f32 %v2038, %v2039
      %v2041 = vsel %vm1287, %v1651, -inf
      %v2042 = vrot.slane %v2041, 4
      %v2043 = vmax.f32 %v2041, %v2042
      %v2044 = vrot.slane %v2043, 2
      %v2045 = vmax.f32 %v2043, %v2044
      %v2046 = vrot.slane %v2045, 1
      %v2047 = vmax.f32 %v2045, %v2046
      %v2048 = vsel %vm1287, %v1656, -inf
      %v2049 = vrot.slane %v2048, 4
      %v2050 = vmax.f32 %v2048, %v2049
      %v2051 = vrot.slane %v2050, 2
      %v2052 = vmax.f32 %v2050, %v2051
      %v2053 = vrot.slane %v2052, 1
      %v2054 = vmax.f32 %v2052, %v2053
      %v2055 = vsel %vm1287, %v1661, -inf
      %v2056 = vrot.slane %v2055, 4
      %v2057 = vmax.f32 %v2055, %v2056
      %v2058 = vrot.slane %v2057, 2
      %v2059 = vmax.f32 %v2057, %v2058
      %v2060 = vrot.slane %v2059, 1
      %v2061 = vmax.f32 %v2059, %v2060
      %v2062 = vsel %vm1287, %v1666, -inf
      %v2063 = vrot.slane %v2062, 4
      %v2064 = vmax.f32 %v2062, %v2063
      %v2065 = vrot.slane %v2064, 2
      %v2066 = vmax.f32 %v2064, %v2065
      %v2067 = vrot.slane %v2066, 1
      %v2068 = vmax.f32 %v2066, %v2067
      %v2069 = vsel %vm1287, %v1671, -inf
      %v2070 = vrot.slane %v2069, 4
      %v2071 = vmax.f32 %v2069, %v2070
      %v2072 = vrot.slane %v2071, 2
      %v2073 = vmax.f32 %v2071, %v2072
      %v2074 = vrot.slane %v2073, 1
      %v2075 = vmax.f32 %v2073, %v2074
      %v2076 = vsub.f32 %v1596, %v1970
      %v2077 = vsub.f32 %v1601, %v1977
      %v2078 = vsub.f32 %v1606, %v1984
      %v2079 = vsub.f32 %v1611, %v1991
      %v2080 = vsub.f32 %v1616, %v1998
      %v2081 = vsub.f32 %v1621, %v2005
      %v2082 = vsub.f32 %v1626, %v2012
      %v2083 = vsub.f32 %v1631, %v2019
      %v2084 = vsub.f32 %v1636, %v2026
      %v2085 = vsub.f32 %v1641, %v2033
      %v2086 = vsub.f32 %v1646, %v2040
      %v2087 = vsub.f32 %v1651, %v2047
      %v2088 = vsub.f32 %v1656, %v2054
      %v2089 = vsub.f32 %v1661, %v2061
      %v2090 = vsub.f32 %v1666, %v2068
      %v2091 = vsub.f32 %v1671, %v2075
      %v2092 = vmul.f32 %v2076, 1.442695
      %v2093 = vpow.pop %v2092
      %v2094 = vmul.f32 %v2077, 1.442695
      %v2095 = vpow.pop %v2094
      %v2096 = vmul.f32 %v2078, 1.442695
      %v2097 = vpow.pop %v2096
      %v2098 = vmul.f32 %v2079, 1.442695
      %v2099 = vpow.pop %v2098
      %v2100 = vmul.f32 %v2080, 1.442695
      %v2101 = vpow.pop %v2100
      %v2102 = vmul.f32 %v2081, 1.442695
      %v2103 = vpow.pop %v2102
      %v2104 = vmul.f32 %v2082, 1.442695
      %v2105 = vpow.pop %v2104
      %v2106 = vmul.f32 %v2083, 1.442695
      %v2107 = vpow.pop %v2106
      %v2108 = vmul.f32 %v2084, 1.442695
      %v2109 = vpow.pop %v2108
      %v2110 = vmul.f32 %v2085, 1.442695
      %v2111 = vpow.pop %v2110
      %v2112 = vmul.f32 %v2086, 1.442695
      %v2113 = vpow.pop %v2112
      %v2114 = vmul.f32 %v2087, 1.442695
      %v2115 = vpow.pop %v2114
      %v2116 = vmul.f32 %v2088, 1.442695
      %v2117 = vpow.pop %v2116
      %v2118 = vmul.f32 %v2089, 1.442695
      %v2119 = vpow.pop %v2118
      %v2120 = vmul.f32 %v2090, 1.442695
      %v2121 = vpow.pop %v2120
      %v2122 = vmul.f32 %v2091, 1.442695
      %v2123 = vpow.pop %v2122
      %v2124 = vsel %vm1287, %v2093, 0.0
      %v2125 = vrot.slane %v2124, 4
      %v2126 = vadd.f32 %v2124, %v2125
      %v2127 = vrot.slane %v2126, 2
      %v2128 = vadd.f32 %v2126, %v2127
      %v2129 = vrot.slane %v2128, 1
      %v2130 = vadd.f32 %v2128, %v2129
      %v2131 = vsel %vm1287, %v2095, 0.0
      %v2132 = vrot.slane %v2131, 4
      %v2133 = vadd.f32 %v2131, %v2132
      %v2134 = vrot.slane %v2133, 2
      %v2135 = vadd.f32 %v2133, %v2134
      %v2136 = vrot.slane %v2135, 1
      %v2137 = vadd.f32 %v2135, %v2136
      %v2138 = vsel %vm1287, %v2097, 0.0
      %v2139 = vrot.slane %v2138, 4
      %v2140 = vadd.f32 %v2138, %v2139
      %v2141 = vrot.slane %v2140, 2
      %v2142 = vadd.f32 %v2140, %v2141
      %v2143 = vrot.slane %v2142, 1
      %v2144 = vadd.f32 %v2142, %v2143
      %v2145 = vsel %vm1287, %v2099, 0.0
      %v2146 = vrot.slane %v2145, 4
      %v2147 = vadd.f32 %v2145, %v2146
      %v2148 = vrot.slane %v2147, 2
      %v2149 = vadd.f32 %v2147, %v2148
      %v2150 = vrot.slane %v2149, 1
      %v2151 = vadd.f32 %v2149, %v2150
      %v2152 = vsel %vm1287, %v2101, 0.0
      %v2153 = vrot.slane %v2152, 4
      %v2154 = vadd.f32 %v2152, %v2153
      %v2155 = vrot.slane %v2154, 2
      %v2156 = vadd.f32 %v2154, %v2155
      %v2157 = vrot.slane %v2156, 1
      %v2158 = vadd.f32 %v2156, %v2157
      %v2159 = vsel %vm1287, %v2103, 0.0
      %v2160 = vrot.slane %v2159, 4
      %v2161 = vadd.f32 %v2159, %v2160
      %v2162 = vrot.slane %v2161, 2
      %v2163 = vadd.f32 %v2161, %v2162
      %v2164 = vrot.slane %v2163, 1
      %v2165 = vadd.f32 %v2163, %v2164
      %v2166 = vsel %vm1287, %v2105, 0.0
      %v2167 = vrot.slane %v2166, 4
      %v2168 = vadd.f32 %v2166, %v2167
      %v2169 = vrot.slane %v2168, 2
      %v2170 = vadd.f32 %v2168, %v2169
      %v2171 = vrot.slane %v2170, 1
      %v2172 = vadd.f32 %v2170, %v2171
      %v2173 = vsel %vm1287, %v2107, 0.0
      %v2174 = vrot.slane %v2173, 4
      %v2175 = vadd.f32 %v2173, %v2174
      %v2176 = vrot.slane %v2175, 2
      %v2177 = vadd.f32 %v2175, %v2176
      %v2178 = vrot.slane %v2177, 1
      %v2179 = vadd.f32 %v2177, %v2178
      %v2180 = vsel %vm1287, %v2109, 0.0
      %v2181 = vrot.slane %v2180, 4
      %v2182 = vadd.f32 %v2180, %v2181
      %v2183 = vrot.slane %v2182, 2
      %v2184 = vadd.f32 %v2182, %v2183
      %v2185 = vrot.slane %v2184, 1
      %v2186 = vadd.f32 %v2184, %v2185
      %v2187 = vsel %vm1287, %v2111, 0.0
      %v2188 = vrot.slane %v2187, 4
      %v2189 = vadd.f32 %v2187, %v2188
      %v2190 = vrot.slane %v2189, 2
      %v2191 = vadd.f32 %v2189, %v2190
      %v2192 = vrot.slane %v2191, 1
      %v2193 = vadd.f32 %v2191, %v2192
      %v2194 = vsel %vm1287, %v2113, 0.0
      %v2195 = vrot.slane %v2194, 4
      %v2196 = vadd.f32 %v2194, %v2195
      %v2197 = vrot.slane %v2196, 2
      %v2198 = vadd.f32 %v2196, %v2197
      %v2199 = vrot.slane %v2198, 1
      %v2200 = vadd.f32 %v2198, %v2199
      %v2201 = vsel %vm1287, %v2115, 0.0
      %v2202 = vrot.slane %v2201, 4
      %v2203 = vadd.f32 %v2201, %v2202
      %v2204 = vrot.slane %v2203, 2
      %v2205 = vadd.f32 %v2203, %v2204
      %v2206 = vrot.slane %v2205, 1
      %v2207 = vadd.f32 %v2205, %v2206
      %v2208 = vsel %vm1287, %v2117, 0.0
      %v2209 = vrot.slane %v2208, 4
      %v2210 = vadd.f32 %v2208, %v2209
      %v2211 = vrot.slane %v2210, 2
      %v2212 = vadd.f32 %v2210, %v2211
      %v2213 = vrot.slane %v2212, 1
      %v2214 = vadd.f32 %v2212, %v2213
      %v2215 = vsel %vm1287, %v2119, 0.0
      %v2216 = vrot.slane %v2215, 4
      %v2217 = vadd.f32 %v2215, %v2216
      %v2218 = vrot.slane %v2217, 2
      %v2219 = vadd.f32 %v2217, %v2218
      %v2220 = vrot.slane %v2219, 1
      %v2221 = vadd.f32 %v2219, %v2220
      %v2222 = vsel %vm1287, %v2121, 0.0
      %v2223 = vrot.slane %v2222, 4
      %v2224 = vadd.f32 %v2222, %v2223
      %v2225 = vrot.slane %v2224, 2
      %v2226 = vadd.f32 %v2224, %v2225
      %v2227 = vrot.slane %v2226, 1
      %v2228 = vadd.f32 %v2226, %v2227
      %v2229 = vsel %vm1287, %v2123, 0.0
      %v2230 = vrot.slane %v2229, 4
      %v2231 = vadd.f32 %v2229, %v2230
      %v2232 = vrot.slane %v2231, 2
      %v2233 = vadd.f32 %v2231, %v2232
      %v2234 = vrot.slane %v2233, 1
      %v2235 = vadd.f32 %v2233, %v2234
      %v2236 = vrcp.pop %v2130
      %v2237 = vrcp.pop %v2137
      %v2238 = vrcp.pop %v2144
      %v2239 = vrcp.pop %v2151
      %v2240 = vrcp.pop %v2158
      %v2241 = vrcp.pop %v2165
      %v2242 = vrcp.pop %v2172
      %v2243 = vrcp.pop %v2179
      %v2244 = vrcp.pop %v2186
      %v2245 = vrcp.pop %v2193
      %v2246 = vrcp.pop %v2200
      %v2247 = vrcp.pop %v2207
      %v2248 = vrcp.pop %v2214
      %v2249 = vrcp.pop %v2221
      %v2250 = vrcp.pop %v2228
      %v2251 = vrcp.pop %v2235
      %v2252 = vmul.f32 %v2093, %v2236
      %v2253 = vmul.f32 %v2095, %v2237
      %v2254 = vmul.f32 %v2097, %v2238
      %v2255 = vmul.f32 %v2099, %v2239
      %v2256 = vmul.f32 %v2101, %v2240
      %v2257 = vmul.f32 %v2103, %v2241
      %v2258 = vmul.f32 %v2105, %v2242
      %v2259 = vmul.f32 %v2107, %v2243
      %v2260 = vmul.f32 %v2109, %v2244
      %v2261 = vmul.f32 %v2111, %v2245
      %v2262 = vmul.f32 %v2113, %v2246
      %v2263 = vmul.f32 %v2115, %v2247
      %v2264 = vmul.f32 %v2117, %v2248
      %v2265 = vmul.f32 %v2119, %v2249
      %v2266 = vmul.f32 %v2121, %v2250
      %v2267 = vmul.f32 %v2123, %v2251
      %v2268 = vsel %vm1287, %v1886, -inf
      %v2269 = vrot.slane %v2268, 4
      %v2270 = vmax.f32 %v2268, %v2269
      %v2271 = vrot.slane %v2270, 2
      %v2272 = vmax.f32 %v2270, %v2271
      %v2273 = vrot.slane %v2272, 1
      %v2274 = vmax.f32 %v2272, %v2273
      %v2275 = vsel %vm1287, %v1891, -inf
      %v2276 = vrot.slane %v2275, 4
      %v2277 = vmax.f32 %v2275, %v2276
      %v2278 = vrot.slane %v2277, 2
      %v2279 = vmax.f32 %v2277, %v2278
      %v2280 = vrot.slane %v2279, 1
      %v2281 = vmax.f32 %v2279, %v2280
      %v2282 = vsel %vm1287, %v1896, -inf
      %v2283 = vrot.slane %v2282, 4
      %v2284 = vmax.f32 %v2282, %v2283
      %v2285 = vrot.slane %v2284, 2
      %v2286 = vmax.f32 %v2284, %v2285
      %v2287 = vrot.slane %v2286, 1
      %v2288 = vmax.f32 %v2286, %v2287
      %v2289 = vsel %vm1287, %v1901, -inf
      %v2290 = vrot.slane %v2289, 4
      %v2291 = vmax.f32 %v2289, %v2290
      %v2292 = vrot.slane %v2291, 2
      %v2293 = vmax.f32 %v2291, %v2292
      %v2294 = vrot.slane %v2293, 1
      %v2295 = vmax.f32 %v2293, %v2294
      %v2296 = vsel %vm1287, %v1906, -inf
      %v2297 = vrot.slane %v2296, 4
      %v2298 = vmax.f32 %v2296, %v2297
      %v2299 = vrot.slane %v2298, 2
      %v2300 = vmax.f32 %v2298, %v2299
      %v2301 = vrot.slane %v2300, 1
      %v2302 = vmax.f32 %v2300, %v2301
      %v2303 = vsel %vm1287, %v1911, -inf
      %v2304 = vrot.slane %v2303, 4
      %v2305 = vmax.f32 %v2303, %v2304
      %v2306 = vrot.slane %v2305, 2
      %v2307 = vmax.f32 %v2305, %v2306
      %v2308 = vrot.slane %v2307, 1
      %v2309 = vmax.f32 %v2307, %v2308
      %v2310 = vsel %vm1287, %v1916, -inf
      %v2311 = vrot.slane %v2310, 4
      %v2312 = vmax.f32 %v2310, %v2311
      %v2313 = vrot.slane %v2312, 2
      %v2314 = vmax.f32 %v2312, %v2313
      %v2315 = vrot.slane %v2314, 1
      %v2316 = vmax.f32 %v2314, %v2315
      %v2317 = vsel %vm1287, %v1921, -inf
      %v2318 = vrot.slane %v2317, 4
      %v2319 = vmax.f32 %v2317, %v2318
      %v2320 = vrot.slane %v2319, 2
      %v2321 = vmax.f32 %v2319, %v2320
      %v2322 = vrot.slane %v2321, 1
      %v2323 = vmax.f32 %v2321, %v2322
      %v2324 = vsel %vm1287, %v1926, -inf
      %v2325 = vrot.slane %v2324, 4
      %v2326 = vmax.f32 %v2324, %v2325
      %v2327 = vrot.slane %v2326, 2
      %v2328 = vmax.f32 %v2326, %v2327
      %v2329 = vrot.slane %v2328, 1
      %v2330 = vmax.f32 %v2328, %v2329
      %v2331 = vsel %vm1287, %v1931, -inf
      %v2332 = vrot.slane %v2331, 4
      %v2333 = vmax.f32 %v2331, %v2332
      %v2334 = vrot.slane %v2333, 2
      %v2335 = vmax.f32 %v2333, %v2334
      %v2336 = vrot.slane %v2335, 1
      %v2337 = vmax.f32 %v2335, %v2336
      %v2338 = vsel %vm1287, %v1936, -inf
      %v2339 = vrot.slane %v2338, 4
      %v2340 = vmax.f32 %v2338, %v2339
      %v2341 = vrot.slane %v2340, 2
      %v2342 = vmax.f32 %v2340, %v2341
      %v2343 = vrot.slane %v2342, 1
      %v2344 = vmax.f32 %v2342, %v2343
      %v2345 = vsel %vm1287, %v1941, -inf
      %v2346 = vrot.slane %v2345, 4
      %v2347 = vmax.f32 %v2345, %v2346
      %v2348 = vrot.slane %v2347, 2
      %v2349 = vmax.f32 %v2347, %v2348
      %v2350 = vrot.slane %v2349, 1
      %v2351 = vmax.f32 %v2349, %v2350
      %v2352 = vsel %vm1287, %v1946, -inf
      %v2353 = vrot.slane %v2352, 4
      %v2354 = vmax.f32 %v2352, %v2353
      %v2355 = vrot.slane %v2354, 2
      %v2356 = vmax.f32 %v2354, %v2355
      %v2357 = vrot.slane %v2356, 1
      %v2358 = vmax.f32 %v2356, %v2357
      %v2359 = vsel %vm1287, %v1951, -inf
      %v2360 = vrot.slane %v2359, 4
      %v2361 = vmax.f32 %v2359, %v2360
      %v2362 = vrot.slane %v2361, 2
      %v2363 = vmax.f32 %v2361, %v2362
      %v2364 = vrot.slane %v2363, 1
      %v2365 = vmax.f32 %v2363, %v2364
      %v2366 = vsel %vm1287, %v1956, -inf
      %v2367 = vrot.slane %v2366, 4
      %v2368 = vmax.f32 %v2366, %v2367
      %v2369 = vrot.slane %v2368, 2
      %v2370 = vmax.f32 %v2368, %v2369
      %v2371 = vrot.slane %v2370, 1
      %v2372 = vmax.f32 %v2370, %v2371
      %v2373 = vsel %vm1287, %v1961, -inf
      %v2374 = vrot.slane %v2373, 4
      %v2375 = vmax.f32 %v2373, %v2374
      %v2376 = vrot.slane %v2375, 2
      %v2377 = vmax.f32 %v2375, %v2376
      %v2378 = vrot.slane %v2377, 1
      %v2379 = vmax.f32 %v2377, %v2378
      %v2380 = vsub.f32 %v1886, %v2274
      %v2381 = vsub.f32 %v1891, %v2281
      %v2382 = vsub.f32 %v1896, %v2288
      %v2383 = vsub.f32 %v1901, %v2295
      %v2384 = vsub.f32 %v1906, %v2302
      %v2385 = vsub.f32 %v1911, %v2309
      %v2386 = vsub.f32 %v1916, %v2316
      %v2387 = vsub.f32 %v1921, %v2323
      %v2388 = vsub.f32 %v1926, %v2330
      %v2389 = vsub.f32 %v1931, %v2337
      %v2390 = vsub.f32 %v1936, %v2344
      %v2391 = vsub.f32 %v1941, %v2351
      %v2392 = vsub.f32 %v1946, %v2358
      %v2393 = vsub.f32 %v1951, %v2365
      %v2394 = vsub.f32 %v1956, %v2372
      %v2395 = vsub.f32 %v1961, %v2379
      %v2396 = vmul.f32 %v2380, 1.442695
      %v2397 = vpow.pop %v2396
      %v2398 = vmul.f32 %v2381, 1.442695
      %v2399 = vpow.pop %v2398
      %v2400 = vmul.f32 %v2382, 1.442695
      %v2401 = vpow.pop %v2400
      %v2402 = vmul.f32 %v2383, 1.442695
      %v2403 = vpow.pop %v2402
      %v2404 = vmul.f32 %v2384, 1.442695
      %v2405 = vpow.pop %v2404
      %v2406 = vmul.f32 %v2385, 1.442695
      %v2407 = vpow.pop %v2406
      %v2408 = vmul.f32 %v2386, 1.442695
      %v2409 = vpow.pop %v2408
      %v2410 = vmul.f32 %v2387, 1.442695
      %v2411 = vpow.pop %v2410
      %v2412 = vmul.f32 %v2388, 1.442695
      %v2413 = vpow.pop %v2412
      %v2414 = vmul.f32 %v2389, 1.442695
      %v2415 = vpow.pop %v2414
      %v2416 = vmul.f32 %v2390, 1.442695
      %v2417 = vpow.pop %v2416
      %v2418 = vmul.f32 %v2391, 1.442695
      %v2419 = vpow.pop %v2418
      %v2420 = vmul.f32 %v2392, 1.442695
      %v2421 = vpow.pop %v2420
      %v2422 = vmul.f32 %v2393, 1.442695
      %v2423 = vpow.pop %v2422
      %v2424 = vmul.f32 %v2394, 1.442695
      %v2425 = vpow.pop %v2424
      %v2426 = vmul.f32 %v2395, 1.442695
      %v2427 = vpow.pop %v2426
      %v2428 = vsel %vm1287, %v2397, 0.0
      %v2429 = vrot.slane %v2428, 4
      %v2430 = vadd.f32 %v2428, %v2429
      %v2431 = vrot.slane %v2430, 2
      %v2432 = vadd.f32 %v2430, %v2431
      %v2433 = vrot.slane %v2432, 1
      %v2434 = vadd.f32 %v2432, %v2433
      %v2435 = vsel %vm1287, %v2399, 0.0
      %v2436 = vrot.slane %v2435, 4
      %v2437 = vadd.f32 %v2435, %v2436
      %v2438 = vrot.slane %v2437, 2
      %v2439 = vadd.f32 %v2437, %v2438
      %v2440 = vrot.slane %v2439, 1
      %v2441 = vadd.f32 %v2439, %v2440
      %v2442 = vsel %vm1287, %v2401, 0.0
      %v2443 = vrot.slane %v2442, 4
      %v2444 = vadd.f32 %v2442, %v2443
      %v2445 = vrot.slane %v2444, 2
      %v2446 = vadd.f32 %v2444, %v2445
      %v2447 = vrot.slane %v2446, 1
      %v2448 = vadd.f32 %v2446, %v2447
      %v2449 = vsel %vm1287, %v2403, 0.0
      %v2450 = vrot.slane %v2449, 4
      %v2451 = vadd.f32 %v2449, %v2450
      %v2452 = vrot.slane %v2451, 2
      %v2453 = vadd.f32 %v2451, %v2452
      %v2454 = vrot.slane %v2453, 1
      %v2455 = vadd.f32 %v2453, %v2454
      %v2456 = vsel %vm1287, %v2405, 0.0
      %v2457 = vrot.slane %v2456, 4
      %v2458 = vadd.f32 %v2456, %v2457
      %v2459 = vrot.slane %v2458, 2
      %v2460 = vadd.f32 %v2458, %v2459
      %v2461 = vrot.slane %v2460, 1
      %v2462 = vadd.f32 %v2460, %v2461
      %v2463 = vsel %vm1287, %v2407, 0.0
      %v2464 = vrot.slane %v2463, 4
      %v2465 = vadd.f32 %v2463, %v2464
      %v2466 = vrot.slane %v2465, 2
      %v2467 = vadd.f32 %v2465, %v2466
      %v2468 = vrot.slane %v2467, 1
      %v2469 = vadd.f32 %v2467, %v2468
      %v2470 = vsel %vm1287, %v2409, 0.0
      %v2471 = vrot.slane %v2470, 4
      %v2472 = vadd.f32 %v2470, %v2471
      %v2473 = vrot.slane %v2472, 2
      %v2474 = vadd.f32 %v2472, %v2473
      %v2475 = vrot.slane %v2474, 1
      %v2476 = vadd.f32 %v2474, %v2475
      %v2477 = vsel %vm1287, %v2411, 0.0
      %v2478 = vrot.slane %v2477, 4
      %v2479 = vadd.f32 %v2477, %v2478
      %v2480 = vrot.slane %v2479, 2
      %v2481 = vadd.f32 %v2479, %v2480
      %v2482 = vrot.slane %v2481, 1
      %v2483 = vadd.f32 %v2481, %v2482
      %v2484 = vsel %vm1287, %v2413, 0.0
      %v2485 = vrot.slane %v2484, 4
      %v2486 = vadd.f32 %v2484, %v2485
      %v2487 = vrot.slane %v2486, 2
      %v2488 = vadd.f32 %v2486, %v2487
      %v2489 = vrot.slane %v2488, 1
      %v2490 = vadd.f32 %v2488, %v2489
      %v2491 = vsel %vm1287, %v2415, 0.0
      %v2492 = vrot.slane %v2491, 4
      %v2493 = vadd.f32 %v2491, %v2492
      %v2494 = vrot.slane %v2493, 2
      %v2495 = vadd.f32 %v2493, %v2494
      %v2496 = vrot.slane %v2495, 1
      %v2497 = vadd.f32 %v2495, %v2496
      %v2498 = vsel %vm1287, %v2417, 0.0
      %v2499 = vrot.slane %v2498, 4
      %v2500 = vadd.f32 %v2498, %v2499
      %v2501 = vrot.slane %v2500, 2
      %v2502 = vadd.f32 %v2500, %v2501
      %v2503 = vrot.slane %v2502, 1
      %v2504 = vadd.f32 %v2502, %v2503
      %v2505 = vsel %vm1287, %v2419, 0.0
      %v2506 = vrot.slane %v2505, 4
      %v2507 = vadd.f32 %v2505, %v2506
      %v2508 = vrot.slane %v2507, 2
      %v2509 = vadd.f32 %v2507, %v2508
      %v2510 = vrot.slane %v2509, 1
      %v2511 = vadd.f32 %v2509, %v2510
      %v2512 = vsel %vm1287, %v2421, 0.0
      %v2513 = vrot.slane %v2512, 4
      %v2514 = vadd.f32 %v2512, %v2513
      %v2515 = vrot.slane %v2514, 2
      %v2516 = vadd.f32 %v2514, %v2515
      %v2517 = vrot.slane %v2516, 1
      %v2518 = vadd.f32 %v2516, %v2517
      %v2519 = vsel %vm1287, %v2423, 0.0
      %v2520 = vrot.slane %v2519, 4
      %v2521 = vadd.f32 %v2519, %v2520
      %v2522 = vrot.slane %v2521, 2
      %v2523 = vadd.f32 %v2521, %v2522
      %v2524 = vrot.slane %v2523, 1
      %v2525 = vadd.f32 %v2523, %v2524
      %v2526 = vsel %vm1287, %v2425, 0.0
      %v2527 = vrot.slane %v2526, 4
      %v2528 = vadd.f32 %v2526, %v2527
      %v2529 = vrot.slane %v2528, 2
      %v2530 = vadd.f32 %v2528, %v2529
      %v2531 = vrot.slane %v2530, 1
      %v2532 = vadd.f32 %v2530, %v2531
      %v2533 = vsel %vm1287, %v2427, 0.0
      %v2534 = vrot.slane %v2533, 4
      %v2535 = vadd.f32 %v2533, %v2534
      %v2536 = vrot.slane %v2535, 2
      %v2537 = vadd.f32 %v2535, %v2536
      %v2538 = vrot.slane %v2537, 1
      %v2539 = vadd.f32 %v2537, %v2538
      %v2540 = vrcp.pop %v2434
      %v2541 = vrcp.pop %v2441
      %v2542 = vrcp.pop %v2448
      %v2543 = vrcp.pop %v2455
      %v2544 = vrcp.pop %v2462
      %v2545 = vrcp.pop %v2469
      %v2546 = vrcp.pop %v2476
      %v2547 = vrcp.pop %v2483
      %v2548 = vrcp.pop %v2490
      %v2549 = vrcp.pop %v2497
      %v2550 = vrcp.pop %v2504
      %v2551 = vrcp.pop %v2511
      %v2552 = vrcp.pop %v2518
      %v2553 = vrcp.pop %v2525
      %v2554 = vrcp.pop %v2532
      %v2555 = vrcp.pop %v2539
      %v2556 = vmul.f32 %v2397, %v2540
      %v2557 = vmul.f32 %v2399, %v2541
      %v2558 = vmul.f32 %v2401, %v2542
      %v2559 = vmul.f32 %v2403, %v2543
      %v2560 = vmul.f32 %v2405, %v2544
      %v2561 = vmul.f32 %v2407, %v2545
      %v2562 = vmul.f32 %v2409, %v2546
      %v2563 = vmul.f32 %v2411, %v2547
      %v2564 = vmul.f32 %v2413, %v2548
      %v2565 = vmul.f32 %v2415, %v2549
      %v2566 = vmul.f32 %v2417, %v2550
      %v2567 = vmul.f32 %v2419, %v2551
      %v2568 = vmul.f32 %v2421, %v2552
      %v2569 = vmul.f32 %v2423, %v2553
      %v2570 = vmul.f32 %v2425, %v2554
      %v2571 = vmul.f32 %v2427, %v2555
      %v2572 = vmul.f32 %v1258, %v2252
      %v2573 = vmul.f32 %v1259, %v2253
      %v2574 = vmul.f32 %v1260, %v2254
      %v2575 = vmul.f32 %v1261, %v2255
      %v2576 = vmul.f32 %v1262, %v2256
      %v2577 = vmul.f32 %v1263, %v2257
      %v2578 = vmul.f32 %v1264, %v2258
      %v2579 = vmul.f32 %v1265, %v2259
      %v2580 = vmul.f32 %v1266, %v2260
      %v2581 = vmul.f32 %v1267, %v2261
      %v2582 = vmul.f32 %v1268, %v2262
      %v2583 = vmul.f32 %v1269, %v2263
      %v2584 = vmul.f32 %v1270, %v2264
      %v2585 = vmul.f32 %v1271, %v2265
      %v2586 = vmul.f32 %v1272, %v2266
      %v2587 = vmul.f32 %v1273, %v2267
      %v2588 = vsel %vm1287, %v2572, 0.0
      %v2589 = vrot.slane %v2588, 4
      %v2590 = vadd.f32 %v2588, %v2589
      %v2591 = vrot.slane %v2590, 2
      %v2592 = vadd.f32 %v2590, %v2591
      %v2593 = vrot.slane %v2592, 1
      %v2594 = vadd.f32 %v2592, %v2593
      %v2595 = vsel %vm1287, %v2573, 0.0
      %v2596 = vrot.slane %v2595, 4
      %v2597 = vadd.f32 %v2595, %v2596
      %v2598 = vrot.slane %v2597, 2
      %v2599 = vadd.f32 %v2597, %v2598
      %v2600 = vrot.slane %v2599, 1
      %v2601 = vadd.f32 %v2599, %v2600
      %v2602 = vsel %vm1287, %v2574, 0.0
      %v2603 = vrot.slane %v2602, 4
      %v2604 = vadd.f32 %v2602, %v2603
      %v2605 = vrot.slane %v2604, 2
      %v2606 = vadd.f32 %v2604, %v2605
      %v2607 = vrot.slane %v2606, 1
      %v2608 = vadd.f32 %v2606, %v2607
      %v2609 = vsel %vm1287, %v2575, 0.0
      %v2610 = vrot.slane %v2609, 4
      %v2611 = vadd.f32 %v2609, %v2610
      %v2612 = vrot.slane %v2611, 2
      %v2613 = vadd.f32 %v2611, %v2612
      %v2614 = vrot.slane %v2613, 1
      %v2615 = vadd.f32 %v2613, %v2614
      %v2616 = vsel %vm1287, %v2576, 0.0
      %v2617 = vrot.slane %v2616, 4
      %v2618 = vadd.f32 %v2616, %v2617
      %v2619 = vrot.slane %v2618, 2
      %v2620 = vadd.f32 %v2618, %v2619
      %v2621 = vrot.slane %v2620, 1
      %v2622 = vadd.f32 %v2620, %v2621
      %v2623 = vsel %vm1287, %v2577, 0.0
      %v2624 = vrot.slane %v2623, 4
      %v2625 = vadd.f32 %v2623, %v2624
      %v2626 = vrot.slane %v2625, 2
      %v2627 = vadd.f32 %v2625, %v2626
      %v2628 = vrot.slane %v2627, 1
      %v2629 = vadd.f32 %v2627, %v2628
      %v2630 = vsel %vm1287, %v2578, 0.0
      %v2631 = vrot.slane %v2630, 4
      %v2632 = vadd.f32 %v2630, %v2631
      %v2633 = vrot.slane %v2632, 2
      %v2634 = vadd.f32 %v2632, %v2633
      %v2635 = vrot.slane %v2634, 1
      %v2636 = vadd.f32 %v2634, %v2635
      %v2637 = vsel %vm1287, %v2579, 0.0
      %v2638 = vrot.slane %v2637, 4
      %v2639 = vadd.f32 %v2637, %v2638
      %v2640 = vrot.slane %v2639, 2
      %v2641 = vadd.f32 %v2639, %v2640
      %v2642 = vrot.slane %v2641, 1
      %v2643 = vadd.f32 %v2641, %v2642
      %v2644 = vsel %vm1287, %v2580, 0.0
      %v2645 = vrot.slane %v2644, 4
      %v2646 = vadd.f32 %v2644, %v2645
      %v2647 = vrot.slane %v2646, 2
      %v2648 = vadd.f32 %v2646, %v2647
      %v2649 = vrot.slane %v2648, 1
      %v2650 = vadd.f32 %v2648, %v2649
      %v2651 = vsel %vm1287, %v2581, 0.0
      %v2652 = vrot.slane %v2651, 4
      %v2653 = vadd.f32 %v2651, %v2652
      %v2654 = vrot.slane %v2653, 2
      %v2655 = vadd.f32 %v2653, %v2654
      %v2656 = vrot.slane %v2655, 1
      %v2657 = vadd.f32 %v2655, %v2656
      %v2658 = vsel %vm1287, %v2582, 0.0
      %v2659 = vrot.slane %v2658, 4
      %v2660 = vadd.f32 %v2658, %v2659
      %v2661 = vrot.slane %v2660, 2
      %v2662 = vadd.f32 %v2660, %v2661
      %v2663 = vrot.slane %v2662, 1
      %v2664 = vadd.f32 %v2662, %v2663
      %v2665 = vsel %vm1287, %v2583, 0.0
      %v2666 = vrot.slane %v2665, 4
      %v2667 = vadd.f32 %v2665, %v2666
      %v2668 = vrot.slane %v2667, 2
      %v2669 = vadd.f32 %v2667, %v2668
      %v2670 = vrot.slane %v2669, 1
      %v2671 = vadd.f32 %v2669, %v2670
      %v2672 = vsel %vm1287, %v2584, 0.0
      %v2673 = vrot.slane %v2672, 4
      %v2674 = vadd.f32 %v2672, %v2673
      %v2675 = vrot.slane %v2674, 2
      %v2676 = vadd.f32 %v2674, %v2675
      %v2677 = vrot.slane %v2676, 1
      %v2678 = vadd.f32 %v2676, %v2677
      %v2679 = vsel %vm1287, %v2585, 0.0
      %v2680 = vrot.slane %v2679, 4
      %v2681 = vadd.f32 %v2679, %v2680
      %v2682 = vrot.slane %v2681, 2
      %v2683 = vadd.f32 %v2681, %v2682
      %v2684 = vrot.slane %v2683, 1
      %v2685 = vadd.f32 %v2683, %v2684
      %v2686 = vsel %vm1287, %v2586, 0.0
      %v2687 = vrot.slane %v2686, 4
      %v2688 = vadd.f32 %v2686, %v2687
      %v2689 = vrot.slane %v2688, 2
      %v2690 = vadd.f32 %v2688, %v2689
      %v2691 = vrot.slane %v2690, 1
      %v2692 = vadd.f32 %v2690, %v2691
      %v2693 = vsel %vm1287, %v2587, 0.0
      %v2694 = vrot.slane %v2693, 4
      %v2695 = vadd.f32 %v2693, %v2694
      %v2696 = vrot.slane %v2695, 2
      %v2697 = vadd.f32 %v2695, %v2696
      %v2698 = vrot.slane %v2697, 1
      %v2699 = vadd.f32 %v2697, %v2698
      %v2700 = vmul.f32 %v1242, %v2556
      %v2701 = vmul.f32 %v1243, %v2557
      %v2702 = vmul.f32 %v1244, %v2558
      %v2703 = vmul.f32 %v1245, %v2559
      %v2704 = vmul.f32 %v1246, %v2560
      %v2705 = vmul.f32 %v1247, %v2561
      %v2706 = vmul.f32 %v1248, %v2562
      %v2707 = vmul.f32 %v1249, %v2563
      %v2708 = vmul.f32 %v1250, %v2564
      %v2709 = vmul.f32 %v1251, %v2565
      %v2710 = vmul.f32 %v1252, %v2566
      %v2711 = vmul.f32 %v1253, %v2567
      %v2712 = vmul.f32 %v1254, %v2568
      %v2713 = vmul.f32 %v1255, %v2569
      %v2714 = vmul.f32 %v1256, %v2570
      %v2715 = vmul.f32 %v1257, %v2571
      %v2716 = vsel %vm1287, %v2700, 0.0
      %v2717 = vrot.slane %v2716, 4
      %v2718 = vadd.f32 %v2716, %v2717
      %v2719 = vrot.slane %v2718, 2
      %v2720 = vadd.f32 %v2718, %v2719
      %v2721 = vrot.slane %v2720, 1
      %v2722 = vadd.f32 %v2720, %v2721
      %v2723 = vsel %vm1287, %v2701, 0.0
      %v2724 = vrot.slane %v2723, 4
      %v2725 = vadd.f32 %v2723, %v2724
      %v2726 = vrot.slane %v2725, 2
      %v2727 = vadd.f32 %v2725, %v2726
      %v2728 = vrot.slane %v2727, 1
      %v2729 = vadd.f32 %v2727, %v2728
      %v2730 = vsel %vm1287, %v2702, 0.0
      %v2731 = vrot.slane %v2730, 4
      %v2732 = vadd.f32 %v2730, %v2731
      %v2733 = vrot.slane %v2732, 2
      %v2734 = vadd.f32 %v2732, %v2733
      %v2735 = vrot.slane %v2734, 1
      %v2736 = vadd.f32 %v2734, %v2735
      %v2737 = vsel %vm1287, %v2703, 0.0
      %v2738 = vrot.slane %v2737, 4
      %v2739 = vadd.f32 %v2737, %v2738
      %v2740 = vrot.slane %v2739, 2
      %v2741 = vadd.f32 %v2739, %v2740
      %v2742 = vrot.slane %v2741, 1
      %v2743 = vadd.f32 %v2741, %v2742
      %v2744 = vsel %vm1287, %v2704, 0.0
      %v2745 = vrot.slane %v2744, 4
      %v2746 = vadd.f32 %v2744, %v2745
      %v2747 = vrot.slane %v2746, 2
      %v2748 = vadd.f32 %v2746, %v2747
      %v2749 = vrot.slane %v2748, 1
      %v2750 = vadd.f32 %v2748, %v2749
      %v2751 = vsel %vm1287, %v2705, 0.0
      %v2752 = vrot.slane %v2751, 4
      %v2753 = vadd.f32 %v2751, %v2752
      %v2754 = vrot.slane %v2753, 2
      %v2755 = vadd.f32 %v2753, %v2754
      %v2756 = vrot.slane %v2755, 1
      %v2757 = vadd.f32 %v2755, %v2756
      %v2758 = vsel %vm1287, %v2706, 0.0
      %v2759 = vrot.slane %v2758, 4
      %v2760 = vadd.f32 %v2758, %v2759
      %v2761 = vrot.slane %v2760, 2
      %v2762 = vadd.f32 %v2760, %v2761
      %v2763 = vrot.slane %v2762, 1
      %v2764 = vadd.f32 %v2762, %v2763
      %v2765 = vsel %vm1287, %v2707, 0.0
      %v2766 = vrot.slane %v2765, 4
      %v2767 = vadd.f32 %v2765, %v2766
      %v2768 = vrot.slane %v2767, 2
      %v2769 = vadd.f32 %v2767, %v2768
      %v2770 = vrot.slane %v2769, 1
      %v2771 = vadd.f32 %v2769, %v2770
      %v2772 = vsel %vm1287, %v2708, 0.0
      %v2773 = vrot.slane %v2772, 4
      %v2774 = vadd.f32 %v2772, %v2773
      %v2775 = vrot.slane %v2774, 2
      %v2776 = vadd.f32 %v2774, %v2775
      %v2777 = vrot.slane %v2776, 1
      %v2778 = vadd.f32 %v2776, %v2777
      %v2779 = vsel %vm1287, %v2709, 0.0
      %v2780 = vrot.slane %v2779, 4
      %v2781 = vadd.f32 %v2779, %v2780
      %v2782 = vrot.slane %v2781, 2
      %v2783 = vadd.f32 %v2781, %v2782
      %v2784 = vrot.slane %v2783, 1
      %v2785 = vadd.f32 %v2783, %v2784
      %v2786 = vsel %vm1287, %v2710, 0.0
      %v2787 = vrot.slane %v2786, 4
      %v2788 = vadd.f32 %v2786, %v2787
      %v2789 = vrot.slane %v2788, 2
      %v2790 = vadd.f32 %v2788, %v2789
      %v2791 = vrot.slane %v2790, 1
      %v2792 = vadd.f32 %v2790, %v2791
      %v2793 = vsel %vm1287, %v2711, 0.0
      %v2794 = vrot.slane %v2793, 4
      %v2795 = vadd.f32 %v2793, %v2794
      %v2796 = vrot.slane %v2795, 2
      %v2797 = vadd.f32 %v2795, %v2796
      %v2798 = vrot.slane %v2797, 1
      %v2799 = vadd.f32 %v2797, %v2798
      %v2800 = vsel %vm1287, %v2712, 0.0
      %v2801 = vrot.slane %v2800, 4
      %v2802 = vadd.f32 %v2800, %v2801
      %v2803 = vrot.slane %v2802, 2
      %v2804 = vadd.f32 %v2802, %v2803
      %v2805 = vrot.slane %v2804, 1
      %v2806 = vadd.f32 %v2804, %v2805
      %v2807 = vsel %vm1287, %v2713, 0.0
      %v2808 = vrot.slane %v2807, 4
      %v2809 = vadd.f32 %v2807, %v2808
      %v2810 = vrot.slane %v2809, 2
      %v2811 = vadd.f32 %v2809, %v2810
      %v2812 = vrot.slane %v2811, 1
      %v2813 = vadd.f32 %v2811, %v2812
      %v2814 = vsel %vm1287, %v2714, 0.0
      %v2815 = vrot.slane %v2814, 4
      %v2816 = vadd.f32 %v2814, %v2815
      %v2817 = vrot.slane %v2816, 2
      %v2818 = vadd.f32 %v2816, %v2817
      %v2819 = vrot.slane %v2818, 1
      %v2820 = vadd.f32 %v2818, %v2819
      %v2821 = vsel %vm1287, %v2715, 0.0
      %v2822 = vrot.slane %v2821, 4
      %v2823 = vadd.f32 %v2821, %v2822
      %v2824 = vrot.slane %v2823, 2
      %v2825 = vadd.f32 %v2823, %v2824
      %v2826 = vrot.slane %v2825, 1
      %v2827 = vadd.f32 %v2825, %v2826
      %vm2844 = vcmask 1041409
      %v2845 = vsel %vm2844, %v2729, %v2722
      %vm2846 = vcmask 1042434
      %v2847 = vsel %vm2846, %v2736, %v2845
      %vm2848 = vcmask 1043459
      %v2849 = vsel %vm2848, %v2743, %v2847
      %vm2850 = vcmask 1044484
      %v2851 = vsel %vm2850, %v2750, %v2849
      %vm2852 = vcmask 1045509
      %v2853 = vsel %vm2852, %v2757, %v2851
      %vm2854 = vcmask 1046534
      %v2855 = vsel %vm2854, %v2764, %v2853
      %vm2856 = vcmask 1047559
      %v2857 = vsel %vm2856, %v2771, %v2855
      %v2858 = vsel %vm2844, %v2785, %v2778
      %v2859 = vsel %vm2846, %v2792, %v2858
      %v2860 = vsel %vm2848, %v2799, %v2859
      %v2861 = vsel %vm2850, %v2806, %v2860
      %v2862 = vsel %vm2852, %v2813, %v2861
      %v2863 = vsel %vm2854, %v2820, %v2862
      %v2864 = vsel %vm2856, %v2827, %v2863
      %v2865 = vsel %vm1287, %v2857, 0
      %v2867 = vsel %vm1287, %v2864, 0
      %2869 = vmatprep.subr.mxu0 0.0
      %2870 = vmatpush1.msra.mxu0 0.0
      %2871 = vmatprep.subr.mxu0 0.0
      %2872 = vmatpush1.msra.mxu0 0.0
      %2873 = vmatprep.subr.mxu0 0.0
      %2874 = vmatpush1.msra.mxu0 0.0
      %2875 = vmatprep.subr.mxu0 0.0
      %2876 = vmatpush1.msra.mxu0 0.0
      %2877 = vmatprep.subr.mxu0 0.0
      %2878 = vmatpush1.msra.mxu0 0.0
      %2879 = vmatprep.subr.mxu0 0.0
      %2880 = vmatpush1.msra.mxu0 0.0
      %2881 = vmatprep.subr.mxu0 0.0
      %2882 = vmatpush1.msra.mxu0 0.0
      %2883 = vmatprep.subr.mxu0 0.0
      %2884 = vmatpush1.msra.mxu0 0.0
      %2885 = vmatprep.subr.mxu0 0.0
      %2886 = vmatpush1.msra.mxu0 0.0
      %2887 = vmatprep.subr.mxu0 0.0
      %2888 = vmatpush1.msra.mxu0 0.0
      %2889 = vmatprep.subr.mxu0 0.0
      %2890 = vmatpush1.msra.mxu0 0.0
      %2891 = vmatprep.subr.mxu0 0.0
      %2892 = vmatpush1.msra.mxu0 0.0
      %2893 = vmatprep.subr.mxu0 0.0
      %2894 = vmatpush1.msra.mxu0 0.0
      %2895 = vmatprep.subr.mxu0 0.0
      %2896 = vmatpush1.msra.mxu0 0.0
      %2897 = vmatprep.subr.mxu0 0.0
      %2898 = vmatpush1.msra.mxu0 %v1285
      %2899 = vmatprep.subr.mxu0 0.0
      %2900 = vmatpush1.msra.mxu0 %v1284
      %2901 = vmatprep.subr.mxu0 0.0
      %2902 = vmatpush2.msra.mxu0 0.0
      %2903 = vmatprep.subr.mxu0 0.0
      %2904 = vmatpush2.msra.mxu0 0.0
      %2905 = vmatprep.subr.mxu0 0.0
      %2906 = vmatpush2.msra.mxu0 0.0
      %2907 = vmatprep.subr.mxu0 0.0
      %2908 = vmatpush2.msra.mxu0 0.0
      %2909 = vmatprep.subr.mxu0 0.0
      %2910 = vmatpush2.msra.mxu0 0.0
      %2911 = vmatprep.subr.mxu0 0.0
      %2912 = vmatpush2.msra.mxu0 0.0
      %2913 = vmatprep.subr.mxu0 0.0
      %2914 = vmatpush2.msra.mxu0 0.0
      %2915 = vmatprep.subr.mxu0 0.0
      %2916 = vmatpush2.msra.mxu0 0.0
      %2917 = vmatprep.subr.mxu0 0.0
      %2918 = vmatpush2.msra.mxu0 0.0
      %2919 = vmatprep.subr.mxu0 0.0
      %2920 = vmatpush2.msra.mxu0 0.0
      %2921 = vmatprep.subr.mxu0 0.0
      %2922 = vmatpush2.msra.mxu0 0.0
      %2923 = vmatprep.subr.mxu0 0.0
      %2924 = vmatpush2.msra.mxu0 0.0
      %2925 = vmatprep.subr.mxu0 0.0
      %2926 = vmatpush2.msra.mxu0 0.0
      %2927 = vmatprep.subr.mxu0 0.0
      %2928 = vmatpush2.msra.mxu0 0.0
      %2929 = vmatprep.subr.mxu0 0.0
      %2930 = vmatpush2.msra.mxu0 0.0
      %2931 = vmatprep.subr.mxu0 0.0
      %2932 = vmatpush2.msra.mxu0 0.0
      %2933 = vmatprep.mubr.f32.mxu0 0.0
      %2934 = vmatmul.mubr.f32.gmra.mxu0 %v2865
      %v2935 = vpop.f32.mrf.mxu0
      %v2936 = vadd.f32 0.0, %v2935
      %v2937 = vpop.f32.mrf.mxu0
      %2938 = vmatprep.mubr.f32.mxu0 0.0
      %2939 = vmatmul.mubr.f32.gmra.mxu0 %v2867
      %v2940 = vpop.f32.mrf.mxu0
      %v2941 = vadd.f32 0.0, %v2940
      %v2942 = vpop.f32.mrf.mxu0
      %2943 = vdwg.mxu0
      %v2960 = vsel %vm2844, %v2601, %v2594
      %v2961 = vsel %vm2846, %v2608, %v2960
      %v2962 = vsel %vm2848, %v2615, %v2961
      %v2963 = vsel %vm2850, %v2622, %v2962
      %v2964 = vsel %vm2852, %v2629, %v2963
      %v2965 = vsel %vm2854, %v2636, %v2964
      %v2966 = vsel %vm2856, %v2643, %v2965
      %v2967 = vsel %vm2844, %v2657, %v2650
      %v2968 = vsel %vm2846, %v2664, %v2967
      %v2969 = vsel %vm2848, %v2671, %v2968
      %v2970 = vsel %vm2850, %v2678, %v2969
      %v2971 = vsel %vm2852, %v2685, %v2970
      %v2972 = vsel %vm2854, %v2692, %v2971
      %v2973 = vsel %vm2856, %v2699, %v2972
      %v2974 = vsel %vm1287, %v2966, 0
      %v2976 = vsel %vm1287, %v2973, 0
      %2978 = vmatprep.subr.mxu0 0.0
      %2979 = vmatpush1.msra.mxu0 0.0
      %2980 = vmatprep.subr.mxu0 0.0
      %2981 = vmatpush1.msra.mxu0 0.0
      %2982 = vmatprep.subr.mxu0 0.0
      %2983 = vmatpush1.msra.mxu0 0.0
      %2984 = vmatprep.subr.mxu0 0.0
      %2985 = vmatpush1.msra.mxu0 0.0
      %2986 = vmatprep.subr.mxu0 0.0
      %2987 = vmatpush1.msra.mxu0 0.0
      %2988 = vmatprep.subr.mxu0 0.0
      %2989 = vmatpush1.msra.mxu0 0.0
      %2990 = vmatprep.subr.mxu0 0.0
      %2991 = vmatpush1.msra.mxu0 0.0
      %2992 = vmatprep.subr.mxu0 0.0
      %2993 = vmatpush1.msra.mxu0 0.0
      %2994 = vmatprep.subr.mxu0 0.0
      %2995 = vmatpush1.msra.mxu0 0.0
      %2996 = vmatprep.subr.mxu0 0.0
      %2997 = vmatpush1.msra.mxu0 0.0
      %2998 = vmatprep.subr.mxu0 0.0
      %2999 = vmatpush1.msra.mxu0 0.0
      %3000 = vmatprep.subr.mxu0 0.0
      %3001 = vmatpush1.msra.mxu0 0.0
      %3002 = vmatprep.subr.mxu0 0.0
      %3003 = vmatpush1.msra.mxu0 0.0
      %3004 = vmatprep.subr.mxu0 0.0
      %3005 = vmatpush1.msra.mxu0 0.0
      %3006 = vmatprep.subr.mxu0 0.0
      %3007 = vmatpush1.msra.mxu0 %v1283
      %3008 = vmatprep.subr.mxu0 0.0
      %3009 = vmatpush1.msra.mxu0 %v1282
      %3010 = vmatprep.subr.mxu0 0.0
      %3011 = vmatpush2.msra.mxu0 0.0
      %3012 = vmatprep.subr.mxu0 0.0
      %3013 = vmatpush2.msra.mxu0 0.0
      %3014 = vmatprep.subr.mxu0 0.0
      %3015 = vmatpush2.msra.mxu0 0.0
      %3016 = vmatprep.subr.mxu0 0.0
      %3017 = vmatpush2.msra.mxu0 0.0
      %3018 = vmatprep.subr.mxu0 0.0
      %3019 = vmatpush2.msra.mxu0 0.0
      %3020 = vmatprep.subr.mxu0 0.0
      %3021 = vmatpush2.msra.mxu0 0.0
      %3022 = vmatprep.subr.mxu0 0.0
      %3023 = vmatpush2.msra.mxu0 0.0
      %3024 = vmatprep.subr.mxu0 0.0
      %3025 = vmatpush2.msra.mxu0 0.0
      %3026 = vmatprep.subr.mxu0 0.0
      %3027 = vmatpush2.msra.mxu0 0.0
      %3028 = vmatprep.subr.mxu0 0.0
      %3029 = vmatpush2.msra.mxu0 0.0
      %3030 = vmatprep.subr.mxu0 0.0
      %3031 = vmatpush2.msra.mxu0 0.0
      %3032 = vmatprep.subr.mxu0 0.0
      %3033 = vmatpush2.msra.mxu0 0.0
      %3034 = vmatprep.subr.mxu0 0.0
      %3035 = vmatpush2.msra.mxu0 0.0
      %3036 = vmatprep.subr.mxu0 0.0
      %3037 = vmatpush2.msra.mxu0 0.0
      %3038 = vmatprep.subr.mxu0 0.0
      %3039 = vmatpush2.msra.mxu0 0.0
      %3040 = vmatprep.subr.mxu0 0.0
      %3041 = vmatpush2.msra.mxu0 0.0
      %3042 = vmatprep.mubr.f32.mxu0 0.0
      %3043 = vmatmul.mubr.f32.gmra.mxu0 %v2974
      %v3044 = vpop.f32.mrf.mxu0
      %v3045 = vadd.f32 %v2936, %v3044
      %v3046 = vpop.f32.mrf.mxu0
      %3047 = vmatprep.mubr.f32.mxu0 0.0
      %3048 = vmatmul.mubr.f32.gmra.mxu0 %v2976
      %v3049 = vpop.f32.mrf.mxu0
      %v3050 = vadd.f32 %v2941, %v3049
      %v3051 = vpop.f32.mrf.mxu0
      %3052 = vdwg.mxu0
      %v3054 = vlaneseq
      %v3055 = vshrl.u32 %v3054, 7
      %v3056 = vsub.s32 0, %v3055
      %v3057 = vrot.slane %v1286, %v3056
      %v3059 = vadd.f32 %v3045, %v3057
      %v3060 = vadd.f32 %v3050, %v3057
      %v3061 = vmax.f32 %v3059, 0.0
      %v3062 = vmax.f32 %v3060, 0.0
      %3063 = vst.msk [vmem:[%s415] sm:$0xff] %vm1287, %v3061
      %3064 = vst.msk [vmem:[%s415 + $0x8] sm:$0xff] %vm1287, %v3062
      %s3065 = smul.u32 2, %s24
      %p3066 = scmp.lt.s32.totalorder %s23, 1
      %s3067 = scalar_select %p3066, %s23, 1
      %p3068 = scmp.lt.s32.totalorder %s3065, 1
      %s3069 = scalar_select %p3068, %s3065, 1
      %s3070 = smul.addr %s3067, 2
      %s3071 = sadd.s32 %s3069, %s3070
      %s3072 = smul.addr %s3071, 8
      %s3073 = scalar_lea.vmem %s8, %s3072
      // Predicated region
      $region53: #{building_block_forward.2} parent=51 // pred_check
        %p3074 = pneg %p240
      $region54: #{building_block_forward.2} parent=51 // pred_check_branch
        %3076 = sbr.rel (%p3074) target = $region56
      $region55: #{building_block_forward.2} parent=51 // pred_region
        %s3077 = smul.u32 2, %s24
      $region56: #{building_block_forward.2} parent=51 // pred_fallthru
        _
    $region52: #{building_block_forward.2} parent=5 // pred_fallthru
      _
    %p3078 = scmp.le.s32.totalorder 2, %s14
    // Predicated region
    $region57: #{building_block_forward.2} parent=5 // pred_check
      %p3079 = pneg %p3078
    $region58: #{building_block_forward.2} parent=5 // pred_check_branch
      %3081 = sbr.rel (%p3079) target = $region60
    $region59: #{building_block_forward.2} parent=5 // pred_region
      %s3082 = ssub.s32 %s14, 2
      // Predicated region
      $region61: #{building_block_forward.2} parent=59 // pred_check
        %p3083 = pneg %p246
      $region62: #{building_block_forward.2} parent=59 // pred_check_branch
        %3085 = sbr.rel (%p3083) target = $region64
      $region63: #{building_block_forward.2} parent=59 // pred_region
        %s3086 = smul.u32 2, %s26
        %p3087 = scmp.lt.s32.totalorder %s25, 1
        %s3088 = scalar_select %p3087, %s25, 1
        %p3089 = scmp.lt.s32.totalorder %s3086, 1
        %s3090 = scalar_select %p3089, %s3086, 1
        %s3091 = smul.addr %s3088, 2
        %s3092 = sadd.s32 %s3090, %s3091
        %s3093 = smul.addr %s3092, 8
        %s3094 = scalar_lea.vmem %s8, %s3093
      $region64: #{building_block_forward.2} parent=59 // pred_fallthru
        _
    $region60: #{building_block_forward.2} parent=5 // pred_fallthru
      _
  $region6: #{building_block_forward.2} parent=0 // loop_footer
    %s18 = sadd.s32 1, %s14
  $region7: #{building_block_forward.2} parent=0 // loop_footer_branch
    %13 = sbr.rel target = $region3
  $region8: #{building_block_forward.2} parent=0 // loop_exit
    _

// kernel: building_block_forward.3
$region0: #{building_block_forward.3}
  #allocation0 [shape = 'u32[]', space=smem, size = 0x4, offset = 0x4, fixed_abs, tag = 'smem constant byte address 0x4 - core index']
  #allocation1 [shape = 'u32[144,128]{1,0:T(1,128)}', space=vmem, size = 0x12000, scoped, tag = 'internal scratch']
  %s0 = inlined_call_operand.vmem [shape: f32[2,16,3], index: 0, kind: input, shape index: {}]
  %s1 = inlined_call_operand.vmem [shape: f32[2,16,8,3], index: 1, kind: input, shape index: {}]
  %s2 = inlined_call_operand.vmem [shape: f32[2,16,8,16], index: 2, kind: input, shape index: {}]
  %s3 = inlined_call_operand.vmem [shape: f32[10,16], index: 3, kind: input, shape index: {}]
  %s4 = inlined_call_operand.vmem [shape: f32[1,16], index: 4, kind: input, shape index: {}]
  %s5 = inlined_call_operand.vmem [shape: f32[16,16], index: 5, kind: input, shape index: {}]
  %s6 = inlined_call_operand.vmem [shape: f32[1,16], index: 6, kind: input, shape index: {}]
  %s7 = inlined_call_operand.vmem [shape: f32[4,16,16], index: 7, kind: input, shape index: {}]
  %s8 = inlined_call_operand.vmem [shape: f32[2,16,32], index: 8, kind: input, shape index: {}]
  %s9 = inlined_call_operand.vmem [shape: f32[1,32], index: 9, kind: input, shape index: {}]
  %s10 = inlined_call_operand.hbm [shape: f32[2,16,32], index: 10, kind: output, shape index: {}]
  %s11 = sld [smem:[#allocation0]]
  $region73: #{building_block_forward.3} parent=0
    _
  %s13 = ssub.s32 1, %s11
  %s14 = scalar_select 0, %s13, %s11
  $region1: #{building_block_forward.3} parent=0
    #allocation2 [shape = 'u8[16384]{0}', space=vmem, size = 0x4000, scoped, tag = 'output window, operand 0']
    #allocation3 [shape = 's32[2]{0}', space=sflag, size = 0x8, scoped, tag = 'scoped memory for building_block_forward.3']
    %15 = vsyncpa [#allocation3], 0
    %s16 = scalar_lea.sflag [#allocation3], 1
    %17 = vsyncpa %s16, 0
    loop: start=0, step=1, limit=4
    $region2: #{building_block_forward.3} parent=1 // loop_pre_header
      _
    $region3: #{building_block_forward.3} parent=1 // loop_header
      %s19 = sphi 0, %s23
      %p20 = scmp.ge.s32.totalorder %s19, 4
      %s26 = sphi 0, %s38
      %s27 = sphi 0, %s34
      %s28 = sphi 0, %s26
      %s29 = sphi 0, %s27
      %s30 = sphi 0, %s28
      %s31 = sphi 0, %s29
      %s43 = sphi 0, %s45
      %s46 = sphi 0, %s43
      %s47 = sphi 0, %s46
      %s63 = sphi 0, %s47
      %s71 = sphi 0, %s73
      %s74 = sphi 0, %s71
      %s75 = sphi 0, %s74
      %s91 = sphi 0, %s75
      %s99 = sphi 0, %s101
      %s102 = sphi 0, %s99
      %s103 = sphi 0, %s102
      %s119 = sphi 0, %s103
      %s123 = sphi 0, %s123
      %s125 = sphi 0, %s123
      %s126 = sphi 0, %s125
      %s140 = sphi 0, %s126
      %s144 = sphi 0, %s144
      %s146 = sphi 0, %s144
      %s147 = sphi 0, %s146
      %s161 = sphi 0, %s147
      %s165 = sphi 0, %s165
      %s167 = sphi 0, %s165
      %s168 = sphi 0, %s167
      %s182 = sphi 0, %s168
      %s186 = sphi 0, %s186
      %s188 = sphi 0, %s186
      %s189 = sphi 0, %s188
      %s203 = sphi 0, %s189
      %s207 = sphi 0, %s207
      %s209 = sphi 0, %s207
      %s210 = sphi 0, %s209
      %s224 = sphi 0, %s210
      %s228 = sphi 0, %s228
      %s230 = sphi 0, %s228
      %s231 = sphi 0, %s230
      %s245 = sphi 0, %s231
      %s249 = sphi 0, %s249
      %s251 = sphi 0, %s249
      %s252 = sphi 0, %s251
      %s266 = sphi 0, %s252
      %s274 = sphi 0, %s276
      %s277 = sphi 0, %s274
      %s278 = sphi 0, %s277
      %s294 = sphi 0, %s278
    $region4: #{building_block_forward.3} parent=1 // loop_header_branch
      %22 = sbr.rel (%p20) target = $region8
    $region5: #{building_block_forward.3} parent=1 // loop_body
      %s24 = ssub.s32 %s19, 1
      %s25 = ssub.s32 %s19, 2
      %s32 = sadd.s32 1, %s27
      %p33 = scmp.ge.s32.totalorder %s32, 1
      %s34 = scalar_select %p33, 0, %s32
      %s35 = sadd.s32 1, %s26
      %s36 = scalar_select %p33, %s35, %s26
      %p37 = scmp.ge.s32.totalorder %s36, 2
      %s38 = scalar_select %p37, 0, %s36
      %s39 = ssub.s32 %s26, %s38
      %s40 = ssub.s32 %s27, %s34
      %s41 = sor.u32 %s39, %s40
      %p42 = scmp.eq.s32.totalorder %s41, 0
      %s44 = sadd.s32 %s43, 1
      %s45 = scalar_select %p42, %s43, %s44
      %p48 = pneg %p42
      %p49 = scmp.eq.s32.totalorder %s19, 1
      %p50 = por %p48, %p49
      %p51 = scmp.ne.s32.totalorder %s43, %s46
      %p52 = scmp.eq.s32.totalorder %s19, 0
      %p53 = por %p51, %p52
      %p54 = scmp.ne.s32.totalorder %s43, %s46
      %p55 = scmp.eq.s32.totalorder %s24, 1
      %p56 = por %p54, %p55
      %p57 = scmp.ne.s32.totalorder %s46, %s47
      %p58 = scmp.eq.s32.totalorder %s24, 0
      %p59 = por %p57, %p58
      %p60 = scmp.ne.s32.totalorder %s46, %s47
      %p61 = scmp.eq.s32.totalorder %s25, 1
      %p62 = por %p60, %p61
      %p64 = scmp.ne.s32.totalorder %s47, %s63
      %p65 = scmp.eq.s32.totalorder %s25, 0
      %p66 = por %p64, %p65
      %s67 = ssub.s32 %s26, %s38
      %s68 = ssub.s32 %s27, %s34
      %s69 = sor.u32 %s67, %s68
      %p70 = scmp.eq.s32.totalorder %s69, 0
      %s72 = sadd.s32 %s71, 1
      %s73 = scalar_select %p70, %s71, %s72
      %p76 = pneg %p70
      %p77 = scmp.eq.s32.totalorder %s19, 1
      %p78 = por %p76, %p77
      %p79 = scmp.ne.s32.totalorder %s71, %s74
      %p80 = scmp.eq.s32.totalorder %s19, 0
      %p81 = por %p79, %p80
      %p82 = scmp.ne.s32.totalorder %s71, %s74
      %p83 = scmp.eq.s32.totalorder %s24, 1
      %p84 = por %p82, %p83
      %p85 = scmp.ne.s32.totalorder %s74, %s75
      %p86 = scmp.eq.s32.totalorder %s24, 0
      %p87 = por %p85, %p86
      %p88 = scmp.ne.s32.totalorder %s74, %s75
      %p89 = scmp.eq.s32.totalorder %s25, 1
      %p90 = por %p88, %p89
      %p92 = scmp.ne.s32.totalorder %s75, %s91
      %p93 = scmp.eq.s32.totalorder %s25, 0
      %p94 = por %p92, %p93
      %s95 = ssub.s32 %s26, %s38
      %s96 = ssub.s32 %s27, %s34
      %s97 = sor.u32 %s95, %s96
      %p98 = scmp.eq.s32.totalorder %s97, 0
      %s100 = sadd.s32 %s99, 1
      %s101 = scalar_select %p98, %s99, %s100
      %p104 = pneg %p98
      %p105 = scmp.eq.s32.totalorder %s19, 1
      %p106 = por %p104, %p105
      %p107 = scmp.ne.s32.totalorder %s99, %s102
      %p108 = scmp.eq.s32.totalorder %s19, 0
      %p109 = por %p107, %p108
      %p110 = scmp.ne.s32.totalorder %s99, %s102
      %p111 = scmp.eq.s32.totalorder %s24, 1
      %p112 = por %p110, %p111
      %p113 = scmp.ne.s32.totalorder %s102, %s103
      %p114 = scmp.eq.s32.totalorder %s24, 0
      %p115 = por %p113, %p114
      %p116 = scmp.ne.s32.totalorder %s102, %s103
      %p117 = scmp.eq.s32.totalorder %s25, 1
      %p118 = por %p116, %p117
      %p120 = scmp.ne.s32.totalorder %s103, %s119
      %p121 = scmp.eq.s32.totalorder %s25, 0
      %p122 = por %p120, %p121
      %s124 = sadd.s32 %s123, 1
      %p127 = scmp.eq.s32.totalorder %s19, 1
      %p128 = scmp.ne.s32.totalorder %s123, %s125
      %p129 = scmp.eq.s32.totalorder %s19, 0
      %p130 = por %p128, %p129
      %p131 = scmp.ne.s32.totalorder %s123, %s125
      %p132 = scmp.eq.s32.totalorder %s24, 1
      %p133 = por %p131, %p132
      %p134 = scmp.ne.s32.totalorder %s125, %s126
      %p135 = scmp.eq.s32.totalorder %s24, 0
      %p136 = por %p134, %p135
      %p137 = scmp.ne.s32.totalorder %s125, %s126
      %p138 = scmp.eq.s32.totalorder %s25, 1
      %p139 = por %p137, %p138
      %p141 = scmp.ne.s32.totalorder %s126, %s140
      %p142 = scmp.eq.s32.totalorder %s25, 0
      %p143 = por %p141, %p142
      %s145 = sadd.s32 %s144, 1
      %p148 = scmp.eq.s32.totalorder %s19, 1
      %p149 = scmp.ne.s32.totalorder %s144, %s146
      %p150 = scmp.eq.s32.totalorder %s19, 0
      %p151 = por %p149, %p150
      %p152 = scmp.ne.s32.totalorder %s144, %s146
      %p153 = scmp.eq.s32.totalorder %s24, 1
      %p154 = por %p152, %p153
      %p155 = scmp.ne.s32.totalorder %s146, %s147
      %p156 = scmp.eq.s32.totalorder %s24, 0
      %p157 = por %p155, %p156
      %p158 = scmp.ne.s32.totalorder %s146, %s147
      %p159 = scmp.eq.s32.totalorder %s25, 1
      %p160 = por %p158, %p159
      %p162 = scmp.ne.s32.totalorder %s147, %s161
      %p163 = scmp.eq.s32.totalorder %s25, 0
      %p164 = por %p162, %p163
      %s166 = sadd.s32 %s165, 1
      %p169 = scmp.eq.s32.totalorder %s19, 1
      %p170 = scmp.ne.s32.totalorder %s165, %s167
      %p171 = scmp.eq.s32.totalorder %s19, 0
      %p172 = por %p170, %p171
      %p173 = scmp.ne.s32.totalorder %s165, %s167
      %p174 = scmp.eq.s32.totalorder %s24, 1
      %p175 = por %p173, %p174
      %p176 = scmp.ne.s32.totalorder %s167, %s168
      %p177 = scmp.eq.s32.totalorder %s24, 0
      %p178 = por %p176, %p177
      %p179 = scmp.ne.s32.totalorder %s167, %s168
      %p180 = scmp.eq.s32.totalorder %s25, 1
      %p181 = por %p179, %p180
      %p183 = scmp.ne.s32.totalorder %s168, %s182
      %p184 = scmp.eq.s32.totalorder %s25, 0
      %p185 = por %p183, %p184
      %s187 = sadd.s32 %s186, 1
      %p190 = scmp.eq.s32.totalorder %s19, 1
      %p191 = scmp.ne.s32.totalorder %s186, %s188
      %p192 = scmp.eq.s32.totalorder %s19, 0
      %p193 = por %p191, %p192
      %p194 = scmp.ne.s32.totalorder %s186, %s188
      %p195 = scmp.eq.s32.totalorder %s24, 1
      %p196 = por %p194, %p195
      %p197 = scmp.ne.s32.totalorder %s188, %s189
      %p198 = scmp.eq.s32.totalorder %s24, 0
      %p199 = por %p197, %p198
      %p200 = scmp.ne.s32.totalorder %s188, %s189
      %p201 = scmp.eq.s32.totalorder %s25, 1
      %p202 = por %p200, %p201
      %p204 = scmp.ne.s32.totalorder %s189, %s203
      %p205 = scmp.eq.s32.totalorder %s25, 0
      %p206 = por %p204, %p205
      %s208 = sadd.s32 %s207, 1
      %p211 = scmp.eq.s32.totalorder %s19, 1
      %p212 = scmp.ne.s32.totalorder %s207, %s209
      %p213 = scmp.eq.s32.totalorder %s19, 0
      %p214 = por %p212, %p213
      %p215 = scmp.ne.s32.totalorder %s207, %s209
      %p216 = scmp.eq.s32.totalorder %s24, 1
      %p217 = por %p215, %p216
      %p218 = scmp.ne.s32.totalorder %s209, %s210
      %p219 = scmp.eq.s32.totalorder %s24, 0
      %p220 = por %p218, %p219
      %p221 = scmp.ne.s32.totalorder %s209, %s210
      %p222 = scmp.eq.s32.totalorder %s25, 1
      %p223 = por %p221, %p222
      %p225 = scmp.ne.s32.totalorder %s210, %s224
      %p226 = scmp.eq.s32.totalorder %s25, 0
      %p227 = por %p225, %p226
      %s229 = sadd.s32 %s228, 1
      %p232 = scmp.eq.s32.totalorder %s19, 1
      %p233 = scmp.ne.s32.totalorder %s228, %s230
      %p234 = scmp.eq.s32.totalorder %s19, 0
      %p235 = por %p233, %p234
      %p236 = scmp.ne.s32.totalorder %s228, %s230
      %p237 = scmp.eq.s32.totalorder %s24, 1
      %p238 = por %p236, %p237
      %p239 = scmp.ne.s32.totalorder %s230, %s231
      %p240 = scmp.eq.s32.totalorder %s24, 0
      %p241 = por %p239, %p240
      %p242 = scmp.ne.s32.totalorder %s230, %s231
      %p243 = scmp.eq.s32.totalorder %s25, 1
      %p244 = por %p242, %p243
      %p246 = scmp.ne.s32.totalorder %s231, %s245
      %p247 = scmp.eq.s32.totalorder %s25, 0
      %p248 = por %p246, %p247
      %s250 = sadd.s32 %s249, 1
      %p253 = scmp.eq.s32.totalorder %s19, 1
      %p254 = scmp.ne.s32.totalorder %s249, %s251
      %p255 = scmp.eq.s32.totalorder %s19, 0
      %p256 = por %p254, %p255
      %p257 = scmp.ne.s32.totalorder %s249, %s251
      %p258 = scmp.eq.s32.totalorder %s24, 1
      %p259 = por %p257, %p258
      %p260 = scmp.ne.s32.totalorder %s251, %s252
      %p261 = scmp.eq.s32.totalorder %s24, 0
      %p262 = por %p260, %p261
      %p263 = scmp.ne.s32.totalorder %s251, %s252
      %p264 = scmp.eq.s32.totalorder %s25, 1
      %p265 = por %p263, %p264
      %p267 = scmp.ne.s32.totalorder %s252, %s266
      %p268 = scmp.eq.s32.totalorder %s25, 0
      %p269 = por %p267, %p268
      %s270 = ssub.s32 %s26, %s38
      %s271 = ssub.s32 %s27, %s34
      %s272 = sor.u32 %s270, %s271
      %p273 = scmp.eq.s32.totalorder %s272, 0
      %s275 = sadd.s32 %s274, 1
      %s276 = scalar_select %p273, %s274, %s275
      %p279 = pneg %p273
      %p280 = scmp.eq.s32.totalorder %s19, 1
      %p281 = por %p279, %p280
      %p282 = scmp.ne.s32.totalorder %s274, %s277
      %p283 = scmp.eq.s32.totalorder %s19, 0
      %p284 = por %p282, %p283
      %p285 = scmp.ne.s32.totalorder %s274, %s277
      %p286 = scmp.eq.s32.totalorder %s24, 1
      %p287 = por %p285, %p286
      %p288 = scmp.ne.s32.totalorder %s277, %s278
      %p289 = scmp.eq.s32.totalorder %s24, 0
      %p290 = por %p288, %p289
      %p291 = scmp.ne.s32.totalorder %s277, %s278
      %p292 = scmp.eq.s32.totalorder %s25, 1
      %p293 = por %p291, %p292
      %p295 = scmp.ne.s32.totalorder %s278, %s294
      %p296 = scmp.eq.s32.totalorder %s25, 0
      %p297 = por %p295, %p296
      %p298 = scmp.le.s32.totalorder 1, %s19
      %p299 = scmp.lt.s32.totalorder %s19, 3
      %p300 = pnand %p298, %p299
      %p301 = pneg %p300
      // Predicated region
      $region9: #{building_block_forward.3} parent=5 // pred_check
        _
      $region10: #{building_block_forward.3} parent=5 // pred_check_branch
        %303 = sbr.rel (%p300) target = $region12
      $region11: #{building_block_forward.3} parent=5 // pred_region
        %s304 = ssub.s32 %s19, 1
        // Predicated region
        $region13: #{building_block_forward.3} parent=11 // pred_check
          %p305 = pneg %p136
        $region14: #{building_block_forward.3} parent=11 // pred_check_branch
          %307 = sbr.rel (%p305) target = $region16
        $region15: #{building_block_forward.3} parent=11 // pred_region
          _
        $region16: #{building_block_forward.3} parent=11 // pred_fallthru
          _
        // Predicated region
        $region17: #{building_block_forward.3} parent=11 // pred_check
          %p308 = pneg %p157
        $region18: #{building_block_forward.3} parent=11 // pred_check_branch
          %310 = sbr.rel (%p308) target = $region20
        $region19: #{building_block_forward.3} parent=11 // pred_region
          _
        $region20: #{building_block_forward.3} parent=11 // pred_fallthru
          _
        // Predicated region
        $region21: #{building_block_forward.3} parent=11 // pred_check
          %p311 = pneg %p178
        $region22: #{building_block_forward.3} parent=11 // pred_check_branch
          %313 = sbr.rel (%p311) target = $region24
        $region23: #{building_block_forward.3} parent=11 // pred_region
          _
        $region24: #{building_block_forward.3} parent=11 // pred_fallthru
          _
        // Predicated region
        $region25: #{building_block_forward.3} parent=11 // pred_check
          %p314 = pneg %p199
        $region26: #{building_block_forward.3} parent=11 // pred_check_branch
          %316 = sbr.rel (%p314) target = $region28
        $region27: #{building_block_forward.3} parent=11 // pred_region
          _
        $region28: #{building_block_forward.3} parent=11 // pred_fallthru
          _
        // Predicated region
        $region29: #{building_block_forward.3} parent=11 // pred_check
          %p317 = pneg %p220
        $region30: #{building_block_forward.3} parent=11 // pred_check_branch
          %319 = sbr.rel (%p317) target = $region32
        $region31: #{building_block_forward.3} parent=11 // pred_region
          _
        $region32: #{building_block_forward.3} parent=11 // pred_fallthru
          _
        // Predicated region
        $region33: #{building_block_forward.3} parent=11 // pred_check
          %p320 = pneg %p241
        $region34: #{building_block_forward.3} parent=11 // pred_check_branch
          %322 = sbr.rel (%p320) target = $region36
        $region35: #{building_block_forward.3} parent=11 // pred_region
          _
        $region36: #{building_block_forward.3} parent=11 // pred_fallthru
          _
        // Predicated region
        $region37: #{building_block_forward.3} parent=11 // pred_check
          %p323 = pneg %p262
        $region38: #{building_block_forward.3} parent=11 // pred_check_branch
          %325 = sbr.rel (%p323) target = $region40
        $region39: #{building_block_forward.3} parent=11 // pred_region
          _
        $region40: #{building_block_forward.3} parent=11 // pred_fallthru
          _
      $region12: #{building_block_forward.3} parent=5 // pred_fallthru
        _
      %p326 = scmp.lt.s32.totalorder %s19, 2
      // Predicated region
      $region41: #{building_block_forward.3} parent=5 // pred_check
        %p327 = pneg %p326
      $region42: #{building_block_forward.3} parent=5 // pred_check_branch
        %329 = sbr.rel (%p327) target = $region44
      $region43: #{building_block_forward.3} parent=5 // pred_region
        // Predicated region
        $region45: #{building_block_forward.3} parent=43 // pred_check
          %p330 = pneg %p53
        $region46: #{building_block_forward.3} parent=43 // pred_check_branch
          %332 = sbr.rel (%p330) target = $region48
        $region47: #{building_block_forward.3} parent=43 // pred_region
          %s333 = smul.u32 2, %s27
          %p334 = scmp.lt.s32.totalorder %s26, 1
          %s335 = scalar_select %p334, %s26, 1
          %p336 = scmp.lt.s32.totalorder %s333, 1
          %s337 = scalar_select %p336, %s333, 1
          %s338 = smul.addr %s335, 2
          %s339 = sadd.s32 %s337, %s338
          %s340 = smul.addr %s339, 8
          %s341 = scalar_lea.vmem %s0, %s340
          %s342 = smul.u32 2, %s27
        $region48: #{building_block_forward.3} parent=43 // pred_fallthru
          _
        // Predicated region
        $region49: #{building_block_forward.3} parent=43 // pred_check
          %p343 = pneg %p81
        $region50: #{building_block_forward.3} parent=43 // pred_check_branch
          %345 = sbr.rel (%p343) target = $region52
        $region51: #{building_block_forward.3} parent=43 // pred_region
          %s346 = smul.u32 16, %s27
          %p347 = scmp.lt.s32.totalorder %s26, 1
          %s348 = scalar_select %p347, %s26, 1
          %p349 = scmp.lt.s32.totalorder %s346, 15
          %s350 = scalar_select %p349, %s346, 15
          %s351 = smul.addr %s348, 16
          %s352 = sadd.s32 %s350, %s351
          %s353 = smul.addr %s352, 8
          %s354 = scalar_lea.vmem %s1, %s353
          %s355 = smul.u32 16, %s27
        $region52: #{building_block_forward.3} parent=43 // pred_fallthru
          _
        // Predicated region
        $region53: #{building_block_forward.3} parent=43 // pred_check
          %p356 = pneg %p109
        $region54: #{building_block_forward.3} parent=43 // pred_check_branch
          %358 = sbr.rel (%p356) target = $region56
        $region55: #{building_block_forward.3} parent=43 // pred_region
          %s359 = smul.u32 16, %s27
          %p360 = scmp.lt.s32.totalorder %s26, 1
          %s361 = scalar_select %p360, %s26, 1
          %p362 = scmp.lt.s32.totalorder %s359, 15
          %s363 = scalar_select %p362, %s359, 15
          %s364 = smul.addr %s361, 16
          %s365 = sadd.s32 %s363, %s364
          %s366 = smul.addr %s365, 8
          %s367 = scalar_lea.vmem %s2, %s366
          %s368 = smul.u32 16, %s27
        $region56: #{building_block_forward.3} parent=43 // pred_fallthru
          _
      $region44: #{building_block_forward.3} parent=5 // pred_fallthru
        _
      %p369 = scmp.le.s32.totalorder 1, %s19
      %p370 = scmp.lt.s32.totalorder %s19, 3
      %p371 = pnand %p369, %p370
      %p372 = pneg %p371
      // Predicated region
      $region57: #{building_block_forward.3} parent=5 // pred_check
        _
      $region58: #{building_block_forward.3} parent=5 // pred_check_branch
        %374 = sbr.rel (%p371) target = $region60
      $region59: #{building_block_forward.3} parent=5 // pred_region
        %s375 = ssub.s32 %s19, 1
        %s376 = smul.u32 2, %s29
        %p377 = scmp.lt.s32.totalorder %s28, 1
        %s378 = scalar_select %p377, %s28, 1
        %p379 = scmp.lt.s32.totalorder %s376, 1
        %s380 = scalar_select %p379, %s376, 1
        %s381 = smul.addr %s378, 2
        %s382 = sadd.s32 %s380, %s381
        %s383 = smul.addr %s382, 8
        %s384 = scalar_lea.vmem %s0, %s383
        %p385 = pneg %p59
        %p386 = pneg %p56
        %s387 = smul.u32 16, %s29
        %p388 = scmp.lt.s32.totalorder %s28, 1
        %s389 = scalar_select %p388, %s28, 1
        %p390 = scmp.lt.s32.totalorder %s387, 15
        %s391 = scalar_select %p390, %s387, 15
        %s392 = smul.addr %s389, 16
        %s393 = sadd.s32 %s391, %s392
        %s394 = smul.addr %s393, 8
        %s395 = scalar_lea.vmem %s1, %s394
        %p396 = pneg %p87
        %p397 = pneg %p84
        %s398 = smul.u32 16, %s29
        %p399 = scmp.lt.s32.totalorder %s28, 1
        %s400 = scalar_select %p399, %s28, 1
        %p401 = scmp.lt.s32.totalorder %s398, 15
        %s402 = scalar_select %p401, %s398, 15
        %s403 = smul.addr %s400, 16
        %s404 = sadd.s32 %s402, %s403
        %s405 = smul.addr %s404, 8
        %s406 = scalar_lea.vmem %s2, %s405
        %p407 = pneg %p115
        %p408 = pneg %p112
        %p409 = pneg %p136
        %p410 = pneg %p133
        %p411 = pneg %p157
        %p412 = pneg %p154
        %p413 = pneg %p178
        %p414 = pneg %p175
        %p415 = pneg %p199
        %p416 = pneg %p196
        %p417 = pneg %p220
        %p418 = pneg %p217
        %p419 = pneg %p241
        %p420 = pneg %p238
        %p421 = pneg %p262
        %p422 = pneg %p259
        %p423 = pneg %p290
        %p424 = pneg %p287
        %s425 = sand.u32 %s277, 1
        %s426 = scalar_lea.sflag [#allocation3], %s425
        %s427 = sand.u32 %s277, 1
        %s428 = smul.addr %s427, 16
        %s429 = scalar_lea.vmem [#allocation2], %s428
        %s430 = smul.u32 2, %s29
        %p431 = scmp.lt.s32.totalorder %s28, 1
        %s432 = scalar_select %p431, %s28, 1
        %p433 = scmp.lt.s32.totalorder %s430, 1
        %s434 = scalar_select %p433, %s430, 1
        %s435 = smul.addr %s432, 2
        %s436 = sadd.s32 %s434, %s435
        %s437 = smul.addr %s436, 8
        %s438 = scalar_lea.vmem %s0, %s437
        %s439 = smul.u32 2, %s29
        %s440 = smul.u32 16, %s29
        %p441 = scmp.lt.s32.totalorder %s28, 1
        %s442 = scalar_select %p441, %s28, 1
        %p443 = scmp.lt.s32.totalorder %s440, 15
        %s444 = scalar_select %p443, %s440, 15
        %s445 = smul.addr %s442, 16
        %s446 = sadd.s32 %s444, %s445
        %s447 = smul.addr %s446, 8
        %s448 = scalar_lea.vmem %s1, %s447
        %s449 = smul.u32 16, %s29
        %s450 = smul.u32 16, %s29
        %p451 = scmp.lt.s32.totalorder %s28, 1
        %s452 = scalar_select %p451, %s28, 1
        %p453 = scmp.lt.s32.totalorder %s450, 15
        %s454 = scalar_select %p453, %s450, 15
        %s455 = smul.addr %s452, 16
        %s456 = sadd.s32 %s454, %s455
        %s457 = smul.addr %s456, 8
        %s458 = scalar_lea.vmem %s2, %s457
        %s459 = smul.u32 16, %s29
        %s460 = smul.u32 2, %s29
        %v461 = vld [vmem:[%s448] sm:$0xff]
        %v462 = vld [vmem:[%s448 + $0x8] sm:$0xff]
        %v463 = vld [vmem:[%s448 + $0x10] sm:$0xff]
        %v464 = vld [vmem:[%s448 + $0x18] sm:$0xff]
        %v465 = vld [vmem:[%s448 + $0x20] sm:$0xff]
        %v466 = vld [vmem:[%s448 + $0x28] sm:$0xff]
        %v467 = vld [vmem:[%s448 + $0x30] sm:$0xff]
        %v468 = vld [vmem:[%s448 + $0x38] sm:$0xff]
        %v469 = vld [vmem:[%s448 + $0x40] sm:$0xff]
        %v470 = vld [vmem:[%s448 + $0x48] sm:$0xff]
        %v471 = vld [vmem:[%s448 + $0x50] sm:$0xff]
        %v472 = vld [vmem:[%s448 + $0x58] sm:$0xff]
        %v473 = vld [vmem:[%s448 + $0x60] sm:$0xff]
        %v474 = vld [vmem:[%s448 + $0x68] sm:$0xff]
        %v475 = vld [vmem:[%s448 + $0x70] sm:$0xff]
        %v476 = vld [vmem:[%s448 + $0x78] sm:$0xff]
        %v477 = vld [vmem:[%s438] sm:$0xff]
        %v478 = vld [vmem:[%s438 + $0x8] sm:$0xff]
        %v479 = vld [vmem:[%s3] sm:$0xff]
        %v480 = vld [vmem:[%s3 + $0x8] sm:$0x3]
        %v481 = vld [vmem:[%s4] sm:$0x1]
        %v484 = vcombine.high %v477, %v477
        %v486 = vunpack.c.l.s4 1966171168
        %v487 = vunpack.c.0.s8 %v486
        %v488 = vlaneseq
        %v489 = vshrl.u32 %v488, 7
        %v490 = vsub.s32 %v487, %v489
        %v491 = vrot.slane %v477, %v490
        %v493 = vunpack.c.l.s4 1966171168
        %v494 = vunpack.c.0.s8 %v493
        %v495 = vlaneseq
        %v496 = vshrl.u32 %v495, 7
        %v497 = vsub.s32 %v494, %v496
        %v498 = vrot.slane %v484, %v497
        %v499 = vcombine.high %v491, %v491
        %v500 = vcombine.high %v498, %v498
        %v502 = vunpack.c.l.s4 1966171168
        %v503 = vunpack.c.0.s8 %v502
        %v504 = vlaneseq
        %v505 = vshrl.u32 %v504, 7
        %v506 = vsub.s32 %v503, %v505
        %v507 = vrot.slane %v491, %v506
        %v509 = vunpack.c.l.s4 1966171168
        %v510 = vunpack.c.0.s8 %v509
        %v511 = vlaneseq
        %v512 = vshrl.u32 %v511, 7
        %v513 = vsub.s32 %v510, %v512
        %v514 = vrot.slane %v498, %v513
        %v516 = vunpack.c.l.s4 1966171168
        %v517 = vunpack.c.0.s8 %v516
        %v518 = vlaneseq
        %v519 = vshrl.u32 %v518, 7
        %v520 = vsub.s32 %v517, %v519
        %v521 = vrot.slane %v499, %v520
        %v523 = vunpack.c.l.s4 1966171168
        %v524 = vunpack.c.0.s8 %v523
        %v525 = vlaneseq
        %v526 = vshrl.u32 %v525, 7
        %v527 = vsub.s32 %v524, %v526
        %v528 = vrot.slane %v500, %v527
        %v529 = vcombine.high %v507, %v507
        %v530 = vcombine.high %v514, %v514
        %v531 = vcombine.high %v521, %v521
        %v532 = vcombine.high %v528, %v528
        %v533 = vcombine.high %v478, %v478
        %v535 = vunpack.c.l.s4 1966171168
        %v536 = vunpack.c.0.s8 %v535
        %v537 = vlaneseq
        %v538 = vshrl.u32 %v537, 7
        %v539 = vsub.s32 %v536, %v538
        %v540 = vrot.slane %v478, %v539
        %v542 = vunpack.c.l.s4 1966171168
        %v543 = vunpack.c.0.s8 %v542
        %v544 = vlaneseq
        %v545 = vshrl.u32 %v544, 7
        %v546 = vsub.s32 %v543, %v545
        %v547 = vrot.slane %v533, %v546
        %v548 = vcombine.high %v540, %v540
        %v549 = vcombine.high %v547, %v547
        %v551 = vunpack.c.l.s4 1966171168
        %v552 = vunpack.c.0.s8 %v551
        %v553 = vlaneseq
        %v554 = vshrl.u32 %v553, 7
        %v555 = vsub.s32 %v552, %v554
        %v556 = vrot.slane %v540, %v555
        %v558 = vunpack.c.l.s4 1966171168
        %v559 = vunpack.c.0.s8 %v558
        %v560 = vlaneseq
        %v561 = vshrl.u32 %v560, 7
        %v562 = vsub.s32 %v559, %v561
        %v563 = vrot.slane %v547, %v562
        %v565 = vunpack.c.l.s4 1966171168
        %v566 = vunpack.c.0.s8 %v565
        %v567 = vlaneseq
        %v568 = vshrl.u32 %v567, 7
        %v569 = vsub.s32 %v566, %v568
        %v570 = vrot.slane %v548, %v569
        %v572 = vunpack.c.l.s4 1966171168
        %v573 = vunpack.c.0.s8 %v572
        %v574 = vlaneseq
        %v575 = vshrl.u32 %v574, 7
        %v576 = vsub.s32 %v573, %v575
        %v577 = vrot.slane %v549, %v576
        %v578 = vcombine.high %v556, %v556
        %v579 = vcombine.high %v563, %v563
        %v580 = vcombine.high %v570, %v570
        %v581 = vcombine.high %v577, %v577
        %v582 = vlaneseq
        %v583 = vshrl.u32 %v582, 7
        %v584 = vsub.s32 0, %v583
        %v585 = vrot.slane %v507, %v584
        %v586 = vlaneseq
        %v587 = vshrl.u32 %v586, 7
        %v588 = vsub.s32 0, %v587
        %v589 = vrot.slane %v521, %v588
        %v590 = vlaneseq
        %v591 = vshrl.u32 %v590, 7
        %v592 = vsub.s32 0, %v591
        %v593 = vrot.slane %v529, %v592
        %v594 = vlaneseq
        %v595 = vshrl.u32 %v594, 7
        %v596 = vsub.s32 0, %v595
        %v597 = vrot.slane %v531, %v596
        %v598 = vlaneseq
        %v599 = vshrl.u32 %v598, 7
        %v600 = vsub.s32 0, %v599
        %v601 = vrot.slane %v514, %v600
        %v602 = vlaneseq
        %v603 = vshrl.u32 %v602, 7
        %v604 = vsub.s32 0, %v603
        %v605 = vrot.slane %v528, %v604
        %v606 = vlaneseq
        %v607 = vshrl.u32 %v606, 7
        %v608 = vsub.s32 0, %v607
        %v609 = vrot.slane %v530, %v608
        %v610 = vlaneseq
        %v611 = vshrl.u32 %v610, 7
        %v612 = vsub.s32 0, %v611
        %v613 = vrot.slane %v532, %v612
        %v614 = vlaneseq
        %v615 = vshrl.u32 %v614, 7
        %v616 = vsub.s32 0, %v615
        %v617 = vrot.slane %v556, %v616
        %v618 = vlaneseq
        %v619 = vshrl.u32 %v618, 7
        %v620 = vsub.s32 0, %v619
        %v621 = vrot.slane %v570, %v620
        %v622 = vlaneseq
        %v623 = vshrl.u32 %v622, 7
        %v624 = vsub.s32 0, %v623
        %v625 = vrot.slane %v578, %v624
        %v626 = vlaneseq
        %v627 = vshrl.u32 %v626, 7
        %v628 = vsub.s32 0, %v627
        %v629 = vrot.slane %v580, %v628
        %v630 = vlaneseq
        %v631 = vshrl.u32 %v630, 7
        %v632 = vsub.s32 0, %v631
        %v633 = vrot.slane %v563, %v632
        %v634 = vlaneseq
        %v635 = vshrl.u32 %v634, 7
        %v636 = vsub.s32 0, %v635
        %v637 = vrot.slane %v577, %v636
        %v638 = vlaneseq
        %v639 = vshrl.u32 %v638, 7
        %v640 = vsub.s32 0, %v639
        %v641 = vrot.slane %v579, %v640
        %v642 = vlaneseq
        %v643 = vshrl.u32 %v642, 7
        %v644 = vsub.s32 0, %v643
        %v645 = vrot.slane %v581, %v644
        %v662 = vsub.f32 %v585, %v461
        %v663 = vsub.f32 %v589, %v462
        %v664 = vsub.f32 %v593, %v463
        %v665 = vsub.f32 %v597, %v464
        %v666 = vsub.f32 %v601, %v465
        %v667 = vsub.f32 %v605, %v466
        %v668 = vsub.f32 %v609, %v467
        %v669 = vsub.f32 %v613, %v468
        %v670 = vsub.f32 %v617, %v469
        %v671 = vsub.f32 %v621, %v470
        %v672 = vsub.f32 %v625, %v471
        %v673 = vsub.f32 %v629, %v472
        %v674 = vsub.f32 %v633, %v473
        %v675 = vsub.f32 %v637, %v474
        %v676 = vsub.f32 %v641, %v475
        %v677 = vsub.f32 %v645, %v476
        %v678 = vmul.f32 %v662, %v662
        %v679 = vmul.f32 %v663, %v663
        %v680 = vmul.f32 %v664, %v664
        %v681 = vmul.f32 %v665, %v665
        %v682 = vmul.f32 %v666, %v666
        %v683 = vmul.f32 %v667, %v667
        %v684 = vmul.f32 %v668, %v668
        %v685 = vmul.f32 %v669, %v669
        %v686 = vmul.f32 %v670, %v670
        %v687 = vmul.f32 %v671, %v671
        %v688 = vmul.f32 %v672, %v672
        %v689 = vmul.f32 %v673, %v673
        %v690 = vmul.f32 %v674, %v674
        %v691 = vmul.f32 %v675, %v675
        %v692 = vmul.f32 %v676, %v676
        %v693 = vmul.f32 %v677, %v677
        %vm694 = vcmask 23552
        %v695 = vsel %vm694, %v678, 0.0
        %696 = vadd.xlane.f32.xlu0 %v695
        %v697 = vpop.xlane.xlu0 %696
        %v698 = vsel %vm694, %v679, 0.0
        %699 = vadd.xlane.f32.xlu0 %v698
        %v700 = vpop.xlane.xlu0 %699
        %v701 = vsel %vm694, %v680, 0.0
        %702 = vadd.xlane.f32.xlu0 %v701
        %v703 = vpop.xlane.xlu0 %702
        %v704 = vsel %vm694, %v681, 0.0
        %705 = vadd.xlane.f32.xlu0 %v704
        %v706 = vpop.xlane.xlu0 %705
        %v707 = vsel %vm694, %v682, 0.0
        %708 = vadd.xlane.f32.xlu0 %v707
        %v709 = vpop.xlane.xlu0 %708
        %v710 = vsel %vm694, %v683, 0.0
        %711 = vadd.xlane.f32.xlu0 %v710
        %v712 = vpop.xlane.xlu0 %711
        %v713 = vsel %vm694, %v684, 0.0
        %714 = vadd.xlane.f32.xlu0 %v713
        %v715 = vpop.xlane.xlu0 %714
        %v716 = vsel %vm694, %v685, 0.0
        %717 = vadd.xlane.f32.xlu0 %v716
        %v718 = vpop.xlane.xlu0 %717
        %v719 = vsel %vm694, %v686, 0.0
        %720 = vadd.xlane.f32.xlu0 %v719
        %v721 = vpop.xlane.xlu0 %720
        %v722 = vsel %vm694, %v687, 0.0
        %723 = vadd.xlane.f32.xlu0 %v722
        %v724 = vpop.xlane.xlu0 %723
        %v725 = vsel %vm694, %v688, 0.0
        %726 = vadd.xlane.f32.xlu0 %v725
        %v727 = vpop.xlane.xlu0 %726
        %v728 = vsel %vm694, %v689, 0.0
        %729 = vadd.xlane.f32.xlu0 %v728
        %v730 = vpop.xlane.xlu0 %729
        %v731 = vsel %vm694, %v690, 0.0
        %732 = vadd.xlane.f32.xlu0 %v731
        %v733 = vpop.xlane.xlu0 %732
        %v734 = vsel %vm694, %v691, 0.0
        %735 = vadd.xlane.f32.xlu0 %v734
        %v736 = vpop.xlane.xlu0 %735
        %v737 = vsel %vm694, %v692, 0.0
        %738 = vadd.xlane.f32.xlu0 %v737
        %v739 = vpop.xlane.xlu0 %738
        %v740 = vsel %vm694, %v693, 0.0
        %741 = vadd.xlane.f32.xlu0 %v740
        %v742 = vpop.xlane.xlu0 %741
        %v743 = vrsqrt.pop %v697
        %v744 = vmul.f32 %v697, %v743
        %vm745 = vcmp.eq.f32.partialorder %v697, inf
        %v746 = vsel %vm745, %v697, %v744
        %vm747 = vcmp.eq.f32.partialorder %v697, 0.0
        %v748 = vand.u32 %v697, 2147483648
        %v749 = vsel %vm747, %v748, %v746
        %v750 = vrsqrt.pop %v700
        %v751 = vmul.f32 %v700, %v750
        %vm752 = vcmp.eq.f32.partialorder %v700, inf
        %v753 = vsel %vm752, %v700, %v751
        %vm754 = vcmp.eq.f32.partialorder %v700, 0.0
        %v755 = vand.u32 %v700, 2147483648
        %v756 = vsel %vm754, %v755, %v753
        %v757 = vrsqrt.pop %v703
        %v758 = vmul.f32 %v703, %v757
        %vm759 = vcmp.eq.f32.partialorder %v703, inf
        %v760 = vsel %vm759, %v703, %v758
        %vm761 = vcmp.eq.f32.partialorder %v703, 0.0
        %v762 = vand.u32 %v703, 2147483648
        %v763 = vsel %vm761, %v762, %v760
        %v764 = vrsqrt.pop %v706
        %v765 = vmul.f32 %v706, %v764
        %vm766 = vcmp.eq.f32.partialorder %v706, inf
        %v767 = vsel %vm766, %v706, %v765
        %vm768 = vcmp.eq.f32.partialorder %v706, 0.0
        %v769 = vand.u32 %v706, 2147483648
        %v770 = vsel %vm768, %v769, %v767
        %v771 = vrsqrt.pop %v709
        %v772 = vmul.f32 %v709, %v771
        %vm773 = vcmp.eq.f32.partialorder %v709, inf
        %v774 = vsel %vm773, %v709, %v772
        %vm775 = vcmp.eq.f32.partialorder %v709, 0.0
        %v776 = vand.u32 %v709, 2147483648
        %v777 = vsel %vm775, %v776, %v774
        %v778 = vrsqrt.pop %v712
        %v779 = vmul.f32 %v712, %v778
        %vm780 = vcmp.eq.f32.partialorder %v712, inf
        %v781 = vsel %vm780, %v712, %v779
        %vm782 = vcmp.eq.f32.partialorder %v712, 0.0
        %v783 = vand.u32 %v712, 2147483648
        %v784 = vsel %vm782, %v783, %v781
        %v785 = vrsqrt.pop %v715
        %v786 = vmul.f32 %v715, %v785
        %vm787 = vcmp.eq.f32.partialorder %v715, inf
        %v788 = vsel %vm787, %v715, %v786
        %vm789 = vcmp.eq.f32.partialorder %v715, 0.0
        %v790 = vand.u32 %v715, 2147483648
        %v791 = vsel %vm789, %v790, %v788
        %v792 = vrsqrt.pop %v718
        %v793 = vmul.f32 %v718, %v792
        %vm794 = vcmp.eq.f32.partialorder %v718, inf
        %v795 = vsel %vm794, %v718, %v793
        %vm796 = vcmp.eq.f32.partialorder %v718, 0.0
        %v797 = vand.u32 %v718, 2147483648
        %v798 = vsel %vm796, %v797, %v795
        %v799 = vrsqrt.pop %v721
        %v800 = vmul.f32 %v721, %v799
        %vm801 = vcmp.eq.f32.partialorder %v721, inf
        %v802 = vsel %vm801, %v721, %v800
        %vm803 = vcmp.eq.f32.partialorder %v721, 0.0
        %v804 = vand.u32 %v721, 2147483648
        %v805 = vsel %vm803, %v804, %v802
        %v806 = vrsqrt.pop %v724
        %v807 = vmul.f32 %v724, %v806
        %vm808 = vcmp.eq.f32.partialorder %v724, inf
        %v809 = vsel %vm808, %v724, %v807
        %vm810 = vcmp.eq.f32.partialorder %v724, 0.0
        %v811 = vand.u32 %v724, 2147483648
        %v812 = vsel %vm810, %v811, %v809
        %v813 = vrsqrt.pop %v727
        %v814 = vmul.f32 %v727, %v813
        %vm815 = vcmp.eq.f32.partialorder %v727, inf
        %v816 = vsel %vm815, %v727, %v814
        %vm817 = vcmp.eq.f32.partialorder %v727, 0.0
        %v818 = vand.u32 %v727, 2147483648
        %v819 = vsel %vm817, %v818, %v816
        %v820 = vrsqrt.pop %v730
        %v821 = vmul.f32 %v730, %v820
        %vm822 = vcmp.eq.f32.partialorder %v730, inf
        %v823 = vsel %vm822, %v730, %v821
        %vm824 = vcmp.eq.f32.partialorder %v730, 0.0
        %v825 = vand.u32 %v730, 2147483648
        %v826 = vsel %vm824, %v825, %v823
        %v827 = vrsqrt.pop %v733
        %v828 = vmul.f32 %v733, %v827
        %vm829 = vcmp.eq.f32.partialorder %v733, inf
        %v830 = vsel %vm829, %v733, %v828
        %vm831 = vcmp.eq.f32.partialorder %v733, 0.0
        %v832 = vand.u32 %v733, 2147483648
        %v833 = vsel %vm831, %v832, %v830
        %v834 = vrsqrt.pop %v736
        %v835 = vmul.f32 %v736, %v834
        %vm836 = vcmp.eq.f32.partialorder %v736, inf
        %v837 = vsel %vm836, %v736, %v835
        %vm838 = vcmp.eq.f32.partialorder %v736, 0.0
        %v839 = vand.u32 %v736, 2147483648
        %v840 = vsel %vm838, %v839, %v837
        %v841 = vrsqrt.pop %v739
        %v842 = vmul.f32 %v739, %v841
        %vm843 = vcmp.eq.f32.partialorder %v739, inf
        %v844 = vsel %vm843, %v739, %v842
        %vm845 = vcmp.eq.f32.partialorder %v739, 0.0
        %v846 = vand.u32 %v739, 2147483648
        %v847 = vsel %vm845, %v846, %v844
        %v848 = vrsqrt.pop %v742
        %v849 = vmul.f32 %v742, %v848
        %vm850 = vcmp.eq.f32.partialorder %v742, inf
        %v851 = vsel %vm850, %v742, %v849
        %vm852 = vcmp.eq.f32.partialorder %v742, 0.0
        %v853 = vand.u32 %v742, 2147483648
        %v854 = vsel %vm852, %v853, %v851
        %871 = vrot.lane.b32.xlu0 %v662, 1
        %v872 = vpop.permute.xlu0 %871
        %873 = vrot.lane.b32.xlu0 %v663, 1
        %v874 = vpop.permute.xlu0 %873
        %875 = vrot.lane.b32.xlu0 %v664, 1
        %v876 = vpop.permute.xlu0 %875
        %877 = vrot.lane.b32.xlu0 %v665, 1
        %v878 = vpop.permute.xlu0 %877
        %879 = vrot.lane.b32.xlu0 %v666, 1
        %v880 = vpop.permute.xlu0 %879
        %881 = vrot.lane.b32.xlu0 %v667, 1
        %v882 = vpop.permute.xlu0 %881
        %883 = vrot.lane.b32.xlu0 %v668, 1
        %v884 = vpop.permute.xlu0 %883
        %885 = vrot.lane.b32.xlu0 %v669, 1
        %v886 = vpop.permute.xlu0 %885
        %887 = vrot.lane.b32.xlu0 %v670, 1
        %v888 = vpop.permute.xlu0 %887
        %889 = vrot.lane.b32.xlu0 %v671, 1
        %v890 = vpop.permute.xlu0 %889
        %891 = vrot.lane.b32.xlu0 %v672, 1
        %v892 = vpop.permute.xlu0 %891
        %893 = vrot.lane.b32.xlu0 %v673, 1
        %v894 = vpop.permute.xlu0 %893
        %895 = vrot.lane.b32.xlu0 %v674, 1
        %v896 = vpop.permute.xlu0 %895
        %897 = vrot.lane.b32.xlu0 %v675, 1
        %v898 = vpop.permute.xlu0 %897
        %899 = vrot.lane.b32.xlu0 %v676, 1
        %v900 = vpop.permute.xlu0 %899
        %901 = vrot.lane.b32.xlu0 %v677, 1
        %v902 = vpop.permute.xlu0 %901
        %919 = vrot.lane.b32.xlu0 %v585, 4
        %v920 = vpop.permute.xlu0 %919
        %921 = vrot.lane.b32.xlu0 %v589, 4
        %v922 = vpop.permute.xlu0 %921
        %923 = vrot.lane.b32.xlu0 %v593, 4
        %v924 = vpop.permute.xlu0 %923
        %925 = vrot.lane.b32.xlu0 %v597, 4
        %v926 = vpop.permute.xlu0 %925
        %927 = vrot.lane.b32.xlu0 %v601, 4
        %v928 = vpop.permute.xlu0 %927
        %929 = vrot.lane.b32.xlu0 %v605, 4
        %v930 = vpop.permute.xlu0 %929
        %931 = vrot.lane.b32.xlu0 %v609, 4
        %v932 = vpop.permute.xlu0 %931
        %933 = vrot.lane.b32.xlu0 %v613, 4
        %v934 = vpop.permute.xlu0 %933
        %935 = vrot.lane.b32.xlu0 %v617, 4
        %v936 = vpop.permute.xlu0 %935
        %937 = vrot.lane.b32.xlu0 %v621, 4
        %v938 = vpop.permute.xlu0 %937
        %939 = vrot.lane.b32.xlu0 %v625, 4
        %v940 = vpop.permute.xlu0 %939
        %941 = vrot.lane.b32.xlu0 %v629, 4
        %v942 = vpop.permute.xlu0 %941
        %943 = vrot.lane.b32.xlu0 %v633, 4
        %v944 = vpop.permute.xlu0 %943
        %945 = vrot.lane.b32.xlu0 %v637, 4
        %v946 = vpop.permute.xlu0 %945
        %947 = vrot.lane.b32.xlu0 %v641, 4
        %v948 = vpop.permute.xlu0 %947
        %949 = vrot.lane.b32.xlu0 %v645, 4
        %v950 = vpop.permute.xlu0 %949
        %983 = vrot.lane.b32.xlu0 %v461, 7
        %v984 = vpop.permute.xlu0 %983
        %985 = vrot.lane.b32.xlu0 %v462, 7
        %v986 = vpop.permute.xlu0 %985
        %987 = vrot.lane.b32.xlu0 %v463, 7
        %v988 = vpop.permute.xlu0 %987
        %989 = vrot.lane.b32.xlu0 %v464, 7
        %v990 = vpop.permute.xlu0 %989
        %991 = vrot.lane.b32.xlu0 %v465, 7
        %v992 = vpop.permute.xlu0 %991
        %993 = vrot.lane.b32.xlu0 %v466, 7
        %v994 = vpop.permute.xlu0 %993
        %995 = vrot.lane.b32.xlu0 %v467, 7
        %v996 = vpop.permute.xlu0 %995
        %997 = vrot.lane.b32.xlu0 %v468, 7
        %v998 = vpop.permute.xlu0 %997
        %999 = vrot.lane.b32.xlu0 %v469, 7
        %v1000 = vpop.permute.xlu0 %999
        %1001 = vrot.lane.b32.xlu0 %v470, 7
        %v1002 = vpop.permute.xlu0 %1001
        %1003 = vrot.lane.b32.xlu0 %v471, 7
        %v1004 = vpop.permute.xlu0 %1003
        %1005 = vrot.lane.b32.xlu0 %v472, 7
        %v1006 = vpop.permute.xlu0 %1005
        %1007 = vrot.lane.b32.xlu0 %v473, 7
        %v1008 = vpop.permute.xlu0 %1007
        %1009 = vrot.lane.b32.xlu0 %v474, 7
        %v1010 = vpop.permute.xlu0 %1009
        %1011 = vrot.lane.b32.xlu0 %v475, 7
        %v1012 = vpop.permute.xlu0 %1011
        %1013 = vrot.lane.b32.xlu0 %v476, 7
        %v1014 = vpop.permute.xlu0 %1013
        %vm1031 = vcmask 7168
        %v1032 = vsel %vm1031, %v749, %v872
        %v1033 = vsel %vm1031, %v756, %v874
        %v1034 = vsel %vm1031, %v763, %v876
        %v1035 = vsel %vm1031, %v770, %v878
        %v1036 = vsel %vm1031, %v777, %v880
        %v1037 = vsel %vm1031, %v784, %v882
        %v1038 = vsel %vm1031, %v791, %v884
        %v1039 = vsel %vm1031, %v798, %v886
        %v1040 = vsel %vm1031, %v805, %v888
        %v1041 = vsel %vm1031, %v812, %v890
        %v1042 = vsel %vm1031, %v819, %v892
        %v1043 = vsel %vm1031, %v826, %v894
        %v1044 = vsel %vm1031, %v833, %v896
        %v1045 = vsel %vm1031, %v840, %v898
        %v1046 = vsel %vm1031, %v847, %v900
        %v1047 = vsel %vm1031, %v854, %v902
        %vm1048 = vcmask 31744
        %v1049 = vsel %vm1048, %v1032, %v920
        %v1050 = vsel %vm1048, %v1033, %v922
        %v1051 = vsel %vm1048, %v1034, %v924
        %v1052 = vsel %vm1048, %v1035, %v926
        %v1053 = vsel %vm1048, %v1036, %v928
        %v1054 = vsel %vm1048, %v1037, %v930
        %v1055 = vsel %vm1048, %v1038, %v932
        %v1056 = vsel %vm1048, %v1039, %v934
        %v1057 = vsel %vm1048, %v1040, %v936
        %v1058 = vsel %vm1048, %v1041, %v938
        %v1059 = vsel %vm1048, %v1042, %v940
        %v1060 = vsel %vm1048, %v1043, %v942
        %v1061 = vsel %vm1048, %v1044, %v944
        %v1062 = vsel %vm1048, %v1045, %v946
        %v1063 = vsel %vm1048, %v1046, %v948
        %v1064 = vsel %vm1048, %v1047, %v950
        %vm1065 = vcmask 56320
        %v1066 = vsel %vm1065, %v1049, %v984
        %v1067 = vsel %vm1065, %v1050, %v986
        %v1068 = vsel %vm1065, %v1051, %v988
        %v1069 = vsel %vm1065, %v1052, %v990
        %v1070 = vsel %vm1065, %v1053, %v992
        %v1071 = vsel %vm1065, %v1054, %v994
        %v1072 = vsel %vm1065, %v1055, %v996
        %v1073 = vsel %vm1065, %v1056, %v998
        %v1074 = vsel %vm1065, %v1057, %v1000
        %v1075 = vsel %vm1065, %v1058, %v1002
        %v1076 = vsel %vm1065, %v1059, %v1004
        %v1077 = vsel %vm1065, %v1060, %v1006
        %v1078 = vsel %vm1065, %v1061, %v1008
        %v1079 = vsel %vm1065, %v1062, %v1010
        %v1080 = vsel %vm1065, %v1063, %v1012
        %v1081 = vsel %vm1065, %v1064, %v1014
        %v1083 = vlaneseq
        %v1084 = vshrl.u32 %v1083, 7
        %v1085 = vsub.s32 0, %v1084
        %v1086 = vrot.slane %v481, %v1085
        %vm1088 = vcmask 80896
        %v1090 = vsel %vm1088, %v1066, 0
        %v1093 = vsel %vm1088, %v1067, 0
        %v1096 = vsel %vm1088, %v1068, 0
        %v1099 = vsel %vm1088, %v1069, 0
        %v1102 = vsel %vm1088, %v1070, 0
        %v1105 = vsel %vm1088, %v1071, 0
        %v1108 = vsel %vm1088, %v1072, 0
        %v1111 = vsel %vm1088, %v1073, 0
        %v1114 = vsel %vm1088, %v1074, 0
        %v1117 = vsel %vm1088, %v1075, 0
        %v1120 = vsel %vm1088, %v1076, 0
        %v1123 = vsel %vm1088, %v1077, 0
        %v1126 = vsel %vm1088, %v1078, 0
        %v1129 = vsel %vm1088, %v1079, 0
        %v1132 = vsel %vm1088, %v1080, 0
        %v1135 = vsel %vm1088, %v1081, 0
        %vm1137 = vcmask 1041408
        %v1139 = vsel %vm1137, %v480, 0
        %1141 = vmatprep.subr.mxu0 0.0
        %1142 = vmatpush1.msra.mxu0 0.0
        %1143 = vmatprep.subr.mxu0 0.0
        %1144 = vmatpush1.msra.mxu0 0.0
        %1145 = vmatprep.subr.mxu0 0.0
        %1146 = vmatpush1.msra.mxu0 0.0
        %1147 = vmatprep.subr.mxu0 0.0
        %1148 = vmatpush1.msra.mxu0 0.0
        %1149 = vmatprep.subr.mxu0 0.0
        %1150 = vmatpush1.msra.mxu0 0.0
        %1151 = vmatprep.subr.mxu0 0.0
        %1152 = vmatpush1.msra.mxu0 0.0
        %1153 = vmatprep.subr.mxu0 0.0
        %1154 = vmatpush1.msra.mxu0 0.0
        %1155 = vmatprep.subr.mxu0 0.0
        %1156 = vmatpush1.msra.mxu0 0.0
        %1157 = vmatprep.subr.mxu0 0.0
        %1158 = vmatpush1.msra.mxu0 0.0
        %1159 = vmatprep.subr.mxu0 0.0
        %1160 = vmatpush1.msra.mxu0 0.0
        %1161 = vmatprep.subr.mxu0 0.0
        %1162 = vmatpush1.msra.mxu0 0.0
        %1163 = vmatprep.subr.mxu0 0.0
        %1164 = vmatpush1.msra.mxu0 0.0
        %1165 = vmatprep.subr.mxu0 0.0
        %1166 = vmatpush1.msra.mxu0 0.0
        %1167 = vmatprep.subr.mxu0 0.0
        %1168 = vmatpush1.msra.mxu0 0.0
        %1169 = vmatprep.subr.mxu0 0.0
        %1170 = vmatpush1.msra.mxu0 %v1139
        %1171 = vmatprep.subr.mxu0 0.0
        %1172 = vmatpush1.msra.mxu0 %v479
        %1173 = vmatprep.subr.mxu0 0.0
        %1174 = vmatpush2.msra.mxu0 0.0
        %1175 = vmatprep.subr.mxu0 0.0
        %1176 = vmatpush2.msra.mxu0 0.0
        %1177 = vmatprep.subr.mxu0 0.0
        %1178 = vmatpush2.msra.mxu0 0.0
        %1179 = vmatprep.subr.mxu0 0.0
        %1180 = vmatpush2.msra.mxu0 0.0
        %1181 = vmatprep.subr.mxu0 0.0
        %1182 = vmatpush2.msra.mxu0 0.0
        %1183 = vmatprep.subr.mxu0 0.0
        %1184 = vmatpush2.msra.mxu0 0.0
        %1185 = vmatprep.subr.mxu0 0.0
        %1186 = vmatpush2.msra.mxu0 0.0
        %1187 = vmatprep.subr.mxu0 0.0
        %1188 = vmatpush2.msra.mxu0 0.0
        %1189 = vmatprep.subr.mxu0 0.0
        %1190 = vmatpush2.msra.mxu0 0.0
        %1191 = vmatprep.subr.mxu0 0.0
        %1192 = vmatpush2.msra.mxu0 0.0
        %1193 = vmatprep.subr.mxu0 0.0
        %1194 = vmatpush2.msra.mxu0 0.0
        %1195 = vmatprep.subr.mxu0 0.0
        %1196 = vmatpush2.msra.mxu0 0.0
        %1197 = vmatprep.subr.mxu0 0.0
        %1198 = vmatpush2.msra.mxu0 0.0
        %1199 = vmatprep.subr.mxu0 0.0
        %1200 = vmatpush2.msra.mxu0 0.0
        %1201 = vmatprep.subr.mxu0 0.0
        %1202 = vmatpush2.msra.mxu0 0.0
        %1203 = vmatprep.subr.mxu0 0.0
        %1204 = vmatpush2.msra.mxu0 0.0
        %1205 = vmatprep.mubr.f32.mxu0 0.0
        %1206 = vmatmul.mubr.f32.gmra.mxu0 %v1090
        %v1207 = vpop.f32.mrf.mxu0
        %v1208 = vadd.f32 %v1086, %v1207
        %v1209 = vpop.f32.mrf.mxu0
        %1210 = vmatprep.mubr.f32.mxu0 0.0
        %1211 = vmatmul.mubr.f32.gmra.mxu0 %v1093
        %v1212 = vpop.f32.mrf.mxu0
        %v1213 = vadd.f32 %v1086, %v1212
        %v1214 = vpop.f32.mrf.mxu0
        %1215 = vmatprep.mubr.f32.mxu0 0.0
        %1216 = vmatmul.mubr.f32.gmra.mxu0 %v1096
        %v1217 = vpop.f32.mrf.mxu0
        %v1218 = vadd.f32 %v1086, %v1217
        %v1219 = vpop.f32.mrf.mxu0
        %1220 = vmatprep.mubr.f32.mxu0 0.0
        %1221 = vmatmul.mubr.f32.gmra.mxu0 %v1099
        %v1222 = vpop.f32.mrf.mxu0
        %v1223 = vadd.f32 %v1086, %v1222
        %v1224 = vpop.f32.mrf.mxu0
        %1225 = vmatprep.mubr.f32.mxu0 0.0
        %1226 = vmatmul.mubr.f32.gmra.mxu0 %v1102
        %v1227 = vpop.f32.mrf.mxu0
        %v1228 = vadd.f32 %v1086, %v1227
        %v1229 = vpop.f32.mrf.mxu0
        %1230 = vmatprep.mubr.f32.mxu0 0.0
        %1231 = vmatmul.mubr.f32.gmra.mxu0 %v1105
        %v1232 = vpop.f32.mrf.mxu0
        %v1233 = vadd.f32 %v1086, %v1232
        %v1234 = vpop.f32.mrf.mxu0
        %1235 = vmatprep.mubr.f32.mxu0 0.0
        %1236 = vmatmul.mubr.f32.gmra.mxu0 %v1108
        %v1237 = vpop.f32.mrf.mxu0
        %v1238 = vadd.f32 %v1086, %v1237
        %v1239 = vpop.f32.mrf.mxu0
        %1240 = vmatprep.mubr.f32.mxu0 0.0
        %1241 = vmatmul.mubr.f32.gmra.mxu0 %v1111
        %v1242 = vpop.f32.mrf.mxu0
        %v1243 = vadd.f32 %v1086, %v1242
        %v1244 = vpop.f32.mrf.mxu0
        %1245 = vmatprep.mubr.f32.mxu0 0.0
        %1246 = vmatmul.mubr.f32.gmra.mxu0 %v1114
        %v1247 = vpop.f32.mrf.mxu0
        %v1248 = vadd.f32 %v1086, %v1247
        %v1249 = vpop.f32.mrf.mxu0
        %1250 = vmatprep.mubr.f32.mxu0 0.0
        %1251 = vmatmul.mubr.f32.gmra.mxu0 %v1117
        %v1252 = vpop.f32.mrf.mxu0
        %v1253 = vadd.f32 %v1086, %v1252
        %v1254 = vpop.f32.mrf.mxu0
        %1255 = vmatprep.mubr.f32.mxu0 0.0
        %1256 = vmatmul.mubr.f32.gmra.mxu0 %v1120
        %v1257 = vpop.f32.mrf.mxu0
        %v1258 = vadd.f32 %v1086, %v1257
        %v1259 = vpop.f32.mrf.mxu0
        %1260 = vmatprep.mubr.f32.mxu0 0.0
        %1261 = vmatmul.mubr.f32.gmra.mxu0 %v1123
        %v1262 = vpop.f32.mrf.mxu0
        %v1263 = vadd.f32 %v1086, %v1262
        %v1264 = vpop.f32.mrf.mxu0
        %1265 = vmatprep.mubr.f32.mxu0 0.0
        %1266 = vmatmul.mubr.f32.gmra.mxu0 %v1126
        %v1267 = vpop.f32.mrf.mxu0
        %v1268 = vadd.f32 %v1086, %v1267
        %v1269 = vpop.f32.mrf.mxu0
        %1270 = vmatprep.mubr.f32.mxu0 0.0
        %1271 = vmatmul.mubr.f32.gmra.mxu0 %v1129
        %v1272 = vpop.f32.mrf.mxu0
        %v1273 = vadd.f32 %v1086, %v1272
        %v1274 = vpop.f32.mrf.mxu0
        %1275 = vmatprep.mubr.f32.mxu0 0.0
        %1276 = vmatmul.mubr.f32.gmra.mxu0 %v1132
        %v1277 = vpop.f32.mrf.mxu0
        %v1278 = vadd.f32 %v1086, %v1277
        %v1279 = vpop.f32.mrf.mxu0
        %1280 = vmatprep.mubr.f32.mxu0 0.0
        %1281 = vmatmul.mubr.f32.gmra.mxu0 %v1135
        %v1282 = vpop.f32.mrf.mxu0
        %v1283 = vadd.f32 %v1086, %v1282
        %v1284 = vpop.f32.mrf.mxu0
        %1285 = vdwg.mxu0
        %v1286 = vmax.f32 %v1208, 0.0
        %v1287 = vmax.f32 %v1213, 0.0
        %v1288 = vmax.f32 %v1218, 0.0
        %v1289 = vmax.f32 %v1223, 0.0
        %v1290 = vmax.f32 %v1228, 0.0
        %v1291 = vmax.f32 %v1233, 0.0
        %v1292 = vmax.f32 %v1238, 0.0
        %v1293 = vmax.f32 %v1243, 0.0
        %v1294 = vmax.f32 %v1248, 0.0
        %v1295 = vmax.f32 %v1253, 0.0
        %v1296 = vmax.f32 %v1258, 0.0
        %v1297 = vmax.f32 %v1263, 0.0
        %v1298 = vmax.f32 %v1268, 0.0
        %v1299 = vmax.f32 %v1273, 0.0
        %v1300 = vmax.f32 %v1278, 0.0
        %v1301 = vmax.f32 %v1283, 0.0
        %v1302 = vld [vmem:[%s5] sm:$0xff]
        %v1303 = vld [vmem:[%s5 + $0x8] sm:$0xff]
        %v1304 = vld [vmem:[%s6] sm:$0x1]
        %v1306 = vlaneseq
        %v1307 = vshrl.u32 %v1306, 7
        %v1308 = vsub.s32 0, %v1307
        %v1309 = vrot.slane %v1304, %v1308
        %vm1311 = vcmask 130048
        %v1313 = vsel %vm1311, %v1286, 0
        %v1316 = vsel %vm1311, %v1287, 0
        %v1319 = vsel %vm1311, %v1288, 0
        %v1322 = vsel %vm1311, %v1289, 0
        %v1325 = vsel %vm1311, %v1290, 0
        %v1328 = vsel %vm1311, %v1291, 0
        %v1331 = vsel %vm1311, %v1292, 0
        %v1334 = vsel %vm1311, %v1293, 0
        %v1337 = vsel %vm1311, %v1294, 0
        %v1340 = vsel %vm1311, %v1295, 0
        %v1343 = vsel %vm1311, %v1296, 0
        %v1346 = vsel %vm1311, %v1297, 0
        %v1349 = vsel %vm1311, %v1298, 0
        %v1352 = vsel %vm1311, %v1299, 0
        %v1355 = vsel %vm1311, %v1300, 0
        %v1358 = vsel %vm1311, %v1301, 0
        %1360 = vmatprep.subr.mxu0 0.0
        %1361 = vmatpush1.msra.mxu0 0.0
        %1362 = vmatprep.subr.mxu0 0.0
        %1363 = vmatpush1.msra.mxu0 0.0
        %1364 = vmatprep.subr.mxu0 0.0
        %1365 = vmatpush1.msra.mxu0 0.0
        %1366 = vmatprep.subr.mxu0 0.0
        %1367 = vmatpush1.msra.mxu0 0.0
        %1368 = vmatprep.subr.mxu0 0.0
        %1369 = vmatpush1.msra.mxu0 0.0
        %1370 = vmatprep.subr.mxu0 0.0
        %1371 = vmatpush1.msra.mxu0 0.0
        %1372 = vmatprep.subr.mxu0 0.0
        %1373 = vmatpush1.msra.mxu0 0.0
        %1374 = vmatprep.subr.mxu0 0.0
        %1375 = vmatpush1.msra.mxu0 0.0
        %1376 = vmatprep.subr.mxu0 0.0
        %1377 = vmatpush1.msra.mxu0 0.0
        %1378 = vmatprep.subr.mxu0 0.0
        %1379 = vmatpush1.msra.mxu0 0.0
        %1380 = vmatprep.subr.mxu0 0.0
        %1381 = vmatpush1.msra.mxu0 0.0
        %1382 = vmatprep.subr.mxu0 0.0
        %1383 = vmatpush1.msra.mxu0 0.0
        %1384 = vmatprep.subr.mxu0 0.0
        %1385 = vmatpush1.msra.mxu0 0.0
        %1386 = vmatprep.subr.mxu0 0.0
        %1387 = vmatpush1.msra.mxu0 0.0
        %1388 = vmatprep.subr.mxu0 0.0
        %1389 = vmatpush1.msra.mxu0 %v1303
        %1390 = vmatprep.subr.mxu0 0.0
        %1391 = vmatpush1.msra.mxu0 %v1302
        %1392 = vmatprep.subr.mxu0 0.0
        %1393 = vmatpush2.msra.mxu0 0.0
        %1394 = vmatprep.subr.mxu0 0.0
        %1395 = vmatpush2.msra.mxu0 0.0
        %1396 = vmatprep.subr.mxu0 0.0
        %1397 = vmatpush2.msra.mxu0 0.0
        %1398 = vmatprep.subr.mxu0 0.0
        %1399 = vmatpush2.msra.mxu0 0.0
        %1400 = vmatprep.subr.mxu0 0.0
        %1401 = vmatpush2.msra.mxu0 0.0
        %1402 = vmatprep.subr.mxu0 0.0
        %1403 = vmatpush2.msra.mxu0 0.0
        %1404 = vmatprep.subr.mxu0 0.0
        %1405 = vmatpush2.msra.mxu0 0.0
        %1406 = vmatprep.subr.mxu0 0.0
        %1407 = vmatpush2.msra.mxu0 0.0
        %1408 = vmatprep.subr.mxu0 0.0
        %1409 = vmatpush2.msra.mxu0 0.0
        %1410 = vmatprep.subr.mxu0 0.0
        %1411 = vmatpush2.msra.mxu0 0.0
        %1412 = vmatprep.subr.mxu0 0.0
        %1413 = vmatpush2.msra.mxu0 0.0
        %1414 = vmatprep.subr.mxu0 0.0
        %1415 = vmatpush2.msra.mxu0 0.0
        %1416 = vmatprep.subr.mxu0 0.0
        %1417 = vmatpush2.msra.mxu0 0.0
        %1418 = vmatprep.subr.mxu0 0.0
        %1419 = vmatpush2.msra.mxu0 0.0
        %1420 = vmatprep.subr.mxu0 0.0
        %1421 = vmatpush2.msra.mxu0 0.0
        %1422 = vmatprep.subr.mxu0 0.0
        %1423 = vmatpush2.msra.mxu0 0.0
        %1424 = vmatprep.mubr.f32.mxu0 0.0
        %1425 = vmatmul.mubr.f32.gmra.mxu0 %v1313
        %v1426 = vpop.f32.mrf.mxu0
        %v1427 = vadd.f32 %v1309, %v1426
        %v1428 = vpop.f32.mrf.mxu0
        %1429 = vmatprep.mubr.f32.mxu0 0.0
        %1430 = vmatmul.mubr.f32.gmra.mxu0 %v1316
        %v1431 = vpop.f32.mrf.mxu0
        %v1432 = vadd.f32 %v1309, %v1431
        %v1433 = vpop.f32.mrf.mxu0
        %1434 = vmatprep.mubr.f32.mxu0 0.0
        %1435 = vmatmul.mubr.f32.gmra.mxu0 %v1319
        %v1436 = vpop.f32.mrf.mxu0
        %v1437 = vadd.f32 %v1309, %v1436
        %v1438 = vpop.f32.mrf.mxu0
        %1439 = vmatprep.mubr.f32.mxu0 0.0
        %1440 = vmatmul.mubr.f32.gmra.mxu0 %v1322
        %v1441 = vpop.f32.mrf.mxu0
        %v1442 = vadd.f32 %v1309, %v1441
        %v1443 = vpop.f32.mrf.mxu0
        %1444 = vmatprep.mubr.f32.mxu0 0.0
        %1445 = vmatmul.mubr.f32.gmra.mxu0 %v1325
        %v1446 = vpop.f32.mrf.mxu0
        %v1447 = vadd.f32 %v1309, %v1446
        %v1448 = vpop.f32.mrf.mxu0
        %1449 = vmatprep.mubr.f32.mxu0 0.0
        %1450 = vmatmul.mubr.f32.gmra.mxu0 %v1328
        %v1451 = vpop.f32.mrf.mxu0
        %v1452 = vadd.f32 %v1309, %v1451
        %v1453 = vpop.f32.mrf.mxu0
        %1454 = vmatprep.mubr.f32.mxu0 0.0
        %1455 = vmatmul.mubr.f32.gmra.mxu0 %v1331
        %v1456 = vpop.f32.mrf.mxu0
        %v1457 = vadd.f32 %v1309, %v1456
        %v1458 = vpop.f32.mrf.mxu0
        %1459 = vmatprep.mubr.f32.mxu0 0.0
        %1460 = vmatmul.mubr.f32.gmra.mxu0 %v1334
        %v1461 = vpop.f32.mrf.mxu0
        %v1462 = vadd.f32 %v1309, %v1461
        %v1463 = vpop.f32.mrf.mxu0
        %1464 = vmatprep.mubr.f32.mxu0 0.0
        %1465 = vmatmul.mubr.f32.gmra.mxu0 %v1337
        %v1466 = vpop.f32.mrf.mxu0
        %v1467 = vadd.f32 %v1309, %v1466
        %v1468 = vpop.f32.mrf.mxu0
        %1469 = vmatprep.mubr.f32.mxu0 0.0
        %1470 = vmatmul.mubr.f32.gmra.mxu0 %v1340
        %v1471 = vpop.f32.mrf.mxu0
        %v1472 = vadd.f32 %v1309, %v1471
        %v1473 = vpop.f32.mrf.mxu0
        %1474 = vmatprep.mubr.f32.mxu0 0.0
        %1475 = vmatmul.mubr.f32.gmra.mxu0 %v1343
        %v1476 = vpop.f32.mrf.mxu0
        %v1477 = vadd.f32 %v1309, %v1476
        %v1478 = vpop.f32.mrf.mxu0
        %1479 = vmatprep.mubr.f32.mxu0 0.0
        %1480 = vmatmul.mubr.f32.gmra.mxu0 %v1346
        %v1481 = vpop.f32.mrf.mxu0
        %v1482 = vadd.f32 %v1309, %v1481
        %v1483 = vpop.f32.mrf.mxu0
        %1484 = vmatprep.mubr.f32.mxu0 0.0
        %1485 = vmatmul.mubr.f32.gmra.mxu0 %v1349
        %v1486 = vpop.f32.mrf.mxu0
        %v1487 = vadd.f32 %v1309, %v1486
        %v1488 = vpop.f32.mrf.mxu0
        %1489 = vmatprep.mubr.f32.mxu0 0.0
        %1490 = vmatmul.mubr.f32.gmra.mxu0 %v1352
        %v1491 = vpop.f32.mrf.mxu0
        %v1492 = vadd.f32 %v1309, %v1491
        %v1493 = vpop.f32.mrf.mxu0
        %1494 = vmatprep.mubr.f32.mxu0 0.0
        %1495 = vmatmul.mubr.f32.gmra.mxu0 %v1355
        %v1496 = vpop.f32.mrf.mxu0
        %v1497 = vadd.f32 %v1309, %v1496
        %v1498 = vpop.f32.mrf.mxu0
        %1499 = vmatprep.mubr.f32.mxu0 0.0
        %1500 = vmatmul.mubr.f32.gmra.mxu0 %v1358
        %v1501 = vpop.f32.mrf.mxu0
        %v1502 = vadd.f32 %v1309, %v1501
        %v1503 = vpop.f32.mrf.mxu0
        %1504 = vdwg.mxu0
        %v1505 = vmax.f32 %v1427, 0.0
        %v1506 = vmax.f32 %v1432, 0.0
        %v1507 = vmax.f32 %v1437, 0.0
        %v1508 = vmax.f32 %v1442, 0.0
        %v1509 = vmax.f32 %v1447, 0.0
        %v1510 = vmax.f32 %v1452, 0.0
        %v1511 = vmax.f32 %v1457, 0.0
        %v1512 = vmax.f32 %v1462, 0.0
        %v1513 = vmax.f32 %v1467, 0.0
        %v1514 = vmax.f32 %v1472, 0.0
        %v1515 = vmax.f32 %v1477, 0.0
        %v1516 = vmax.f32 %v1482, 0.0
        %v1517 = vmax.f32 %v1487, 0.0
        %v1518 = vmax.f32 %v1492, 0.0
        %v1519 = vmax.f32 %v1497, 0.0
        %v1520 = vmax.f32 %v1502, 0.0
        %v1521 = vld [vmem:[%s458] sm:$0xff]
        %v1522 = vld [vmem:[%s458 + $0x8] sm:$0xff]
        %v1523 = vld [vmem:[%s458 + $0x10] sm:$0xff]
        %v1524 = vld [vmem:[%s458 + $0x18] sm:$0xff]
        %v1525 = vld [vmem:[%s458 + $0x20] sm:$0xff]
        %v1526 = vld [vmem:[%s458 + $0x28] sm:$0xff]
        %v1527 = vld [vmem:[%s458 + $0x30] sm:$0xff]
        %v1528 = vld [vmem:[%s458 + $0x38] sm:$0xff]
        %v1529 = vld [vmem:[%s458 + $0x40] sm:$0xff]
        %v1530 = vld [vmem:[%s458 + $0x48] sm:$0xff]
        %v1531 = vld [vmem:[%s458 + $0x50] sm:$0xff]
        %v1532 = vld [vmem:[%s458 + $0x58] sm:$0xff]
        %v1533 = vld [vmem:[%s458 + $0x60] sm:$0xff]
        %v1534 = vld [vmem:[%s458 + $0x68] sm:$0xff]
        %v1535 = vld [vmem:[%s458 + $0x70] sm:$0xff]
        %v1536 = vld [vmem:[%s458 + $0x78] sm:$0xff]
        %v1537 = vld [vmem:[%s7] sm:$0xff]
        %v1538 = vld [vmem:[%s7 + $0x8] sm:$0xff]
        %v1539 = vld [vmem:[%s7 + $0x10] sm:$0xff]
        %v1540 = vld [vmem:[%s7 + $0x18] sm:$0xff]
        %v1541 = vld [vmem:[%s7 + $0x20] sm:$0xff]
        %v1542 = vld [vmem:[%s7 + $0x28] sm:$0xff]
        %v1543 = vld [vmem:[%s7 + $0x30] sm:$0xff]
        %v1544 = vld [vmem:[%s7 + $0x38] sm:$0xff]
        %v1545 = vld [vmem:[%s8] sm:$0xff]
        %v1546 = vld [vmem:[%s8 + $0x8] sm:$0xff]
        %v1547 = vld [vmem:[%s8 + $0x10] sm:$0xff]
        %v1548 = vld [vmem:[%s8 + $0x18] sm:$0xff]
        %v1549 = vld [vmem:[%s9] sm:$0x1]
        %v1551 = vsel %vm1311, %v1505, 0
        %v1554 = vsel %vm1311, %v1506, 0
        %v1557 = vsel %vm1311, %v1507, 0
        %v1560 = vsel %vm1311, %v1508, 0
        %v1563 = vsel %vm1311, %v1509, 0
        %v1566 = vsel %vm1311, %v1510, 0
        %v1569 = vsel %vm1311, %v1511, 0
        %v1572 = vsel %vm1311, %v1512, 0
        %v1575 = vsel %vm1311, %v1513, 0
        %v1578 = vsel %vm1311, %v1514, 0
        %v1581 = vsel %vm1311, %v1515, 0
        %v1584 = vsel %vm1311, %v1516, 0
        %v1587 = vsel %vm1311, %v1517, 0
        %v1590 = vsel %vm1311, %v1518, 0
        %v1593 = vsel %vm1311, %v1519, 0
        %v1596 = vsel %vm1311, %v1520, 0
        %1598 = vmatprep.subr.mxu0 0.0
        %1599 = vmatpush1.msra.mxu0 0.0
        %1600 = vmatprep.subr.mxu0 0.0
        %1601 = vmatpush1.msra.mxu0 0.0
        %1602 = vmatprep.subr.mxu0 0.0
        %1603 = vmatpush1.msra.mxu0 0.0
        %1604 = vmatprep.subr.mxu0 0.0
        %1605 = vmatpush1.msra.mxu0 0.0
        %1606 = vmatprep.subr.mxu0 0.0
        %1607 = vmatpush1.msra.mxu0 0.0
        %1608 = vmatprep.subr.mxu0 0.0
        %1609 = vmatpush1.msra.mxu0 0.0
        %1610 = vmatprep.subr.mxu0 0.0
        %1611 = vmatpush1.msra.mxu0 0.0
        %1612 = vmatprep.subr.mxu0 0.0
        %1613 = vmatpush1.msra.mxu0 0.0
        %1614 = vmatprep.subr.mxu0 0.0
        %1615 = vmatpush1.msra.mxu0 0.0
        %1616 = vmatprep.subr.mxu0 0.0
        %1617 = vmatpush1.msra.mxu0 0.0
        %1618 = vmatprep.subr.mxu0 0.0
        %1619 = vmatpush1.msra.mxu0 0.0
        %1620 = vmatprep.subr.mxu0 0.0
        %1621 = vmatpush1.msra.mxu0 0.0
        %1622 = vmatprep.subr.mxu0 0.0
        %1623 = vmatpush1.msra.mxu0 0.0
        %1624 = vmatprep.subr.mxu0 0.0
        %1625 = vmatpush1.msra.mxu0 0.0
        %1626 = vmatprep.subr.mxu0 0.0
        %1627 = vmatpush1.msra.mxu0 %v1540
        %1628 = vmatprep.subr.mxu0 0.0
        %1629 = vmatpush1.msra.mxu0 %v1539
        %1630 = vmatprep.subr.mxu0 0.0
        %1631 = vmatpush2.msra.mxu0 0.0
        %1632 = vmatprep.subr.mxu0 0.0
        %1633 = vmatpush2.msra.mxu0 0.0
        %1634 = vmatprep.subr.mxu0 0.0
        %1635 = vmatpush2.msra.mxu0 0.0
        %1636 = vmatprep.subr.mxu0 0.0
        %1637 = vmatpush2.msra.mxu0 0.0
        %1638 = vmatprep.subr.mxu0 0.0
        %1639 = vmatpush2.msra.mxu0 0.0
        %1640 = vmatprep.subr.mxu0 0.0
        %1641 = vmatpush2.msra.mxu0 0.0
        %1642 = vmatprep.subr.mxu0 0.0
        %1643 = vmatpush2.msra.mxu0 0.0
        %1644 = vmatprep.subr.mxu0 0.0
        %1645 = vmatpush2.msra.mxu0 0.0
        %1646 = vmatprep.subr.mxu0 0.0
        %1647 = vmatpush2.msra.mxu0 0.0
        %1648 = vmatprep.subr.mxu0 0.0
        %1649 = vmatpush2.msra.mxu0 0.0
        %1650 = vmatprep.subr.mxu0 0.0
        %1651 = vmatpush2.msra.mxu0 0.0
        %1652 = vmatprep.subr.mxu0 0.0
        %1653 = vmatpush2.msra.mxu0 0.0
        %1654 = vmatprep.subr.mxu0 0.0
        %1655 = vmatpush2.msra.mxu0 0.0
        %1656 = vmatprep.subr.mxu0 0.0
        %1657 = vmatpush2.msra.mxu0 0.0
        %1658 = vmatprep.subr.mxu0 0.0
        %1659 = vmatpush2.msra.mxu0 0.0
        %1660 = vmatprep.subr.mxu0 0.0
        %1661 = vmatpush2.msra.mxu0 0.0
        %1662 = vmatprep.mubr.f32.mxu0 0.0
        %1663 = vmatmul.mubr.f32.gmra.mxu0 %v1551
        %v1664 = vpop.f32.mrf.mxu0
        %v1665 = vadd.f32 0.0, %v1664
        %v1666 = vpop.f32.mrf.mxu0
        %1667 = vmatprep.mubr.f32.mxu0 0.0
        %1668 = vmatmul.mubr.f32.gmra.mxu0 %v1554
        %v1669 = vpop.f32.mrf.mxu0
        %v1670 = vadd.f32 0.0, %v1669
        %v1671 = vpop.f32.mrf.mxu0
        %1672 = vmatprep.mubr.f32.mxu0 0.0
        %1673 = vmatmul.mubr.f32.gmra.mxu0 %v1557
        %v1674 = vpop.f32.mrf.mxu0
        %v1675 = vadd.f32 0.0, %v1674
        %v1676 = vpop.f32.mrf.mxu0
        %1677 = vmatprep.mubr.f32.mxu0 0.0
        %1678 = vmatmul.mubr.f32.gmra.mxu0 %v1560
        %v1679 = vpop.f32.mrf.mxu0
        %v1680 = vadd.f32 0.0, %v1679
        %v1681 = vpop.f32.mrf.mxu0
        %1682 = vmatprep.mubr.f32.mxu0 0.0
        %1683 = vmatmul.mubr.f32.gmra.mxu0 %v1563
        %v1684 = vpop.f32.mrf.mxu0
        %v1685 = vadd.f32 0.0, %v1684
        %v1686 = vpop.f32.mrf.mxu0
        %1687 = vmatprep.mubr.f32.mxu0 0.0
        %1688 = vmatmul.mubr.f32.gmra.mxu0 %v1566
        %v1689 = vpop.f32.mrf.mxu0
        %v1690 = vadd.f32 0.0, %v1689
        %v1691 = vpop.f32.mrf.mxu0
        %1692 = vmatprep.mubr.f32.mxu0 0.0
        %1693 = vmatmul.mubr.f32.gmra.mxu0 %v1569
        %v1694 = vpop.f32.mrf.mxu0
        %v1695 = vadd.f32 0.0, %v1694
        %v1696 = vpop.f32.mrf.mxu0
        %1697 = vmatprep.mubr.f32.mxu0 0.0
        %1698 = vmatmul.mubr.f32.gmra.mxu0 %v1572
        %v1699 = vpop.f32.mrf.mxu0
        %v1700 = vadd.f32 0.0, %v1699
        %v1701 = vpop.f32.mrf.mxu0
        %1702 = vmatprep.mubr.f32.mxu0 0.0
        %1703 = vmatmul.mubr.f32.gmra.mxu0 %v1575
        %v1704 = vpop.f32.mrf.mxu0
        %v1705 = vadd.f32 0.0, %v1704
        %v1706 = vpop.f32.mrf.mxu0
        %1707 = vmatprep.mubr.f32.mxu0 0.0
        %1708 = vmatmul.mubr.f32.gmra.mxu0 %v1578
        %v1709 = vpop.f32.mrf.mxu0
        %v1710 = vadd.f32 0.0, %v1709
        %v1711 = vpop.f32.mrf.mxu0
        %1712 = vmatprep.mubr.f32.mxu0 0.0
        %1713 = vmatmul.mubr.f32.gmra.mxu0 %v1581
        %v1714 = vpop.f32.mrf.mxu0
        %v1715 = vadd.f32 0.0, %v1714
        %v1716 = vpop.f32.mrf.mxu0
        %1717 = vmatprep.mubr.f32.mxu0 0.0
        %1718 = vmatmul.mubr.f32.gmra.mxu0 %v1584
        %v1719 = vpop.f32.mrf.mxu0
        %v1720 = vadd.f32 0.0, %v1719
        %v1721 = vpop.f32.mrf.mxu0
        %1722 = vmatprep.mubr.f32.mxu0 0.0
        %1723 = vmatmul.mubr.f32.gmra.mxu0 %v1587
        %v1724 = vpop.f32.mrf.mxu0
        %v1725 = vadd.f32 0.0, %v1724
        %v1726 = vpop.f32.mrf.mxu0
        %1727 = vmatprep.mubr.f32.mxu0 0.0
        %1728 = vmatmul.mubr.f32.gmra.mxu0 %v1590
        %v1729 = vpop.f32.mrf.mxu0
        %v1730 = vadd.f32 0.0, %v1729
        %v1731 = vpop.f32.mrf.mxu0
        %1732 = vmatprep.mubr.f32.mxu0 0.0
        %1733 = vmatmul.mubr.f32.gmra.mxu0 %v1593
        %v1734 = vpop.f32.mrf.mxu0
        %v1735 = vadd.f32 0.0, %v1734
        %v1736 = vpop.f32.mrf.mxu0
        %1737 = vmatprep.mubr.f32.mxu0 0.0
        %1738 = vmatmul.mubr.f32.gmra.mxu0 %v1596
        %v1739 = vpop.f32.mrf.mxu0
        %v1740 = vadd.f32 0.0, %v1739
        %v1741 = vpop.f32.mrf.mxu0
        %1742 = vdwg.mxu0
        %v1744 = vsel %vm1311, %v1521, 0
        %v1747 = vsel %vm1311, %v1522, 0
        %v1750 = vsel %vm1311, %v1523, 0
        %v1753 = vsel %vm1311, %v1524, 0
        %v1756 = vsel %vm1311, %v1525, 0
        %v1759 = vsel %vm1311, %v1526, 0
        %v1762 = vsel %vm1311, %v1527, 0
        %v1765 = vsel %vm1311, %v1528, 0
        %v1768 = vsel %vm1311, %v1529, 0
        %v1771 = vsel %vm1311, %v1530, 0
        %v1774 = vsel %vm1311, %v1531, 0
        %v1777 = vsel %vm1311, %v1532, 0
        %v1780 = vsel %vm1311, %v1533, 0
        %v1783 = vsel %vm1311, %v1534, 0
        %v1786 = vsel %vm1311, %v1535, 0
        %v1789 = vsel %vm1311, %v1536, 0
        %1791 = vmatprep.subr.mxu0 0.0
        %1792 = vmatpush1.msra.mxu0 0.0
        %1793 = vmatprep.subr.mxu0 0.0
        %1794 = vmatpush1.msra.mxu0 0.0
        %1795 = vmatprep.subr.mxu0 0.0
        %1796 = vmatpush1.msra.mxu0 0.0
        %1797 = vmatprep.subr.mxu0 0.0
        %1798 = vmatpush1.msra.mxu0 0.0
        %1799 = vmatprep.subr.mxu0 0.0
        %1800 = vmatpush1.msra.mxu0 0.0
        %1801 = vmatprep.subr.mxu0 0.0
        %1802 = vmatpush1.msra.mxu0 0.0
        %1803 = vmatprep.subr.mxu0 0.0
        %1804 = vmatpush1.msra.mxu0 0.0
        %1805 = vmatprep.subr.mxu0 0.0
        %1806 = vmatpush1.msra.mxu0 0.0
        %1807 = vmatprep.subr.mxu0 0.0
        %1808 = vmatpush1.msra.mxu0 0.0
        %1809 = vmatprep.subr.mxu0 0.0
        %1810 = vmatpush1.msra.mxu0 0.0
        %1811 = vmatprep.subr.mxu0 0.0
        %1812 = vmatpush1.msra.mxu0 0.0
        %1813 = vmatprep.subr.mxu0 0.0
        %1814 = vmatpush1.msra.mxu0 0.0
        %1815 = vmatprep.subr.mxu0 0.0
        %1816 = vmatpush1.msra.mxu0 0.0
        %1817 = vmatprep.subr.mxu0 0.0
        %1818 = vmatpush1.msra.mxu0 0.0
        %1819 = vmatprep.subr.mxu0 0.0
        %1820 = vmatpush1.msra.mxu0 %v1538
        %1821 = vmatprep.subr.mxu0 0.0
        %1822 = vmatpush1.msra.mxu0 %v1537
        %1823 = vmatprep.subr.mxu0 0.0
        %1824 = vmatpush2.msra.mxu0 0.0
        %1825 = vmatprep.subr.mxu0 0.0
        %1826 = vmatpush2.msra.mxu0 0.0
        %1827 = vmatprep.subr.mxu0 0.0
        %1828 = vmatpush2.msra.mxu0 0.0
        %1829 = vmatprep.subr.mxu0 0.0
        %1830 = vmatpush2.msra.mxu0 0.0
        %1831 = vmatprep.subr.mxu0 0.0
        %1832 = vmatpush2.msra.mxu0 0.0
        %1833 = vmatprep.subr.mxu0 0.0
        %1834 = vmatpush2.msra.mxu0 0.0
        %1835 = vmatprep.subr.mxu0 0.0
        %1836 = vmatpush2.msra.mxu0 0.0
        %1837 = vmatprep.subr.mxu0 0.0
        %1838 = vmatpush2.msra.mxu0 0.0
        %1839 = vmatprep.subr.mxu0 0.0
        %1840 = vmatpush2.msra.mxu0 0.0
        %1841 = vmatprep.subr.mxu0 0.0
        %1842 = vmatpush2.msra.mxu0 0.0
        %1843 = vmatprep.subr.mxu0 0.0
        %1844 = vmatpush2.msra.mxu0 0.0
        %1845 = vmatprep.subr.mxu0 0.0
        %1846 = vmatpush2.msra.mxu0 0.0
        %1847 = vmatprep.subr.mxu0 0.0
        %1848 = vmatpush2.msra.mxu0 0.0
        %1849 = vmatprep.subr.mxu0 0.0
        %1850 = vmatpush2.msra.mxu0 0.0
        %1851 = vmatprep.subr.mxu0 0.0
        %1852 = vmatpush2.msra.mxu0 0.0
        %1853 = vmatprep.subr.mxu0 0.0
        %1854 = vmatpush2.msra.mxu0 0.0
        %1855 = vmatprep.mubr.f32.mxu0 0.0
        %1856 = vmatmul.mubr.f32.gmra.mxu0 %v1744
        %v1857 = vpop.f32.mrf.mxu0
        %v1858 = vadd.f32 %v1665, %v1857
        %v1859 = vpop.f32.mrf.mxu0
        %1860 = vmatprep.mubr.f32.mxu0 0.0
        %1861 = vmatmul.mubr.f32.gmra.mxu0 %v1747
        %v1862 = vpop.f32.mrf.mxu0
        %v1863 = vadd.f32 %v1670, %v1862
        %v1864 = vpop.f32.mrf.mxu0
        %1865 = vmatprep.mubr.f32.mxu0 0.0
        %1866 = vmatmul.mubr.f32.gmra.mxu0 %v1750
        %v1867 = vpop.f32.mrf.mxu0
        %v1868 = vadd.f32 %v1675, %v1867
        %v1869 = vpop.f32.mrf.mxu0
        %1870 = vmatprep.mubr.f32.mxu0 0.0
        %1871 = vmatmul.mubr.f32.gmra.mxu0 %v1753
        %v1872 = vpop.f32.mrf.mxu0
        %v1873 = vadd.f32 %v1680, %v1872
        %v1874 = vpop.f32.mrf.mxu0
        %1875 = vmatprep.mubr.f32.mxu0 0.0
        %1876 = vmatmul.mubr.f32.gmra.mxu0 %v1756
        %v1877 = vpop.f32.mrf.mxu0
        %v1878 = vadd.f32 %v1685, %v1877
        %v1879 = vpop.f32.mrf.mxu0
        %1880 = vmatprep.mubr.f32.mxu0 0.0
        %1881 = vmatmul.mubr.f32.gmra.mxu0 %v1759
        %v1882 = vpop.f32.mrf.mxu0
        %v1883 = vadd.f32 %v1690, %v1882
        %v1884 = vpop.f32.mrf.mxu0
        %1885 = vmatprep.mubr.f32.mxu0 0.0
        %1886 = vmatmul.mubr.f32.gmra.mxu0 %v1762
        %v1887 = vpop.f32.mrf.mxu0
        %v1888 = vadd.f32 %v1695, %v1887
        %v1889 = vpop.f32.mrf.mxu0
        %1890 = vmatprep.mubr.f32.mxu0 0.0
        %1891 = vmatmul.mubr.f32.gmra.mxu0 %v1765
        %v1892 = vpop.f32.mrf.mxu0
        %v1893 = vadd.f32 %v1700, %v1892
        %v1894 = vpop.f32.mrf.mxu0
        %1895 = vmatprep.mubr.f32.mxu0 0.0
        %1896 = vmatmul.mubr.f32.gmra.mxu0 %v1768
        %v1897 = vpop.f32.mrf.mxu0
        %v1898 = vadd.f32 %v1705, %v1897
        %v1899 = vpop.f32.mrf.mxu0
        %1900 = vmatprep.mubr.f32.mxu0 0.0
        %1901 = vmatmul.mubr.f32.gmra.mxu0 %v1771
        %v1902 = vpop.f32.mrf.mxu0
        %v1903 = vadd.f32 %v1710, %v1902
        %v1904 = vpop.f32.mrf.mxu0
        %1905 = vmatprep.mubr.f32.mxu0 0.0
        %1906 = vmatmul.mubr.f32.gmra.mxu0 %v1774
        %v1907 = vpop.f32.mrf.mxu0
        %v1908 = vadd.f32 %v1715, %v1907
        %v1909 = vpop.f32.mrf.mxu0
        %1910 = vmatprep.mubr.f32.mxu0 0.0
        %1911 = vmatmul.mubr.f32.gmra.mxu0 %v1777
        %v1912 = vpop.f32.mrf.mxu0
        %v1913 = vadd.f32 %v1720, %v1912
        %v1914 = vpop.f32.mrf.mxu0
        %1915 = vmatprep.mubr.f32.mxu0 0.0
        %1916 = vmatmul.mubr.f32.gmra.mxu0 %v1780
        %v1917 = vpop.f32.mrf.mxu0
        %v1918 = vadd.f32 %v1725, %v1917
        %v1919 = vpop.f32.mrf.mxu0
        %1920 = vmatprep.mubr.f32.mxu0 0.0
        %1921 = vmatmul.mubr.f32.gmra.mxu0 %v1783
        %v1922 = vpop.f32.mrf.mxu0
        %v1923 = vadd.f32 %v1730, %v1922
        %v1924 = vpop.f32.mrf.mxu0
        %1925 = vmatprep.mubr.f32.mxu0 0.0
        %1926 = vmatmul.mubr.f32.gmra.mxu0 %v1786
        %v1927 = vpop.f32.mrf.mxu0
        %v1928 = vadd.f32 %v1735, %v1927
        %v1929 = vpop.f32.mrf.mxu0
        %1930 = vmatprep.mubr.f32.mxu0 0.0
        %1931 = vmatmul.mubr.f32.gmra.mxu0 %v1789
        %v1932 = vpop.f32.mrf.mxu0
        %v1933 = vadd.f32 %v1740, %v1932
        %v1934 = vpop.f32.mrf.mxu0
        %1935 = vdwg.mxu0
        %1936 = vmatprep.subr.mxu0 0.0
        %1937 = vmatpush1.msra.mxu0 0.0
        %1938 = vmatprep.subr.mxu0 0.0
        %1939 = vmatpush1.msra.mxu0 0.0
        %1940 = vmatprep.subr.mxu0 0.0
        %1941 = vmatpush1.msra.mxu0 0.0
        %1942 = vmatprep.subr.mxu0 0.0
        %1943 = vmatpush1.msra.mxu0 0.0
        %1944 = vmatprep.subr.mxu0 0.0
        %1945 = vmatpush1.msra.mxu0 0.0
        %1946 = vmatprep.subr.mxu0 0.0
        %1947 = vmatpush1.msra.mxu0 0.0
        %1948 = vmatprep.subr.mxu0 0.0
        %1949 = vmatpush1.msra.mxu0 0.0
        %1950 = vmatprep.subr.mxu0 0.0
        %1951 = vmatpush1.msra.mxu0 0.0
        %1952 = vmatprep.subr.mxu0 0.0
        %1953 = vmatpush1.msra.mxu0 0.0
        %1954 = vmatprep.subr.mxu0 0.0
        %1955 = vmatpush1.msra.mxu0 0.0
        %1956 = vmatprep.subr.mxu0 0.0
        %1957 = vmatpush1.msra.mxu0 0.0
        %1958 = vmatprep.subr.mxu0 0.0
        %1959 = vmatpush1.msra.mxu0 0.0
        %1960 = vmatprep.subr.mxu0 0.0
        %1961 = vmatpush1.msra.mxu0 0.0
        %1962 = vmatprep.subr.mxu0 0.0
        %1963 = vmatpush1.msra.mxu0 0.0
        %1964 = vmatprep.subr.mxu0 0.0
        %1965 = vmatpush1.msra.mxu0 %v1544
        %1966 = vmatprep.subr.mxu0 0.0
        %1967 = vmatpush1.msra.mxu0 %v1543
        %1968 = vmatprep.subr.mxu0 0.0
        %1969 = vmatpush2.msra.mxu0 0.0
        %1970 = vmatprep.subr.mxu0 0.0
        %1971 = vmatpush2.msra.mxu0 0.0
        %1972 = vmatprep.subr.mxu0 0.0
        %1973 = vmatpush2.msra.mxu0 0.0
        %1974 = vmatprep.subr.mxu0 0.0
        %1975 = vmatpush2.msra.mxu0 0.0
        %1976 = vmatprep.subr.mxu0 0.0
        %1977 = vmatpush2.msra.mxu0 0.0
        %1978 = vmatprep.subr.mxu0 0.0
        %1979 = vmatpush2.msra.mxu0 0.0
        %1980 = vmatprep.subr.mxu0 0.0
        %1981 = vmatpush2.msra.mxu0 0.0
        %1982 = vmatprep.subr.mxu0 0.0
        %1983 = vmatpush2.msra.mxu0 0.0
        %1984 = vmatprep.subr.mxu0 0.0
        %1985 = vmatpush2.msra.mxu0 0.0
        %1986 = vmatprep.subr.mxu0 0.0
        %1987 = vmatpush2.msra.mxu0 0.0
        %1988 = vmatprep.subr.mxu0 0.0
        %1989 = vmatpush2.msra.mxu0 0.0
        %1990 = vmatprep.subr.mxu0 0.0
        %1991 = vmatpush2.msra.mxu0 0.0
        %1992 = vmatprep.subr.mxu0 0.0
        %1993 = vmatpush2.msra.mxu0 0.0
        %1994 = vmatprep.subr.mxu0 0.0
        %1995 = vmatpush2.msra.mxu0 0.0
        %1996 = vmatprep.subr.mxu0 0.0
        %1997 = vmatpush2.msra.mxu0 0.0
        %1998 = vmatprep.subr.mxu0 0.0
        %1999 = vmatpush2.msra.mxu0 0.0
        %2000 = vmatprep.mubr.f32.mxu0 0.0
        %2001 = vmatmul.mubr.f32.gmra.mxu0 %v1551
        %v2002 = vpop.f32.mrf.mxu0
        %v2003 = vadd.f32 0.0, %v2002
        %v2004 = vpop.f32.mrf.mxu0
        %2005 = vmatprep.mubr.f32.mxu0 0.0
        %2006 = vmatmul.mubr.f32.gmra.mxu0 %v1554
        %v2007 = vpop.f32.mrf.mxu0
        %v2008 = vadd.f32 0.0, %v2007
        %v2009 = vpop.f32.mrf.mxu0
        %2010 = vmatprep.mubr.f32.mxu0 0.0
        %2011 = vmatmul.mubr.f32.gmra.mxu0 %v1557
        %v2012 = vpop.f32.mrf.mxu0
        %v2013 = vadd.f32 0.0, %v2012
        %v2014 = vpop.f32.mrf.mxu0
        %2015 = vmatprep.mubr.f32.mxu0 0.0
        %2016 = vmatmul.mubr.f32.gmra.mxu0 %v1560
        %v2017 = vpop.f32.mrf.mxu0
        %v2018 = vadd.f32 0.0, %v2017
        %v2019 = vpop.f32.mrf.mxu0
        %2020 = vmatprep.mubr.f32.mxu0 0.0
        %2021 = vmatmul.mubr.f32.gmra.mxu0 %v1563
        %v2022 = vpop.f32.mrf.mxu0
        %v2023 = vadd.f32 0.0, %v2022
        %v2024 = vpop.f32.mrf.mxu0
        %2025 = vmatprep.mubr.f32.mxu0 0.0
        %2026 = vmatmul.mubr.f32.gmra.mxu0 %v1566
        %v2027 = vpop.f32.mrf.mxu0
        %v2028 = vadd.f32 0.0, %v2027
        %v2029 = vpop.f32.mrf.mxu0
        %2030 = vmatprep.mubr.f32.mxu0 0.0
        %2031 = vmatmul.mubr.f32.gmra.mxu0 %v1569
        %v2032 = vpop.f32.mrf.mxu0
        %v2033 = vadd.f32 0.0, %v2032
        %v2034 = vpop.f32.mrf.mxu0
        %2035 = vmatprep.mubr.f32.mxu0 0.0
        %2036 = vmatmul.mubr.f32.gmra.mxu0 %v1572
        %v2037 = vpop.f32.mrf.mxu0
        %v2038 = vadd.f32 0.0, %v2037
        %v2039 = vpop.f32.mrf.mxu0
        %2040 = vmatprep.mubr.f32.mxu0 0.0
        %2041 = vmatmul.mubr.f32.gmra.mxu0 %v1575
        %v2042 = vpop.f32.mrf.mxu0
        %v2043 = vadd.f32 0.0, %v2042
        %v2044 = vpop.f32.mrf.mxu0
        %2045 = vmatprep.mubr.f32.mxu0 0.0
        %2046 = vmatmul.mubr.f32.gmra.mxu0 %v1578
        %v2047 = vpop.f32.mrf.mxu0
        %v2048 = vadd.f32 0.0, %v2047
        %v2049 = vpop.f32.mrf.mxu0
        %2050 = vmatprep.mubr.f32.mxu0 0.0
        %2051 = vmatmul.mubr.f32.gmra.mxu0 %v1581
        %v2052 = vpop.f32.mrf.mxu0
        %v2053 = vadd.f32 0.0, %v2052
        %v2054 = vpop.f32.mrf.mxu0
        %2055 = vmatprep.mubr.f32.mxu0 0.0
        %2056 = vmatmul.mubr.f32.gmra.mxu0 %v1584
        %v2057 = vpop.f32.mrf.mxu0
        %v2058 = vadd.f32 0.0, %v2057
        %v2059 = vpop.f32.mrf.mxu0
        %2060 = vmatprep.mubr.f32.mxu0 0.0
        %2061 = vmatmul.mubr.f32.gmra.mxu0 %v1587
        %v2062 = vpop.f32.mrf.mxu0
        %v2063 = vadd.f32 0.0, %v2062
        %v2064 = vpop.f32.mrf.mxu0
        %2065 = vmatprep.mubr.f32.mxu0 0.0
        %2066 = vmatmul.mubr.f32.gmra.mxu0 %v1590
        %v2067 = vpop.f32.mrf.mxu0
        %v2068 = vadd.f32 0.0, %v2067
        %v2069 = vpop.f32.mrf.mxu0
        %2070 = vmatprep.mubr.f32.mxu0 0.0
        %2071 = vmatmul.mubr.f32.gmra.mxu0 %v1593
        %v2072 = vpop.f32.mrf.mxu0
        %v2073 = vadd.f32 0.0, %v2072
        %v2074 = vpop.f32.mrf.mxu0
        %2075 = vmatprep.mubr.f32.mxu0 0.0
        %2076 = vmatmul.mubr.f32.gmra.mxu0 %v1596
        %v2077 = vpop.f32.mrf.mxu0
        %v2078 = vadd.f32 0.0, %v2077
        %v2079 = vpop.f32.mrf.mxu0
        %2080 = vdwg.mxu0
        %2081 = vmatprep.subr.mxu0 0.0
        %2082 = vmatpush1.msra.mxu0 0.0
        %2083 = vmatprep.subr.mxu0 0.0
        %2084 = vmatpush1.msra.mxu0 0.0
        %2085 = vmatprep.subr.mxu0 0.0
        %2086 = vmatpush1.msra.mxu0 0.0
        %2087 = vmatprep.subr.mxu0 0.0
        %2088 = vmatpush1.msra.mxu0 0.0
        %2089 = vmatprep.subr.mxu0 0.0
        %2090 = vmatpush1.msra.mxu0 0.0
        %2091 = vmatprep.subr.mxu0 0.0
        %2092 = vmatpush1.msra.mxu0 0.0
        %2093 = vmatprep.subr.mxu0 0.0
        %2094 = vmatpush1.msra.mxu0 0.0
        %2095 = vmatprep.subr.mxu0 0.0
        %2096 = vmatpush1.msra.mxu0 0.0
        %2097 = vmatprep.subr.mxu0 0.0
        %2098 = vmatpush1.msra.mxu0 0.0
        %2099 = vmatprep.subr.mxu0 0.0
        %2100 = vmatpush1.msra.mxu0 0.0
        %2101 = vmatprep.subr.mxu0 0.0
        %2102 = vmatpush1.msra.mxu0 0.0
        %2103 = vmatprep.subr.mxu0 0.0
        %2104 = vmatpush1.msra.mxu0 0.0
        %2105 = vmatprep.subr.mxu0 0.0
        %2106 = vmatpush1.msra.mxu0 0.0
        %2107 = vmatprep.subr.mxu0 0.0
        %2108 = vmatpush1.msra.mxu0 0.0
        %2109 = vmatprep.subr.mxu0 0.0
        %2110 = vmatpush1.msra.mxu0 %v1542
        %2111 = vmatprep.subr.mxu0 0.0
        %2112 = vmatpush1.msra.mxu0 %v1541
        %2113 = vmatprep.subr.mxu0 0.0
        %2114 = vmatpush2.msra.mxu0 0.0
        %2115 = vmatprep.subr.mxu0 0.0
        %2116 = vmatpush2.msra.mxu0 0.0
        %2117 = vmatprep.subr.mxu0 0.0
        %2118 = vmatpush2.msra.mxu0 0.0
        %2119 = vmatprep.subr.mxu0 0.0
        %2120 = vmatpush2.msra.mxu0 0.0
        %2121 = vmatprep.subr.mxu0 0.0
        %2122 = vmatpush2.msra.mxu0 0.0
        %2123 = vmatprep.subr.mxu0 0.0
        %2124 = vmatpush2.msra.mxu0 0.0
        %2125 = vmatprep.subr.mxu0 0.0
        %2126 = vmatpush2.msra.mxu0 0.0
        %2127 = vmatprep.subr.mxu0 0.0
        %2128 = vmatpush2.msra.mxu0 0.0
        %2129 = vmatprep.subr.mxu0 0.0
        %2130 = vmatpush2.msra.mxu0 0.0
        %2131 = vmatprep.subr.mxu0 0.0
        %2132 = vmatpush2.msra.mxu0 0.0
        %2133 = vmatprep.subr.mxu0 0.0
        %2134 = vmatpush2.msra.mxu0 0.0
        %2135 = vmatprep.subr.mxu0 0.0
        %2136 = vmatpush2.msra.mxu0 0.0
        %2137 = vmatprep.subr.mxu0 0.0
        %2138 = vmatpush2.msra.mxu0 0.0
        %2139 = vmatprep.subr.mxu0 0.0
        %2140 = vmatpush2.msra.mxu0 0.0
        %2141 = vmatprep.subr.mxu0 0.0
        %2142 = vmatpush2.msra.mxu0 0.0
        %2143 = vmatprep.subr.mxu0 0.0
        %2144 = vmatpush2.msra.mxu0 0.0
        %2145 = vmatprep.mubr.f32.mxu0 0.0
        %2146 = vmatmul.mubr.f32.gmra.mxu0 %v1744
        %v2147 = vpop.f32.mrf.mxu0
        %v2148 = vadd.f32 %v2003, %v2147
        %v2149 = vpop.f32.mrf.mxu0
        %2150 = vmatprep.mubr.f32.mxu0 0.0
        %2151 = vmatmul.mubr.f32.gmra.mxu0 %v1747
        %v2152 = vpop.f32.mrf.mxu0
        %v2153 = vadd.f32 %v2008, %v2152
        %v2154 = vpop.f32.mrf.mxu0
        %2155 = vmatprep.mubr.f32.mxu0 0.0
        %2156 = vmatmul.mubr.f32.gmra.mxu0 %v1750
        %v2157 = vpop.f32.mrf.mxu0
        %v2158 = vadd.f32 %v2013, %v2157
        %v2159 = vpop.f32.mrf.mxu0
        %2160 = vmatprep.mubr.f32.mxu0 0.0
        %2161 = vmatmul.mubr.f32.gmra.mxu0 %v1753
        %v2162 = vpop.f32.mrf.mxu0
        %v2163 = vadd.f32 %v2018, %v2162
        %v2164 = vpop.f32.mrf.mxu0
        %2165 = vmatprep.mubr.f32.mxu0 0.0
        %2166 = vmatmul.mubr.f32.gmra.mxu0 %v1756
        %v2167 = vpop.f32.mrf.mxu0
        %v2168 = vadd.f32 %v2023, %v2167
        %v2169 = vpop.f32.mrf.mxu0
        %2170 = vmatprep.mubr.f32.mxu0 0.0
        %2171 = vmatmul.mubr.f32.gmra.mxu0 %v1759
        %v2172 = vpop.f32.mrf.mxu0
        %v2173 = vadd.f32 %v2028, %v2172
        %v2174 = vpop.f32.mrf.mxu0
        %2175 = vmatprep.mubr.f32.mxu0 0.0
        %2176 = vmatmul.mubr.f32.gmra.mxu0 %v1762
        %v2177 = vpop.f32.mrf.mxu0
        %v2178 = vadd.f32 %v2033, %v2177
        %v2179 = vpop.f32.mrf.mxu0
        %2180 = vmatprep.mubr.f32.mxu0 0.0
        %2181 = vmatmul.mubr.f32.gmra.mxu0 %v1765
        %v2182 = vpop.f32.mrf.mxu0
        %v2183 = vadd.f32 %v2038, %v2182
        %v2184 = vpop.f32.mrf.mxu0
        %2185 = vmatprep.mubr.f32.mxu0 0.0
        %2186 = vmatmul.mubr.f32.gmra.mxu0 %v1768
        %v2187 = vpop.f32.mrf.mxu0
        %v2188 = vadd.f32 %v2043, %v2187
        %v2189 = vpop.f32.mrf.mxu0
        %2190 = vmatprep.mubr.f32.mxu0 0.0
        %2191 = vmatmul.mubr.f32.gmra.mxu0 %v1771
        %v2192 = vpop.f32.mrf.mxu0
        %v2193 = vadd.f32 %v2048, %v2192
        %v2194 = vpop.f32.mrf.mxu0
        %2195 = vmatprep.mubr.f32.mxu0 0.0
        %2196 = vmatmul.mubr.f32.gmra.mxu0 %v1774
        %v2197 = vpop.f32.mrf.mxu0
        %v2198 = vadd.f32 %v2053, %v2197
        %v2199 = vpop.f32.mrf.mxu0
        %2200 = vmatprep.mubr.f32.mxu0 0.0
        %2201 = vmatmul.mubr.f32.gmra.mxu0 %v1777
        %v2202 = vpop.f32.mrf.mxu0
        %v2203 = vadd.f32 %v2058, %v2202
        %v2204 = vpop.f32.mrf.mxu0
        %2205 = vmatprep.mubr.f32.mxu0 0.0
        %2206 = vmatmul.mubr.f32.gmra.mxu0 %v1780
        %v2207 = vpop.f32.mrf.mxu0
        %v2208 = vadd.f32 %v2063, %v2207
        %v2209 = vpop.f32.mrf.mxu0
        %2210 = vmatprep.mubr.f32.mxu0 0.0
        %2211 = vmatmul.mubr.f32.gmra.mxu0 %v1783
        %v2212 = vpop.f32.mrf.mxu0
        %v2213 = vadd.f32 %v2068, %v2212
        %v2214 = vpop.f32.mrf.mxu0
        %2215 = vmatprep.mubr.f32.mxu0 0.0
        %2216 = vmatmul.mubr.f32.gmra.mxu0 %v1786
        %v2217 = vpop.f32.mrf.mxu0
        %v2218 = vadd.f32 %v2073, %v2217
        %v2219 = vpop.f32.mrf.mxu0
        %2220 = vmatprep.mubr.f32.mxu0 0.0
        %2221 = vmatmul.mubr.f32.gmra.mxu0 %v1789
        %v2222 = vpop.f32.mrf.mxu0
        %v2223 = vadd.f32 %v2078, %v2222
        %v2224 = vpop.f32.mrf.mxu0
        %2225 = vdwg.mxu0
        %v2226 = vsel %vm1311, %v1858, -inf
        %v2227 = vrot.slane %v2226, 4
        %v2228 = vmax.f32 %v2226, %v2227
        %v2229 = vrot.slane %v2228, 2
        %v2230 = vmax.f32 %v2228, %v2229
        %v2231 = vrot.slane %v2230, 1
        %v2232 = vmax.f32 %v2230, %v2231
        %v2233 = vsel %vm1311, %v1863, -inf
        %v2234 = vrot.slane %v2233, 4
        %v2235 = vmax.f32 %v2233, %v2234
        %v2236 = vrot.slane %v2235, 2
        %v2237 = vmax.f32 %v2235, %v2236
        %v2238 = vrot.slane %v2237, 1
        %v2239 = vmax.f32 %v2237, %v2238
        %v2240 = vsel %vm1311, %v1868, -inf
        %v2241 = vrot.slane %v2240, 4
        %v2242 = vmax.f32 %v2240, %v2241
        %v2243 = vrot.slane %v2242, 2
        %v2244 = vmax.f32 %v2242, %v2243
        %v2245 = vrot.slane %v2244, 1
        %v2246 = vmax.f32 %v2244, %v2245
        %v2247 = vsel %vm1311, %v1873, -inf
        %v2248 = vrot.slane %v2247, 4
        %v2249 = vmax.f32 %v2247, %v2248
        %v2250 = vrot.slane %v2249, 2
        %v2251 = vmax.f32 %v2249, %v2250
        %v2252 = vrot.slane %v2251, 1
        %v2253 = vmax.f32 %v2251, %v2252
        %v2254 = vsel %vm1311, %v1878, -inf
        %v2255 = vrot.slane %v2254, 4
        %v2256 = vmax.f32 %v2254, %v2255
        %v2257 = vrot.slane %v2256, 2
        %v2258 = vmax.f32 %v2256, %v2257
        %v2259 = vrot.slane %v2258, 1
        %v2260 = vmax.f32 %v2258, %v2259
        %v2261 = vsel %vm1311, %v1883, -inf
        %v2262 = vrot.slane %v2261, 4
        %v2263 = vmax.f32 %v2261, %v2262
        %v2264 = vrot.slane %v2263, 2
        %v2265 = vmax.f32 %v2263, %v2264
        %v2266 = vrot.slane %v2265, 1
        %v2267 = vmax.f32 %v2265, %v2266
        %v2268 = vsel %vm1311, %v1888, -inf
        %v2269 = vrot.slane %v2268, 4
        %v2270 = vmax.f32 %v2268, %v2269
        %v2271 = vrot.slane %v2270, 2
        %v2272 = vmax.f32 %v2270, %v2271
        %v2273 = vrot.slane %v2272, 1
        %v2274 = vmax.f32 %v2272, %v2273
        %v2275 = vsel %vm1311, %v1893, -inf
        %v2276 = vrot.slane %v2275, 4
        %v2277 = vmax.f32 %v2275, %v2276
        %v2278 = vrot.slane %v2277, 2
        %v2279 = vmax.f32 %v2277, %v2278
        %v2280 = vrot.slane %v2279, 1
        %v2281 = vmax.f32 %v2279, %v2280
        %v2282 = vsel %vm1311, %v1898, -inf
        %v2283 = vrot.slane %v2282, 4
        %v2284 = vmax.f32 %v2282, %v2283
        %v2285 = vrot.slane %v2284, 2
        %v2286 = vmax.f32 %v2284, %v2285
        %v2287 = vrot.slane %v2286, 1
        %v2288 = vmax.f32 %v2286, %v2287
        %v2289 = vsel %vm1311, %v1903, -inf
        %v2290 = vrot.slane %v2289, 4
        %v2291 = vmax.f32 %v2289, %v2290
        %v2292 = vrot.slane %v2291, 2
        %v2293 = vmax.f32 %v2291, %v2292
        %v2294 = vrot.slane %v2293, 1
        %v2295 = vmax.f32 %v2293, %v2294
        %v2296 = vsel %vm1311, %v1908, -inf
        %v2297 = vrot.slane %v2296, 4
        %v2298 = vmax.f32 %v2296, %v2297
        %v2299 = vrot.slane %v2298, 2
        %v2300 = vmax.f32 %v2298, %v2299
        %v2301 = vrot.slane %v2300, 1
        %v2302 = vmax.f32 %v2300, %v2301
        %v2303 = vsel %vm1311, %v1913, -inf
        %v2304 = vrot.slane %v2303, 4
        %v2305 = vmax.f32 %v2303, %v2304
        %v2306 = vrot.slane %v2305, 2
        %v2307 = vmax.f32 %v2305, %v2306
        %v2308 = vrot.slane %v2307, 1
        %v2309 = vmax.f32 %v2307, %v2308
        %v2310 = vsel %vm1311, %v1918, -inf
        %v2311 = vrot.slane %v2310, 4
        %v2312 = vmax.f32 %v2310, %v2311
        %v2313 = vrot.slane %v2312, 2
        %v2314 = vmax.f32 %v2312, %v2313
        %v2315 = vrot.slane %v2314, 1
        %v2316 = vmax.f32 %v2314, %v2315
        %v2317 = vsel %vm1311, %v1923, -inf
        %v2318 = vrot.slane %v2317, 4
        %v2319 = vmax.f32 %v2317, %v2318
        %v2320 = vrot.slane %v2319, 2
        %v2321 = vmax.f32 %v2319, %v2320
        %v2322 = vrot.slane %v2321, 1
        %v2323 = vmax.f32 %v2321, %v2322
        %v2324 = vsel %vm1311, %v1928, -inf
        %v2325 = vrot.slane %v2324, 4
        %v2326 = vmax.f32 %v2324, %v2325
        %v2327 = vrot.slane %v2326, 2
        %v2328 = vmax.f32 %v2326, %v2327
        %v2329 = vrot.slane %v2328, 1
        %v2330 = vmax.f32 %v2328, %v2329
        %v2331 = vsel %vm1311, %v1933, -inf
        %v2332 = vrot.slane %v2331, 4
        %v2333 = vmax.f32 %v2331, %v2332
        %v2334 = vrot.slane %v2333, 2
        %v2335 = vmax.f32 %v2333, %v2334
        %v2336 = vrot.slane %v2335, 1
        %v2337 = vmax.f32 %v2335, %v2336
        %v2338 = vsub.f32 %v1858, %v2232
        %v2339 = vsub.f32 %v1863, %v2239
        %v2340 = vsub.f32 %v1868, %v2246
        %v2341 = vsub.f32 %v1873, %v2253
        %v2342 = vsub.f32 %v1878, %v2260
        %v2343 = vsub.f32 %v1883, %v2267
        %v2344 = vsub.f32 %v1888, %v2274
        %v2345 = vsub.f32 %v1893, %v2281
        %v2346 = vsub.f32 %v1898, %v2288
        %v2347 = vsub.f32 %v1903, %v2295
        %v2348 = vsub.f32 %v1908, %v2302
        %v2349 = vsub.f32 %v1913, %v2309
        %v2350 = vsub.f32 %v1918, %v2316
        %v2351 = vsub.f32 %v1923, %v2323
        %v2352 = vsub.f32 %v1928, %v2330
        %v2353 = vsub.f32 %v1933, %v2337
        %v2354 = vmul.f32 %v2338, 1.442695
        %v2355 = vpow.pop %v2354
        %v2356 = vmul.f32 %v2339, 1.442695
        %v2357 = vpow.pop %v2356
        %v2358 = vmul.f32 %v2340, 1.442695
        %v2359 = vpow.pop %v2358
        %v2360 = vmul.f32 %v2341, 1.442695
        %v2361 = vpow.pop %v2360
        %v2362 = vmul.f32 %v2342, 1.442695
        %v2363 = vpow.pop %v2362
        %v2364 = vmul.f32 %v2343, 1.442695
        %v2365 = vpow.pop %v2364
        %v2366 = vmul.f32 %v2344, 1.442695
        %v2367 = vpow.pop %v2366
        %v2368 = vmul.f32 %v2345, 1.442695
        %v2369 = vpow.pop %v2368
        %v2370 = vmul.f32 %v2346, 1.442695
        %v2371 = vpow.pop %v2370
        %v2372 = vmul.f32 %v2347, 1.442695
        %v2373 = vpow.pop %v2372
        %v2374 = vmul.f32 %v2348, 1.442695
        %v2375 = vpow.pop %v2374
        %v2376 = vmul.f32 %v2349, 1.442695
        %v2377 = vpow.pop %v2376
        %v2378 = vmul.f32 %v2350, 1.442695
        %v2379 = vpow.pop %v2378
        %v2380 = vmul.f32 %v2351, 1.442695
        %v2381 = vpow.pop %v2380
        %v2382 = vmul.f32 %v2352, 1.442695
        %v2383 = vpow.pop %v2382
        %v2384 = vmul.f32 %v2353, 1.442695
        %v2385 = vpow.pop %v2384
        %v2386 = vsel %vm1311, %v2355, 0.0
        %v2387 = vrot.slane %v2386, 4
        %v2388 = vadd.f32 %v2386, %v2387
        %v2389 = vrot.slane %v2388, 2
        %v2390 = vadd.f32 %v2388, %v2389
        %v2391 = vrot.slane %v2390, 1
        %v2392 = vadd.f32 %v2390, %v2391
        %v2393 = vsel %vm1311, %v2357, 0.0
        %v2394 = vrot.slane %v2393, 4
        %v2395 = vadd.f32 %v2393, %v2394
        %v2396 = vrot.slane %v2395, 2
        %v2397 = vadd.f32 %v2395, %v2396
        %v2398 = vrot.slane %v2397, 1
        %v2399 = vadd.f32 %v2397, %v2398
        %v2400 = vsel %vm1311, %v2359, 0.0
        %v2401 = vrot.slane %v2400, 4
        %v2402 = vadd.f32 %v2400, %v2401
        %v2403 = vrot.slane %v2402, 2
        %v2404 = vadd.f32 %v2402, %v2403
        %v2405 = vrot.slane %v2404, 1
        %v2406 = vadd.f32 %v2404, %v2405
        %v2407 = vsel %vm1311, %v2361, 0.0
        %v2408 = vrot.slane %v2407, 4
        %v2409 = vadd.f32 %v2407, %v2408
        %v2410 = vrot.slane %v2409, 2
        %v2411 = vadd.f32 %v2409, %v2410
        %v2412 = vrot.slane %v2411, 1
        %v2413 = vadd.f32 %v2411, %v2412
        %v2414 = vsel %vm1311, %v2363, 0.0
        %v2415 = vrot.slane %v2414, 4
        %v2416 = vadd.f32 %v2414, %v2415
        %v2417 = vrot.slane %v2416, 2
        %v2418 = vadd.f32 %v2416, %v2417
        %v2419 = vrot.slane %v2418, 1
        %v2420 = vadd.f32 %v2418, %v2419
        %v2421 = vsel %vm1311, %v2365, 0.0
        %v2422 = vrot.slane %v2421, 4
        %v2423 = vadd.f32 %v2421, %v2422
        %v2424 = vrot.slane %v2423, 2
        %v2425 = vadd.f32 %v2423, %v2424
        %v2426 = vrot.slane %v2425, 1
        %v2427 = vadd.f32 %v2425, %v2426
        %v2428 = vsel %vm1311, %v2367, 0.0
        %v2429 = vrot.slane %v2428, 4
        %v2430 = vadd.f32 %v2428, %v2429
        %v2431 = vrot.slane %v2430, 2
        %v2432 = vadd.f32 %v2430, %v2431
        %v2433 = vrot.slane %v2432, 1
        %v2434 = vadd.f32 %v2432, %v2433
        %v2435 = vsel %vm1311, %v2369, 0.0
        %v2436 = vrot.slane %v2435, 4
        %v2437 = vadd.f32 %v2435, %v2436
        %v2438 = vrot.slane %v2437, 2
        %v2439 = vadd.f32 %v2437, %v2438
        %v2440 = vrot.slane %v2439, 1
        %v2441 = vadd.f32 %v2439, %v2440
        %v2442 = vsel %vm1311, %v2371, 0.0
        %v2443 = vrot.slane %v2442, 4
        %v2444 = vadd.f32 %v2442, %v2443
        %v2445 = vrot.slane %v2444, 2
        %v2446 = vadd.f32 %v2444, %v2445
        %v2447 = vrot.slane %v2446, 1
        %v2448 = vadd.f32 %v2446, %v2447
        %v2449 = vsel %vm1311, %v2373, 0.0
        %v2450 = vrot.slane %v2449, 4
        %v2451 = vadd.f32 %v2449, %v2450
        %v2452 = vrot.slane %v2451, 2
        %v2453 = vadd.f32 %v2451, %v2452
        %v2454 = vrot.slane %v2453, 1
        %v2455 = vadd.f32 %v2453, %v2454
        %v2456 = vsel %vm1311, %v2375, 0.0
        %v2457 = vrot.slane %v2456, 4
        %v2458 = vadd.f32 %v2456, %v2457
        %v2459 = vrot.slane %v2458, 2
        %v2460 = vadd.f32 %v2458, %v2459
        %v2461 = vrot.slane %v2460, 1
        %v2462 = vadd.f32 %v2460, %v2461
        %v2463 = vsel %vm1311, %v2377, 0.0
        %v2464 = vrot.slane %v2463, 4
        %v2465 = vadd.f32 %v2463, %v2464
        %v2466 = vrot.slane %v2465, 2
        %v2467 = vadd.f32 %v2465, %v2466
        %v2468 = vrot.slane %v2467, 1
        %v2469 = vadd.f32 %v2467, %v2468
        %v2470 = vsel %vm1311, %v2379, 0.0
        %v2471 = vrot.slane %v2470, 4
        %v2472 = vadd.f32 %v2470, %v2471
        %v2473 = vrot.slane %v2472, 2
        %v2474 = vadd.f32 %v2472, %v2473
        %v2475 = vrot.slane %v2474, 1
        %v2476 = vadd.f32 %v2474, %v2475
        %v2477 = vsel %vm1311, %v2381, 0.0
        %v2478 = vrot.slane %v2477, 4
        %v2479 = vadd.f32 %v2477, %v2478
        %v2480 = vrot.slane %v2479, 2
        %v2481 = vadd.f32 %v2479, %v2480
        %v2482 = vrot.slane %v2481, 1
        %v2483 = vadd.f32 %v2481, %v2482
        %v2484 = vsel %vm1311, %v2383, 0.0
        %v2485 = vrot.slane %v2484, 4
        %v2486 = vadd.f32 %v2484, %v2485
        %v2487 = vrot.slane %v2486, 2
        %v2488 = vadd.f32 %v2486, %v2487
        %v2489 = vrot.slane %v2488, 1
        %v2490 = vadd.f32 %v2488, %v2489
        %v2491 = vsel %vm1311, %v2385, 0.0
        %v2492 = vrot.slane %v2491, 4
        %v2493 = vadd.f32 %v2491, %v2492
        %v2494 = vrot.slane %v2493, 2
        %v2495 = vadd.f32 %v2493, %v2494
        %v2496 = vrot.slane %v2495, 1
        %v2497 = vadd.f32 %v2495, %v2496
        %v2498 = vrcp.pop %v2392
        %v2499 = vrcp.pop %v2399
        %v2500 = vrcp.pop %v2406
        %v2501 = vrcp.pop %v2413
        %v2502 = vrcp.pop %v2420
        %v2503 = vrcp.pop %v2427
        %v2504 = vrcp.pop %v2434
        %v2505 = vrcp.pop %v2441
        %v2506 = vrcp.pop %v2448
        %v2507 = vrcp.pop %v2455
        %v2508 = vrcp.pop %v2462
        %v2509 = vrcp.pop %v2469
        %v2510 = vrcp.pop %v2476
        %v2511 = vrcp.pop %v2483
        %v2512 = vrcp.pop %v2490
        %v2513 = vrcp.pop %v2497
        %v2514 = vmul.f32 %v2355, %v2498
        %v2515 = vmul.f32 %v2357, %v2499
        %v2516 = vmul.f32 %v2359, %v2500
        %v2517 = vmul.f32 %v2361, %v2501
        %v2518 = vmul.f32 %v2363, %v2502
        %v2519 = vmul.f32 %v2365, %v2503
        %v2520 = vmul.f32 %v2367, %v2504
        %v2521 = vmul.f32 %v2369, %v2505
        %v2522 = vmul.f32 %v2371, %v2506
        %v2523 = vmul.f32 %v2373, %v2507
        %v2524 = vmul.f32 %v2375, %v2508
        %v2525 = vmul.f32 %v2377, %v2509
        %v2526 = vmul.f32 %v2379, %v2510
        %v2527 = vmul.f32 %v2381, %v2511
        %v2528 = vmul.f32 %v2383, %v2512
        %v2529 = vmul.f32 %v2385, %v2513
        %v2530 = vsel %vm1311, %v2148, -inf
        %v2531 = vrot.slane %v2530, 4
        %v2532 = vmax.f32 %v2530, %v2531
        %v2533 = vrot.slane %v2532, 2
        %v2534 = vmax.f32 %v2532, %v2533
        %v2535 = vrot.slane %v2534, 1
        %v2536 = vmax.f32 %v2534, %v2535
        %v2537 = vsel %vm1311, %v2153, -inf
        %v2538 = vrot.slane %v2537, 4
        %v2539 = vmax.f32 %v2537, %v2538
        %v2540 = vrot.slane %v2539, 2
        %v2541 = vmax.f32 %v2539, %v2540
        %v2542 = vrot.slane %v2541, 1
        %v2543 = vmax.f32 %v2541, %v2542
        %v2544 = vsel %vm1311, %v2158, -inf
        %v2545 = vrot.slane %v2544, 4
        %v2546 = vmax.f32 %v2544, %v2545
        %v2547 = vrot.slane %v2546, 2
        %v2548 = vmax.f32 %v2546, %v2547
        %v2549 = vrot.slane %v2548, 1
        %v2550 = vmax.f32 %v2548, %v2549
        %v2551 = vsel %vm1311, %v2163, -inf
        %v2552 = vrot.slane %v2551, 4
        %v2553 = vmax.f32 %v2551, %v2552
        %v2554 = vrot.slane %v2553, 2
        %v2555 = vmax.f32 %v2553, %v2554
        %v2556 = vrot.slane %v2555, 1
        %v2557 = vmax.f32 %v2555, %v2556
        %v2558 = vsel %vm1311, %v2168, -inf
        %v2559 = vrot.slane %v2558, 4
        %v2560 = vmax.f32 %v2558, %v2559
        %v2561 = vrot.slane %v2560, 2
        %v2562 = vmax.f32 %v2560, %v2561
        %v2563 = vrot.slane %v2562, 1
        %v2564 = vmax.f32 %v2562, %v2563
        %v2565 = vsel %vm1311, %v2173, -inf
        %v2566 = vrot.slane %v2565, 4
        %v2567 = vmax.f32 %v2565, %v2566
        %v2568 = vrot.slane %v2567, 2
        %v2569 = vmax.f32 %v2567, %v2568
        %v2570 = vrot.slane %v2569, 1
        %v2571 = vmax.f32 %v2569, %v2570
        %v2572 = vsel %vm1311, %v2178, -inf
        %v2573 = vrot.slane %v2572, 4
        %v2574 = vmax.f32 %v2572, %v2573
        %v2575 = vrot.slane %v2574, 2
        %v2576 = vmax.f32 %v2574, %v2575
        %v2577 = vrot.slane %v2576, 1
        %v2578 = vmax.f32 %v2576, %v2577
        %v2579 = vsel %vm1311, %v2183, -inf
        %v2580 = vrot.slane %v2579, 4
        %v2581 = vmax.f32 %v2579, %v2580
        %v2582 = vrot.slane %v2581, 2
        %v2583 = vmax.f32 %v2581, %v2582
        %v2584 = vrot.slane %v2583, 1
        %v2585 = vmax.f32 %v2583, %v2584
        %v2586 = vsel %vm1311, %v2188, -inf
        %v2587 = vrot.slane %v2586, 4
        %v2588 = vmax.f32 %v2586, %v2587
        %v2589 = vrot.slane %v2588, 2
        %v2590 = vmax.f32 %v2588, %v2589
        %v2591 = vrot.slane %v2590, 1
        %v2592 = vmax.f32 %v2590, %v2591
        %v2593 = vsel %vm1311, %v2193, -inf
        %v2594 = vrot.slane %v2593, 4
        %v2595 = vmax.f32 %v2593, %v2594
        %v2596 = vrot.slane %v2595, 2
        %v2597 = vmax.f32 %v2595, %v2596
        %v2598 = vrot.slane %v2597, 1
        %v2599 = vmax.f32 %v2597, %v2598
        %v2600 = vsel %vm1311, %v2198, -inf
        %v2601 = vrot.slane %v2600, 4
        %v2602 = vmax.f32 %v2600, %v2601
        %v2603 = vrot.slane %v2602, 2
        %v2604 = vmax.f32 %v2602, %v2603
        %v2605 = vrot.slane %v2604, 1
        %v2606 = vmax.f32 %v2604, %v2605
        %v2607 = vsel %vm1311, %v2203, -inf
        %v2608 = vrot.slane %v2607, 4
        %v2609 = vmax.f32 %v2607, %v2608
        %v2610 = vrot.slane %v2609, 2
        %v2611 = vmax.f32 %v2609, %v2610
        %v2612 = vrot.slane %v2611, 1
        %v2613 = vmax.f32 %v2611, %v2612
        %v2614 = vsel %vm1311, %v2208, -inf
        %v2615 = vrot.slane %v2614, 4
        %v2616 = vmax.f32 %v2614, %v2615
        %v2617 = vrot.slane %v2616, 2
        %v2618 = vmax.f32 %v2616, %v2617
        %v2619 = vrot.slane %v2618, 1
        %v2620 = vmax.f32 %v2618, %v2619
        %v2621 = vsel %vm1311, %v2213, -inf
        %v2622 = vrot.slane %v2621, 4
        %v2623 = vmax.f32 %v2621, %v2622
        %v2624 = vrot.slane %v2623, 2
        %v2625 = vmax.f32 %v2623, %v2624
        %v2626 = vrot.slane %v2625, 1
        %v2627 = vmax.f32 %v2625, %v2626
        %v2628 = vsel %vm1311, %v2218, -inf
        %v2629 = vrot.slane %v2628, 4
        %v2630 = vmax.f32 %v2628, %v2629
        %v2631 = vrot.slane %v2630, 2
        %v2632 = vmax.f32 %v2630, %v2631
        %v2633 = vrot.slane %v2632, 1
        %v2634 = vmax.f32 %v2632, %v2633
        %v2635 = vsel %vm1311, %v2223, -inf
        %v2636 = vrot.slane %v2635, 4
        %v2637 = vmax.f32 %v2635, %v2636
        %v2638 = vrot.slane %v2637, 2
        %v2639 = vmax.f32 %v2637, %v2638
        %v2640 = vrot.slane %v2639, 1
        %v2641 = vmax.f32 %v2639, %v2640
        %v2642 = vsub.f32 %v2148, %v2536
        %v2643 = vsub.f32 %v2153, %v2543
        %v2644 = vsub.f32 %v2158, %v2550
        %v2645 = vsub.f32 %v2163, %v2557
        %v2646 = vsub.f32 %v2168, %v2564
        %v2647 = vsub.f32 %v2173, %v2571
        %v2648 = vsub.f32 %v2178, %v2578
        %v2649 = vsub.f32 %v2183, %v2585
        %v2650 = vsub.f32 %v2188, %v2592
        %v2651 = vsub.f32 %v2193, %v2599
        %v2652 = vsub.f32 %v2198, %v2606
        %v2653 = vsub.f32 %v2203, %v2613
        %v2654 = vsub.f32 %v2208, %v2620
        %v2655 = vsub.f32 %v2213, %v2627
        %v2656 = vsub.f32 %v2218, %v2634
        %v2657 = vsub.f32 %v2223, %v2641
        %v2658 = vmul.f32 %v2642, 1.442695
        %v2659 = vpow.pop %v2658
        %v2660 = vmul.f32 %v2643, 1.442695
        %v2661 = vpow.pop %v2660
        %v2662 = vmul.f32 %v2644, 1.442695
        %v2663 = vpow.pop %v2662
        %v2664 = vmul.f32 %v2645, 1.442695
        %v2665 = vpow.pop %v2664
        %v2666 = vmul.f32 %v2646, 1.442695
        %v2667 = vpow.pop %v2666
        %v2668 = vmul.f32 %v2647, 1.442695
        %v2669 = vpow.pop %v2668
        %v2670 = vmul.f32 %v2648, 1.442695
        %v2671 = vpow.pop %v2670
        %v2672 = vmul.f32 %v2649, 1.442695
        %v2673 = vpow.pop %v2672
        %v2674 = vmul.f32 %v2650, 1.442695
        %v2675 = vpow.pop %v2674
        %v2676 = vmul.f32 %v2651, 1.442695
        %v2677 = vpow.pop %v2676
        %v2678 = vmul.f32 %v2652, 1.442695
        %v2679 = vpow.pop %v2678
        %v2680 = vmul.f32 %v2653, 1.442695
        %v2681 = vpow.pop %v2680
        %v2682 = vmul.f32 %v2654, 1.442695
        %v2683 = vpow.pop %v2682
        %v2684 = vmul.f32 %v2655, 1.442695
        %v2685 = vpow.pop %v2684
        %v2686 = vmul.f32 %v2656, 1.442695
        %v2687 = vpow.pop %v2686
        %v2688 = vmul.f32 %v2657, 1.442695
        %v2689 = vpow.pop %v2688
        %v2690 = vsel %vm1311, %v2659, 0.0
        %v2691 = vrot.slane %v2690, 4
        %v2692 = vadd.f32 %v2690, %v2691
        %v2693 = vrot.slane %v2692, 2
        %v2694 = vadd.f32 %v2692, %v2693
        %v2695 = vrot.slane %v2694, 1
        %v2696 = vadd.f32 %v2694, %v2695
        %v2697 = vsel %vm1311, %v2661, 0.0
        %v2698 = vrot.slane %v2697, 4
        %v2699 = vadd.f32 %v2697, %v2698
        %v2700 = vrot.slane %v2699, 2
        %v2701 = vadd.f32 %v2699, %v2700
        %v2702 = vrot.slane %v2701, 1
        %v2703 = vadd.f32 %v2701, %v2702
        %v2704 = vsel %vm1311, %v2663, 0.0
        %v2705 = vrot.slane %v2704, 4
        %v2706 = vadd.f32 %v2704, %v2705
        %v2707 = vrot.slane %v2706, 2
        %v2708 = vadd.f32 %v2706, %v2707
        %v2709 = vrot.slane %v2708, 1
        %v2710 = vadd.f32 %v2708, %v2709
        %v2711 = vsel %vm1311, %v2665, 0.0
        %v2712 = vrot.slane %v2711, 4
        %v2713 = vadd.f32 %v2711, %v2712
        %v2714 = vrot.slane %v2713, 2
        %v2715 = vadd.f32 %v2713, %v2714
        %v2716 = vrot.slane %v2715, 1
        %v2717 = vadd.f32 %v2715, %v2716
        %v2718 = vsel %vm1311, %v2667, 0.0
        %v2719 = vrot.slane %v2718, 4
        %v2720 = vadd.f32 %v2718, %v2719
        %v2721 = vrot.slane %v2720, 2
        %v2722 = vadd.f32 %v2720, %v2721
        %v2723 = vrot.slane %v2722, 1
        %v2724 = vadd.f32 %v2722, %v2723
        %v2725 = vsel %vm1311, %v2669, 0.0
        %v2726 = vrot.slane %v2725, 4
        %v2727 = vadd.f32 %v2725, %v2726
        %v2728 = vrot.slane %v2727, 2
        %v2729 = vadd.f32 %v2727, %v2728
        %v2730 = vrot.slane %v2729, 1
        %v2731 = vadd.f32 %v2729, %v2730
        %v2732 = vsel %vm1311, %v2671, 0.0
        %v2733 = vrot.slane %v2732, 4
        %v2734 = vadd.f32 %v2732, %v2733
        %v2735 = vrot.slane %v2734, 2
        %v2736 = vadd.f32 %v2734, %v2735
        %v2737 = vrot.slane %v2736, 1
        %v2738 = vadd.f32 %v2736, %v2737
        %v2739 = vsel %vm1311, %v2673, 0.0
        %v2740 = vrot.slane %v2739, 4
        %v2741 = vadd.f32 %v2739, %v2740
        %v2742 = vrot.slane %v2741, 2
        %v2743 = vadd.f32 %v2741, %v2742
        %v2744 = vrot.slane %v2743, 1
        %v2745 = vadd.f32 %v2743, %v2744
        %v2746 = vsel %vm1311, %v2675, 0.0
        %v2747 = vrot.slane %v2746, 4
        %v2748 = vadd.f32 %v2746, %v2747
        %v2749 = vrot.slane %v2748, 2
        %v2750 = vadd.f32 %v2748, %v2749
        %v2751 = vrot.slane %v2750, 1
        %v2752 = vadd.f32 %v2750, %v2751
        %v2753 = vsel %vm1311, %v2677, 0.0
        %v2754 = vrot.slane %v2753, 4
        %v2755 = vadd.f32 %v2753, %v2754
        %v2756 = vrot.slane %v2755, 2
        %v2757 = vadd.f32 %v2755, %v2756
        %v2758 = vrot.slane %v2757, 1
        %v2759 = vadd.f32 %v2757, %v2758
        %v2760 = vsel %vm1311, %v2679, 0.0
        %v2761 = vrot.slane %v2760, 4
        %v2762 = vadd.f32 %v2760, %v2761
        %v2763 = vrot.slane %v2762, 2
        %v2764 = vadd.f32 %v2762, %v2763
        %v2765 = vrot.slane %v2764, 1
        %v2766 = vadd.f32 %v2764, %v2765
        %v2767 = vsel %vm1311, %v2681, 0.0
        %v2768 = vrot.slane %v2767, 4
        %v2769 = vadd.f32 %v2767, %v2768
        %v2770 = vrot.slane %v2769, 2
        %v2771 = vadd.f32 %v2769, %v2770
        %v2772 = vrot.slane %v2771, 1
        %v2773 = vadd.f32 %v2771, %v2772
        %v2774 = vsel %vm1311, %v2683, 0.0
        %v2775 = vrot.slane %v2774, 4
        %v2776 = vadd.f32 %v2774, %v2775
        %v2777 = vrot.slane %v2776, 2
        %v2778 = vadd.f32 %v2776, %v2777
        %v2779 = vrot.slane %v2778, 1
        %v2780 = vadd.f32 %v2778, %v2779
        %v2781 = vsel %vm1311, %v2685, 0.0
        %v2782 = vrot.slane %v2781, 4
        %v2783 = vadd.f32 %v2781, %v2782
        %v2784 = vrot.slane %v2783, 2
        %v2785 = vadd.f32 %v2783, %v2784
        %v2786 = vrot.slane %v2785, 1
        %v2787 = vadd.f32 %v2785, %v2786
        %v2788 = vsel %vm1311, %v2687, 0.0
        %v2789 = vrot.slane %v2788, 4
        %v2790 = vadd.f32 %v2788, %v2789
        %v2791 = vrot.slane %v2790, 2
        %v2792 = vadd.f32 %v2790, %v2791
        %v2793 = vrot.slane %v2792, 1
        %v2794 = vadd.f32 %v2792, %v2793
        %v2795 = vsel %vm1311, %v2689, 0.0
        %v2796 = vrot.slane %v2795, 4
        %v2797 = vadd.f32 %v2795, %v2796
        %v2798 = vrot.slane %v2797, 2
        %v2799 = vadd.f32 %v2797, %v2798
        %v2800 = vrot.slane %v2799, 1
        %v2801 = vadd.f32 %v2799, %v2800
        %v2802 = vrcp.pop %v2696
        %v2803 = vrcp.pop %v2703
        %v2804 = vrcp.pop %v2710
        %v2805 = vrcp.pop %v2717
        %v2806 = vrcp.pop %v2724
        %v2807 = vrcp.pop %v2731
        %v2808 = vrcp.pop %v2738
        %v2809 = vrcp.pop %v2745
        %v2810 = vrcp.pop %v2752
        %v2811 = vrcp.pop %v2759
        %v2812 = vrcp.pop %v2766
        %v2813 = vrcp.pop %v2773
        %v2814 = vrcp.pop %v2780
        %v2815 = vrcp.pop %v2787
        %v2816 = vrcp.pop %v2794
        %v2817 = vrcp.pop %v2801
        %v2818 = vmul.f32 %v2659, %v2802
        %v2819 = vmul.f32 %v2661, %v2803
        %v2820 = vmul.f32 %v2663, %v2804
        %v2821 = vmul.f32 %v2665, %v2805
        %v2822 = vmul.f32 %v2667, %v2806
        %v2823 = vmul.f32 %v2669, %v2807
        %v2824 = vmul.f32 %v2671, %v2808
        %v2825 = vmul.f32 %v2673, %v2809
        %v2826 = vmul.f32 %v2675, %v2810
        %v2827 = vmul.f32 %v2677, %v2811
        %v2828 = vmul.f32 %v2679, %v2812
        %v2829 = vmul.f32 %v2681, %v2813
        %v2830 = vmul.f32 %v2683, %v2814
        %v2831 = vmul.f32 %v2685, %v2815
        %v2832 = vmul.f32 %v2687, %v2816
        %v2833 = vmul.f32 %v2689, %v2817
        %v2834 = vmul.f32 %v1521, %v2514
        %v2835 = vmul.f32 %v1522, %v2515
        %v2836 = vmul.f32 %v1523, %v2516
        %v2837 = vmul.f32 %v1524, %v2517
        %v2838 = vmul.f32 %v1525, %v2518
        %v2839 = vmul.f32 %v1526, %v2519
        %v2840 = vmul.f32 %v1527, %v2520
        %v2841 = vmul.f32 %v1528, %v2521
        %v2842 = vmul.f32 %v1529, %v2522
        %v2843 = vmul.f32 %v1530, %v2523
        %v2844 = vmul.f32 %v1531, %v2524
        %v2845 = vmul.f32 %v1532, %v2525
        %v2846 = vmul.f32 %v1533, %v2526
        %v2847 = vmul.f32 %v1534, %v2527
        %v2848 = vmul.f32 %v1535, %v2528
        %v2849 = vmul.f32 %v1536, %v2529
        %v2850 = vsel %vm1311, %v2834, 0.0
        %v2851 = vrot.slane %v2850, 4
        %v2852 = vadd.f32 %v2850, %v2851
        %v2853 = vrot.slane %v2852, 2
        %v2854 = vadd.f32 %v2852, %v2853
        %v2855 = vrot.slane %v2854, 1
        %v2856 = vadd.f32 %v2854, %v2855
        %v2857 = vsel %vm1311, %v2835, 0.0
        %v2858 = vrot.slane %v2857, 4
        %v2859 = vadd.f32 %v2857, %v2858
        %v2860 = vrot.slane %v2859, 2
        %v2861 = vadd.f32 %v2859, %v2860
        %v2862 = vrot.slane %v2861, 1
        %v2863 = vadd.f32 %v2861, %v2862
        %v2864 = vsel %vm1311, %v2836, 0.0
        %v2865 = vrot.slane %v2864, 4
        %v2866 = vadd.f32 %v2864, %v2865
        %v2867 = vrot.slane %v2866, 2
        %v2868 = vadd.f32 %v2866, %v2867
        %v2869 = vrot.slane %v2868, 1
        %v2870 = vadd.f32 %v2868, %v2869
        %v2871 = vsel %vm1311, %v2837, 0.0
        %v2872 = vrot.slane %v2871, 4
        %v2873 = vadd.f32 %v2871, %v2872
        %v2874 = vrot.slane %v2873, 2
        %v2875 = vadd.f32 %v2873, %v2874
        %v2876 = vrot.slane %v2875, 1
        %v2877 = vadd.f32 %v2875, %v2876
        %v2878 = vsel %vm1311, %v2838, 0.0
        %v2879 = vrot.slane %v2878, 4
        %v2880 = vadd.f32 %v2878, %v2879
        %v2881 = vrot.slane %v2880, 2
        %v2882 = vadd.f32 %v2880, %v2881
        %v2883 = vrot.slane %v2882, 1
        %v2884 = vadd.f32 %v2882, %v2883
        %v2885 = vsel %vm1311, %v2839, 0.0
        %v2886 = vrot.slane %v2885, 4
        %v2887 = vadd.f32 %v2885, %v2886
        %v2888 = vrot.slane %v2887, 2
        %v2889 = vadd.f32 %v2887, %v2888
        %v2890 = vrot.slane %v2889, 1
        %v2891 = vadd.f32 %v2889, %v2890
        %v2892 = vsel %vm1311, %v2840, 0.0
        %v2893 = vrot.slane %v2892, 4
        %v2894 = vadd.f32 %v2892, %v2893
        %v2895 = vrot.slane %v2894, 2
        %v2896 = vadd.f32 %v2894, %v2895
        %v2897 = vrot.slane %v2896, 1
        %v2898 = vadd.f32 %v2896, %v2897
        %v2899 = vsel %vm1311, %v2841, 0.0
        %v2900 = vrot.slane %v2899, 4
        %v2901 = vadd.f32 %v2899, %v2900
        %v2902 = vrot.slane %v2901, 2
        %v2903 = vadd.f32 %v2901, %v2902
        %v2904 = vrot.slane %v2903, 1
        %v2905 = vadd.f32 %v2903, %v2904
        %v2906 = vsel %vm1311, %v2842, 0.0
        %v2907 = vrot.slane %v2906, 4
        %v2908 = vadd.f32 %v2906, %v2907
        %v2909 = vrot.slane %v2908, 2
        %v2910 = vadd.f32 %v2908, %v2909
        %v2911 = vrot.slane %v2910, 1
        %v2912 = vadd.f32 %v2910, %v2911
        %v2913 = vsel %vm1311, %v2843, 0.0
        %v2914 = vrot.slane %v2913, 4
        %v2915 = vadd.f32 %v2913, %v2914
        %v2916 = vrot.slane %v2915, 2
        %v2917 = vadd.f32 %v2915, %v2916
        %v2918 = vrot.slane %v2917, 1
        %v2919 = vadd.f32 %v2917, %v2918
        %v2920 = vsel %vm1311, %v2844, 0.0
        %v2921 = vrot.slane %v2920, 4
        %v2922 = vadd.f32 %v2920, %v2921
        %v2923 = vrot.slane %v2922, 2
        %v2924 = vadd.f32 %v2922, %v2923
        %v2925 = vrot.slane %v2924, 1
        %v2926 = vadd.f32 %v2924, %v2925
        %v2927 = vsel %vm1311, %v2845, 0.0
        %v2928 = vrot.slane %v2927, 4
        %v2929 = vadd.f32 %v2927, %v2928
        %v2930 = vrot.slane %v2929, 2
        %v2931 = vadd.f32 %v2929, %v2930
        %v2932 = vrot.slane %v2931, 1
        %v2933 = vadd.f32 %v2931, %v2932
        %v2934 = vsel %vm1311, %v2846, 0.0
        %v2935 = vrot.slane %v2934, 4
        %v2936 = vadd.f32 %v2934, %v2935
        %v2937 = vrot.slane %v2936, 2
        %v2938 = vadd.f32 %v2936, %v2937
        %v2939 = vrot.slane %v2938, 1
        %v2940 = vadd.f32 %v2938, %v2939
        %v2941 = vsel %vm1311, %v2847, 0.0
        %v2942 = vrot.slane %v2941, 4
        %v2943 = vadd.f32 %v2941, %v2942
        %v2944 = vrot.slane %v2943, 2
        %v2945 = vadd.f32 %v2943, %v2944
        %v2946 = vrot.slane %v2945, 1
        %v2947 = vadd.f32 %v2945, %v2946
        %v2948 = vsel %vm1311, %v2848, 0.0
        %v2949 = vrot.slane %v2948, 4
        %v2950 = vadd.f32 %v2948, %v2949
        %v2951 = vrot.slane %v2950, 2
        %v2952 = vadd.f32 %v2950, %v2951
        %v2953 = vrot.slane %v2952, 1
        %v2954 = vadd.f32 %v2952, %v2953
        %v2955 = vsel %vm1311, %v2849, 0.0
        %v2956 = vrot.slane %v2955, 4
        %v2957 = vadd.f32 %v2955, %v2956
        %v2958 = vrot.slane %v2957, 2
        %v2959 = vadd.f32 %v2957, %v2958
        %v2960 = vrot.slane %v2959, 1
        %v2961 = vadd.f32 %v2959, %v2960
        %v2962 = vmul.f32 %v1505, %v2818
        %v2963 = vmul.f32 %v1506, %v2819
        %v2964 = vmul.f32 %v1507, %v2820
        %v2965 = vmul.f32 %v1508, %v2821
        %v2966 = vmul.f32 %v1509, %v2822
        %v2967 = vmul.f32 %v1510, %v2823
        %v2968 = vmul.f32 %v1511, %v2824
        %v2969 = vmul.f32 %v1512, %v2825
        %v2970 = vmul.f32 %v1513, %v2826
        %v2971 = vmul.f32 %v1514, %v2827
        %v2972 = vmul.f32 %v1515, %v2828
        %v2973 = vmul.f32 %v1516, %v2829
        %v2974 = vmul.f32 %v1517, %v2830
        %v2975 = vmul.f32 %v1518, %v2831
        %v2976 = vmul.f32 %v1519, %v2832
        %v2977 = vmul.f32 %v1520, %v2833
        %v2978 = vsel %vm1311, %v2962, 0.0
        %v2979 = vrot.slane %v2978, 4
        %v2980 = vadd.f32 %v2978, %v2979
        %v2981 = vrot.slane %v2980, 2
        %v2982 = vadd.f32 %v2980, %v2981
        %v2983 = vrot.slane %v2982, 1
        %v2984 = vadd.f32 %v2982, %v2983
        %v2985 = vsel %vm1311, %v2963, 0.0
        %v2986 = vrot.slane %v2985, 4
        %v2987 = vadd.f32 %v2985, %v2986
        %v2988 = vrot.slane %v2987, 2
        %v2989 = vadd.f32 %v2987, %v2988
        %v2990 = vrot.slane %v2989, 1
        %v2991 = vadd.f32 %v2989, %v2990
        %v2992 = vsel %vm1311, %v2964, 0.0
        %v2993 = vrot.slane %v2992, 4
        %v2994 = vadd.f32 %v2992, %v2993
        %v2995 = vrot.slane %v2994, 2
        %v2996 = vadd.f32 %v2994, %v2995
        %v2997 = vrot.slane %v2996, 1
        %v2998 = vadd.f32 %v2996, %v2997
        %v2999 = vsel %vm1311, %v2965, 0.0
        %v3000 = vrot.slane %v2999, 4
        %v3001 = vadd.f32 %v2999, %v3000
        %v3002 = vrot.slane %v3001, 2
        %v3003 = vadd.f32 %v3001, %v3002
        %v3004 = vrot.slane %v3003, 1
        %v3005 = vadd.f32 %v3003, %v3004
        %v3006 = vsel %vm1311, %v2966, 0.0
        %v3007 = vrot.slane %v3006, 4
        %v3008 = vadd.f32 %v3006, %v3007
        %v3009 = vrot.slane %v3008, 2
        %v3010 = vadd.f32 %v3008, %v3009
        %v3011 = vrot.slane %v3010, 1
        %v3012 = vadd.f32 %v3010, %v3011
        %v3013 = vsel %vm1311, %v2967, 0.0
        %v3014 = vrot.slane %v3013, 4
        %v3015 = vadd.f32 %v3013, %v3014
        %v3016 = vrot.slane %v3015, 2
        %v3017 = vadd.f32 %v3015, %v3016
        %v3018 = vrot.slane %v3017, 1
        %v3019 = vadd.f32 %v3017, %v3018
        %v3020 = vsel %vm1311, %v2968, 0.0
        %v3021 = vrot.slane %v3020, 4
        %v3022 = vadd.f32 %v3020, %v3021
        %v3023 = vrot.slane %v3022, 2
        %v3024 = vadd.f32 %v3022, %v3023
        %v3025 = vrot.slane %v3024, 1
        %v3026 = vadd.f32 %v3024, %v3025
        %v3027 = vsel %vm1311, %v2969, 0.0
        %v3028 = vrot.slane %v3027, 4
        %v3029 = vadd.f32 %v3027, %v3028
        %v3030 = vrot.slane %v3029, 2
        %v3031 = vadd.f32 %v3029, %v3030
        %v3032 = vrot.slane %v3031, 1
        %v3033 = vadd.f32 %v3031, %v3032
        %v3034 = vsel %vm1311, %v2970, 0.0
        %v3035 = vrot.slane %v3034, 4
        %v3036 = vadd.f32 %v3034, %v3035
        %v3037 = vrot.slane %v3036, 2
        %v3038 = vadd.f32 %v3036, %v3037
        %v3039 = vrot.slane %v3038, 1
        %v3040 = vadd.f32 %v3038, %v3039
        %v3041 = vsel %vm1311, %v2971, 0.0
        %v3042 = vrot.slane %v3041, 4
        %v3043 = vadd.f32 %v3041, %v3042
        %v3044 = vrot.slane %v3043, 2
        %v3045 = vadd.f32 %v3043, %v3044
        %v3046 = vrot.slane %v3045, 1
        %v3047 = vadd.f32 %v3045, %v3046
        %v3048 = vsel %vm1311, %v2972, 0.0
        %v3049 = vrot.slane %v3048, 4
        %v3050 = vadd.f32 %v3048, %v3049
        %v3051 = vrot.slane %v3050, 2
        %v3052 = vadd.f32 %v3050, %v3051
        %v3053 = vrot.slane %v3052, 1
        %v3054 = vadd.f32 %v3052, %v3053
        %v3055 = vsel %vm1311, %v2973, 0.0
        %v3056 = vrot.slane %v3055, 4
        %v3057 = vadd.f32 %v3055, %v3056
        %v3058 = vrot.slane %v3057, 2
        %v3059 = vadd.f32 %v3057, %v3058
        %v3060 = vrot.slane %v3059, 1
        %v3061 = vadd.f32 %v3059, %v3060
        %v3062 = vsel %vm1311, %v2974, 0.0
        %v3063 = vrot.slane %v3062, 4
        %v3064 = vadd.f32 %v3062, %v3063
        %v3065 = vrot.slane %v3064, 2
        %v3066 = vadd.f32 %v3064, %v3065
        %v3067 = vrot.slane %v3066, 1
        %v3068 = vadd.f32 %v3066, %v3067
        %v3069 = vsel %vm1311, %v2975, 0.0
        %v3070 = vrot.slane %v3069, 4
        %v3071 = vadd.f32 %v3069, %v3070
        %v3072 = vrot.slane %v3071, 2
        %v3073 = vadd.f32 %v3071, %v3072
        %v3074 = vrot.slane %v3073, 1
        %v3075 = vadd.f32 %v3073, %v3074
        %v3076 = vsel %vm1311, %v2976, 0.0
        %v3077 = vrot.slane %v3076, 4
        %v3078 = vadd.f32 %v3076, %v3077
        %v3079 = vrot.slane %v3078, 2
        %v3080 = vadd.f32 %v3078, %v3079
        %v3081 = vrot.slane %v3080, 1
        %v3082 = vadd.f32 %v3080, %v3081
        %v3083 = vsel %vm1311, %v2977, 0.0
        %v3084 = vrot.slane %v3083, 4
        %v3085 = vadd.f32 %v3083, %v3084
        %v3086 = vrot.slane %v3085, 2
        %v3087 = vadd.f32 %v3085, %v3086
        %v3088 = vrot.slane %v3087, 1
        %v3089 = vadd.f32 %v3087, %v3088
        %vm3106 = vcmask 1041409
        %v3107 = vsel %vm3106, %v2991, %v2984
        %vm3108 = vcmask 1042434
        %v3109 = vsel %vm3108, %v2998, %v3107
        %vm3110 = vcmask 1043459
        %v3111 = vsel %vm3110, %v3005, %v3109
        %vm3112 = vcmask 1044484
        %v3113 = vsel %vm3112, %v3012, %v3111
        %vm3114 = vcmask 1045509
        %v3115 = vsel %vm3114, %v3019, %v3113
        %vm3116 = vcmask 1046534
        %v3117 = vsel %vm3116, %v3026, %v3115
        %vm3118 = vcmask 1047559
        %v3119 = vsel %vm3118, %v3033, %v3117
        %v3120 = vsel %vm3106, %v3047, %v3040
        %v3121 = vsel %vm3108, %v3054, %v3120
        %v3122 = vsel %vm3110, %v3061, %v3121
        %v3123 = vsel %vm3112, %v3068, %v3122
        %v3124 = vsel %vm3114, %v3075, %v3123
        %v3125 = vsel %vm3116, %v3082, %v3124
        %v3126 = vsel %vm3118, %v3089, %v3125
        %v3127 = vsel %vm1311, %v3119, 0
        %v3129 = vsel %vm1311, %v3126, 0
        %3131 = vmatprep.subr.mxu0 0.0
        %3132 = vmatpush1.msra.mxu0 0.0
        %3133 = vmatprep.subr.mxu0 0.0
        %3134 = vmatpush1.msra.mxu0 0.0
        %3135 = vmatprep.subr.mxu0 0.0
        %3136 = vmatpush1.msra.mxu0 0.0
        %3137 = vmatprep.subr.mxu0 0.0
        %3138 = vmatpush1.msra.mxu0 0.0
        %3139 = vmatprep.subr.mxu0 0.0
        %3140 = vmatpush1.msra.mxu0 0.0
        %3141 = vmatprep.subr.mxu0 0.0
        %3142 = vmatpush1.msra.mxu0 0.0
        %3143 = vmatprep.subr.mxu0 0.0
        %3144 = vmatpush1.msra.mxu0 0.0
        %3145 = vmatprep.subr.mxu0 0.0
        %3146 = vmatpush1.msra.mxu0 0.0
        %3147 = vmatprep.subr.mxu0 0.0
        %3148 = vmatpush1.msra.mxu0 0.0
        %3149 = vmatprep.subr.mxu0 0.0
        %3150 = vmatpush1.msra.mxu0 0.0
        %3151 = vmatprep.subr.mxu0 0.0
        %3152 = vmatpush1.msra.mxu0 0.0
        %3153 = vmatprep.subr.mxu0 0.0
        %3154 = vmatpush1.msra.mxu0 0.0
        %3155 = vmatprep.subr.mxu0 0.0
        %3156 = vmatpush1.msra.mxu0 0.0
        %3157 = vmatprep.subr.mxu0 0.0
        %3158 = vmatpush1.msra.mxu0 0.0
        %3159 = vmatprep.subr.mxu0 0.0
        %3160 = vmatpush1.msra.mxu0 %v1548
        %3161 = vmatprep.subr.mxu0 0.0
        %3162 = vmatpush1.msra.mxu0 %v1547
        %3163 = vmatprep.subr.mxu0 0.0
        %3164 = vmatpush2.msra.mxu0 0.0
        %3165 = vmatprep.subr.mxu0 0.0
        %3166 = vmatpush2.msra.mxu0 0.0
        %3167 = vmatprep.subr.mxu0 0.0
        %3168 = vmatpush2.msra.mxu0 0.0
        %3169 = vmatprep.subr.mxu0 0.0
        %3170 = vmatpush2.msra.mxu0 0.0
        %3171 = vmatprep.subr.mxu0 0.0
        %3172 = vmatpush2.msra.mxu0 0.0
        %3173 = vmatprep.subr.mxu0 0.0
        %3174 = vmatpush2.msra.mxu0 0.0
        %3175 = vmatprep.subr.mxu0 0.0
        %3176 = vmatpush2.msra.mxu0 0.0
        %3177 = vmatprep.subr.mxu0 0.0
        %3178 = vmatpush2.msra.mxu0 0.0
        %3179 = vmatprep.subr.mxu0 0.0
        %3180 = vmatpush2.msra.mxu0 0.0
        %3181 = vmatprep.subr.mxu0 0.0
        %3182 = vmatpush2.msra.mxu0 0.0
        %3183 = vmatprep.subr.mxu0 0.0
        %3184 = vmatpush2.msra.mxu0 0.0
        %3185 = vmatprep.subr.mxu0 0.0
        %3186 = vmatpush2.msra.mxu0 0.0
        %3187 = vmatprep.subr.mxu0 0.0
        %3188 = vmatpush2.msra.mxu0 0.0
        %3189 = vmatprep.subr.mxu0 0.0
        %3190 = vmatpush2.msra.mxu0 0.0
        %3191 = vmatprep.subr.mxu0 0.0
        %3192 = vmatpush2.msra.mxu0 0.0
        %3193 = vmatprep.subr.mxu0 0.0
        %3194 = vmatpush2.msra.mxu0 0.0
        %3195 = vmatprep.mubr.f32.mxu0 0.0
        %3196 = vmatmul.mubr.f32.gmra.mxu0 %v3127
        %v3197 = vpop.f32.mrf.mxu0
        %v3198 = vadd.f32 0.0, %v3197
        %v3199 = vpop.f32.mrf.mxu0
        %3200 = vmatprep.mubr.f32.mxu0 0.0
        %3201 = vmatmul.mubr.f32.gmra.mxu0 %v3129
        %v3202 = vpop.f32.mrf.mxu0
        %v3203 = vadd.f32 0.0, %v3202
        %v3204 = vpop.f32.mrf.mxu0
        %3205 = vdwg.mxu0
        %v3222 = vsel %vm3106, %v2863, %v2856
        %v3223 = vsel %vm3108, %v2870, %v3222
        %v3224 = vsel %vm3110, %v2877, %v3223
        %v3225 = vsel %vm3112, %v2884, %v3224
        %v3226 = vsel %vm3114, %v2891, %v3225
        %v3227 = vsel %vm3116, %v2898, %v3226
        %v3228 = vsel %vm3118, %v2905, %v3227
        %v3229 = vsel %vm3106, %v2919, %v2912
        %v3230 = vsel %vm3108, %v2926, %v3229
        %v3231 = vsel %vm3110, %v2933, %v3230
        %v3232 = vsel %vm3112, %v2940, %v3231
        %v3233 = vsel %vm3114, %v2947, %v3232
        %v3234 = vsel %vm3116, %v2954, %v3233
        %v3235 = vsel %vm3118, %v2961, %v3234
        %v3236 = vsel %vm1311, %v3228, 0
        %v3238 = vsel %vm1311, %v3235, 0
        %3240 = vmatprep.subr.mxu0 0.0
        %3241 = vmatpush1.msra.mxu0 0.0
        %3242 = vmatprep.subr.mxu0 0.0
        %3243 = vmatpush1.msra.mxu0 0.0
        %3244 = vmatprep.subr.mxu0 0.0
        %3245 = vmatpush1.msra.mxu0 0.0
        %3246 = vmatprep.subr.mxu0 0.0
        %3247 = vmatpush1.msra.mxu0 0.0
        %3248 = vmatprep.subr.mxu0 0.0
        %3249 = vmatpush1.msra.mxu0 0.0
        %3250 = vmatprep.subr.mxu0 0.0
        %3251 = vmatpush1.msra.mxu0 0.0
        %3252 = vmatprep.subr.mxu0 0.0
        %3253 = vmatpush1.msra.mxu0 0.0
        %3254 = vmatprep.subr.mxu0 0.0
        %3255 = vmatpush1.msra.mxu0 0.0
        %3256 = vmatprep.subr.mxu0 0.0
        %3257 = vmatpush1.msra.mxu0 0.0
        %3258 = vmatprep.subr.mxu0 0.0
        %3259 = vmatpush1.msra.mxu0 0.0
        %3260 = vmatprep.subr.mxu0 0.0
        %3261 = vmatpush1.msra.mxu0 0.0
        %3262 = vmatprep.subr.mxu0 0.0
        %3263 = vmatpush1.msra.mxu0 0.0
        %3264 = vmatprep.subr.mxu0 0.0
        %3265 = vmatpush1.msra.mxu0 0.0
        %3266 = vmatprep.subr.mxu0 0.0
        %3267 = vmatpush1.msra.mxu0 0.0
        %3268 = vmatprep.subr.mxu0 0.0
        %3269 = vmatpush1.msra.mxu0 %v1546
        %3270 = vmatprep.subr.mxu0 0.0
        %3271 = vmatpush1.msra.mxu0 %v1545
        %3272 = vmatprep.subr.mxu0 0.0
        %3273 = vmatpush2.msra.mxu0 0.0
        %3274 = vmatprep.subr.mxu0 0.0
        %3275 = vmatpush2.msra.mxu0 0.0
        %3276 = vmatprep.subr.mxu0 0.0
        %3277 = vmatpush2.msra.mxu0 0.0
        %3278 = vmatprep.subr.mxu0 0.0
        %3279 = vmatpush2.msra.mxu0 0.0
        %3280 = vmatprep.subr.mxu0 0.0
        %3281 = vmatpush2.msra.mxu0 0.0
        %3282 = vmatprep.subr.mxu0 0.0
        %3283 = vmatpush2.msra.mxu0 0.0
        %3284 = vmatprep.subr.mxu0 0.0
        %3285 = vmatpush2.msra.mxu0 0.0
        %3286 = vmatprep.subr.mxu0 0.0
        %3287 = vmatpush2.msra.mxu0 0.0
        %3288 = vmatprep.subr.mxu0 0.0
        %3289 = vmatpush2.msra.mxu0 0.0
        %3290 = vmatprep.subr.mxu0 0.0
        %3291 = vmatpush2.msra.mxu0 0.0
        %3292 = vmatprep.subr.mxu0 0.0
        %3293 = vmatpush2.msra.mxu0 0.0
        %3294 = vmatprep.subr.mxu0 0.0
        %3295 = vmatpush2.msra.mxu0 0.0
        %3296 = vmatprep.subr.mxu0 0.0
        %3297 = vmatpush2.msra.mxu0 0.0
        %3298 = vmatprep.subr.mxu0 0.0
        %3299 = vmatpush2.msra.mxu0 0.0
        %3300 = vmatprep.subr.mxu0 0.0
        %3301 = vmatpush2.msra.mxu0 0.0
        %3302 = vmatprep.subr.mxu0 0.0
        %3303 = vmatpush2.msra.mxu0 0.0
        %3304 = vmatprep.mubr.f32.mxu0 0.0
        %3305 = vmatmul.mubr.f32.gmra.mxu0 %v3236
        %v3306 = vpop.f32.mrf.mxu0
        %v3307 = vadd.f32 %v3198, %v3306
        %v3308 = vpop.f32.mrf.mxu0
        %3309 = vmatprep.mubr.f32.mxu0 0.0
        %3310 = vmatmul.mubr.f32.gmra.mxu0 %v3238
        %v3311 = vpop.f32.mrf.mxu0
        %v3312 = vadd.f32 %v3203, %v3311
        %v3313 = vpop.f32.mrf.mxu0
        %3314 = vdwg.mxu0
        %v3316 = vlaneseq
        %v3317 = vshrl.u32 %v3316, 7
        %v3318 = vsub.s32 0, %v3317
        %v3319 = vrot.slane %v1549, %v3318
        %v3321 = vadd.f32 %v3307, %v3319
        %v3322 = vadd.f32 %v3312, %v3319
        %v3323 = vmax.f32 %v3321, 0.0
        %v3324 = vmax.f32 %v3322, 0.0
        %vm3325 = vcmask 261120
        %3326 = vst.msk [vmem:[%s429] sm:$0xff] %vm3325, %v3323
        %3327 = vst.msk [vmem:[%s429 + $0x8] sm:$0xff] %vm3325, %v3324
        %s3328 = sand.u32 %s277, 1
        %s3329 = scalar_lea.sflag [#allocation3], %s3328
        %s3330 = sand.u32 %s277, 1
        %s3331 = smul.addr %s3330, 16
        %s3332 = scalar_lea.vmem [#allocation2], %s3331
        // Predicated region
        $region61: #{building_block_forward.3} parent=59 // pred_check
          %p3333 = pneg %p287
        $region62: #{building_block_forward.3} parent=59 // pred_check_branch
          %3335 = sbr.rel (%p3333) target = $region64
        $region63: #{building_block_forward.3} parent=59 // pred_region
          %s3336 = smul.u32 2, %s29
          %s3338 = ssub.s32 256, 256
          %3339 = vsyncadd %s3329, %s3338
          %s3340 = smul.addr %s28, 2
          %s3341 = sadd.s32 %s3336, %s3340
          %s3342 = smul.addr %s3341, 128
          %s3343 = scalar_lea.hbm %s10, %s3342
          %s3344 = sshll.u32 %s3332, 4
          %s3345 = int_to_ptr.vmem [resolvable:$true] %s3344
          %3350 = dma.vmem_to_hbm [thread:$0]  %s3345, 256, %s3343, %s3329, 128, 128, 8
        $region64: #{building_block_forward.3} parent=59 // pred_fallthru
          _
      $region60: #{building_block_forward.3} parent=5 // pred_fallthru
        _
      %p3351 = scmp.le.s32.totalorder 2, %s19
      // Predicated region
      $region65: #{building_block_forward.3} parent=5 // pred_check
        %p3352 = pneg %p3351
      $region66: #{building_block_forward.3} parent=5 // pred_check_branch
        %3354 = sbr.rel (%p3352) target = $region68
      $region67: #{building_block_forward.3} parent=5 // pred_region
        %s3355 = ssub.s32 %s19, 2
        // Predicated region
        $region69: #{building_block_forward.3} parent=67 // pred_check
          %p3356 = pneg %p293
        $region70: #{building_block_forward.3} parent=67 // pred_check_branch
          %3358 = sbr.rel (%p3356) target = $region72
        $region71: #{building_block_forward.3} parent=67 // pred_region
          %s3359 = sand.u32 %s278, 1
          %s3360 = scalar_lea.sflag [#allocation3], %s3359
          %s3361 = sand.u32 %s278, 1
          %s3362 = smul.addr %s3361, 16
          %s3363 = scalar_lea.vmem [#allocation2], %s3362
          %3364 = dma.done %s3360, 256
        $region72: #{building_block_forward.3} parent=67 // pred_fallthru
          _
      $region68: #{building_block_forward.3} parent=5 // pred_fallthru
        _
    $region6: #{building_block_forward.3} parent=1 // loop_footer
      %s23 = sadd.s32 1, %s19
    $region7: #{building_block_forward.3} parent=1 // loop_footer_branch
      %18 = sbr.rel target = $region3
    $region8: #{building_block_forward.3} parent=1 // loop_exit
      _
    %3365 = vsyncpa [#allocation3], 1
    %s3366 = scalar_lea.sflag [#allocation3], 1
    %3367 = vsyncpa %s3366, 1

</llo_original>
